<compile_context>
chip_gen: v5e
topology: v5e:2x2
jax: 0.10.0
libtpu: 0.0.40
codegen_flags: <defaults>
</compile_context>

<pallas_src>
import jax
import jax.numpy as jnp
from jax.experimental import pallas as pl
from jax.experimental.pallas import tpu as pltpu

D_MODEL = 64
D_K = 64
D_V = 64
D_FF = 512
SEQ = 34            # tcr_max_len (module hard-codes a 34x34 all-False mask)
SEQ_PAD = 40        # next multiple of 8 (sublane) -> free row-flatten
ATTN_LANE = 128     # lane-dense attention output slab width
TB = 8              # batch elements per grid step (M = TB*SEQ_PAD = 320 rows)
EPS = 1e-5
SCALE = 1.0 / (D_K ** 0.5)
NEG_INF = -1e9


def _layer_norm(x):
    mean = jnp.mean(x, axis=-1, keepdims=True)
    var = jnp.mean((x - mean) ** 2, axis=-1, keepdims=True)
    return (x - mean) * jax.lax.rsqrt(var + EPS)


def cross_attention_kernel(pep_ref, hla_ref, wq_ref, wk_ref, wv_ref,
                           wfc_ref, w1_ref, w2_ref, out_ref, attn_ref):
    pep = pep_ref[...]                                  # (TB, SEQ_PAD, D)
    hla = hla_ref[...]
    pep2 = pep.reshape(TB * SEQ_PAD, D_MODEL)           # free: 40 % 8 == 0
    hla2 = hla.reshape(TB * SEQ_PAD, D_MODEL)

    # --- projections: full-height MXU matmuls on flattened rows ---
    q = jnp.dot(pep2, wq_ref[...], preferred_element_type=jnp.float32)
    k = jnp.dot(hla2, wk_ref[...], preferred_element_type=jnp.float32)
    v = jnp.dot(hla2, wv_ref[...], preferred_element_type=jnp.float32)
    qb = q.reshape(TB, SEQ_PAD, D_K)
    kb = k.reshape(TB, SEQ_PAD, D_K)
    vb = v.reshape(TB, SEQ_PAD, D_V)

    # --- scaled dot product attention (batched; no explicit K transpose) ---
    scores = jnp.einsum("bqd,bkd->bqk", qb, kb,
                        preferred_element_type=jnp.float32) * SCALE
    # Mask the padded KEY columns (>= SEQ). The module's own pad mask is
    # all-False, so valid entries are untouched (matches masked_fill_ no-op).
    col = jax.lax.broadcasted_iota(jnp.int32, (1, 1, SEQ_PAD), 2)
    scores = jnp.where(col < SEQ, scores, NEG_INF)

    m = jnp.max(scores, axis=-1, keepdims=True)
    e = jnp.exp(scores - m)
    denom = jnp.sum(e, axis=-1, keepdims=True)
    r = pl.reciprocal(denom, approx=True)
    r = r * (2.0 - denom * r)            # one Newton step -> near-f32 precision
    attn = e * r

    ctx = jnp.einsum("bqk,bkd->bqd", attn, vb,
                     preferred_element_type=jnp.float32)
    ctx2 = ctx.reshape(TB * SEQ_PAD, D_V)
    mha = jnp.dot(ctx2, wfc_ref[...], preferred_element_type=jnp.float32)
    x = _layer_norm(mha + pep2)

    # --- position-wise feed forward (dropout = identity, eval mode) ---
    h = jnp.maximum(
        jnp.dot(x, w1_ref[...], preferred_element_type=jnp.float32), 0.0)
    y = jnp.dot(h, w2_ref[...], preferred_element_type=jnp.float32)
    out = _layer_norm(y + x)

    out_ref[...] = out.reshape(TB, SEQ_PAD, D_MODEL).astype(out_ref.dtype)

    # Lane-dense attention store: pad 40 lanes -> 128 lanes with zeros.
    attn_wide = jnp.concatenate(
        [attn, jnp.zeros((TB, SEQ_PAD, ATTN_LANE - SEQ_PAD), jnp.float32)],
        axis=-1)
    attn_ref[...] = attn_wide.astype(attn_ref.dtype)


@jax.jit
def cross_attention(pep, hla, wq, wk, wv, wfc, w1, w2):
    B = pep.shape[0]
    b_pad = pl.cdiv(B, TB) * TB
    # Zero-pad batch to a TB multiple and seq 34 -> 40 (padded keys are masked
    # in-kernel; padded rows / batch elements are sliced off below).
    pep_p = jnp.pad(pep, ((0, b_pad - B), (0, SEQ_PAD - SEQ), (0, 0)))
    hla_p = jnp.pad(hla, ((0, b_pad - B), (0, SEQ_PAD - SEQ), (0, 0)))

    weight_spec = lambda shape: pl.BlockSpec(shape, lambda b: (0, 0))
    out_shapes = (
        jax.ShapeDtypeStruct((b_pad, SEQ_PAD, D_MODEL), jnp.float32),
        jax.ShapeDtypeStruct((b_pad, SEQ_PAD, ATTN_LANE), jnp.float32),
    )
    dec_p, attn_p = pl.pallas_call(
        cross_attention_kernel,
        out_shape=out_shapes,
        grid_spec=pltpu.PrefetchScalarGridSpec(
            num_scalar_prefetch=0,
            grid=(b_pad // TB,),
            in_specs=[
                pl.BlockSpec((TB, SEQ_PAD, D_MODEL), lambda b: (b, 0, 0)),  # pep
                pl.BlockSpec((TB, SEQ_PAD, D_MODEL), lambda b: (b, 0, 0)),  # hla
                weight_spec((D_MODEL, D_K)),     # W_Q
                weight_spec((D_MODEL, D_K)),     # W_K
                weight_spec((D_MODEL, D_V)),     # W_V
                weight_spec((D_V, D_MODEL)),     # fc
                weight_spec((D_MODEL, D_FF)),    # ffn W1
                weight_spec((D_FF, D_MODEL)),    # ffn W2
            ],
            out_specs=[
                pl.BlockSpec((TB, SEQ_PAD, D_MODEL), lambda b: (b, 0, 0)),
                pl.BlockSpec((TB, SEQ_PAD, ATTN_LANE), lambda b: (b, 0, 0)),
            ],
        ),
        compiler_params=pltpu.CompilerParams(
            dimension_semantics=("parallel",)),
    )(pep_p, hla_p, wq, wk, wv, wfc, w1, w2)

    dec_out = dec_p[:B, :SEQ, :]
    attn = attn_p[:B, :SEQ, :SEQ][:, None, :, :]   # (B, n_heads=1, SEQ, SEQ)
    return dec_out, attn


def _reference(pep, hla, wq, wk, wv, wfc, w1, w2):
    def ln(x):
        mu = jnp.mean(x, -1, keepdims=True)
        var = jnp.mean((x - mu) ** 2, -1, keepdims=True)
        return (x - mu) / jnp.sqrt(var + EPS)
    q = pep @ wq
    k = hla @ wk
    v = hla @ wv
    scores = jnp.einsum("bqd,bkd->bqk", q, k) * SCALE
    attn = jax.nn.softmax(scores, axis=-1)
    ctx = jnp.einsum("bqk,bkd->bqd", attn, v)
    x = ln(ctx @ wfc + pep)
    y = jnp.maximum(x @ w1, 0.0) @ w2
    return ln(y + x), attn[:, None]


if __name__ == "__main__":
    key = jax.random.PRNGKey(0)
    kp, kh, k1, k2, k3, k4, k5, k6 = jax.random.split(key, 8)

    B = 16    # small test batch -> two TB=8 grid steps
    pep = jax.random.normal(kp, (B, SEQ, D_MODEL), jnp.float32)
    hla = jax.random.normal(kh, (B, SEQ, D_MODEL), jnp.float32)

    # Deterministic synthetic parameters (scaled like typical Linear init).
    wq = jax.random.normal(k1, (D_MODEL, D_K), jnp.float32) / (D_MODEL ** 0.5)
    wk = jax.random.normal(k2, (D_MODEL, D_K), jnp.float32) / (D_MODEL ** 0.5)
    wv = jax.random.normal(k3, (D_MODEL, D_V), jnp.float32) / (D_MODEL ** 0.5)
    wfc = jax.random.normal(k4, (D_V, D_MODEL), jnp.float32) / (D_V ** 0.5)
    w1 = jax.random.normal(k5, (D_MODEL, D_FF), jnp.float32) / (D_MODEL ** 0.5)
    w2 = jax.random.normal(k6, (D_FF, D_MODEL), jnp.float32) / (D_FF ** 0.5)

    dec_out, attn = cross_attention(pep, hla, wq, wk, wv, wfc, w1, w2)
    jax.block_until_ready((dec_out, attn))

    ref_out, ref_attn = _reference(pep, hla, wq, wk, wv, wfc, w1, w2)
    assert dec_out.shape == (B, SEQ, D_MODEL)
    assert attn.shape == (B, 1, SEQ, SEQ)
    assert jnp.allclose(dec_out, ref_out, atol=1e-3, rtol=1e-3), \
        float(jnp.max(jnp.abs(dec_out - ref_out)))
    assert jnp.allclose(attn, ref_attn, atol=1e-4, rtol=1e-4), \
        float(jnp.max(jnp.abs(attn - ref_attn)))

    print("KERNEL_OK")
</pallas_src>

<mosaic_0001>
module attributes {stable_mosaic.version = 11 : i64} {
  func.func @cross_attention_kernel(%arg0: i32, %arg1: memref<8x40x64xf32, #tpu.memory_space<vmem>>, %arg2: memref<8x40x64xf32, #tpu.memory_space<vmem>>, %arg3: memref<64x64xf32, #tpu.memory_space<vmem>>, %arg4: memref<64x64xf32, #tpu.memory_space<vmem>>, %arg5: memref<64x64xf32, #tpu.memory_space<vmem>>, %arg6: memref<64x64xf32, #tpu.memory_space<vmem>>, %arg7: memref<64x512xf32, #tpu.memory_space<vmem>>, %arg8: memref<512x64xf32, #tpu.memory_space<vmem>>, %arg9: memref<8x40x64xf32, #tpu.memory_space<vmem>>, %arg10: memref<8x40x128xf32, #tpu.memory_space<vmem>>) attributes {dimension_semantics = [#tpu.dimension_semantics<parallel>], iteration_bounds = array<i64: 2>, scalar_prefetch = 0 : i64, scratch_operands = 0 : i64, tpu.core_type = #tpu.core_type<tc>, window_params = [{transform_indices = @transform_0, window_bounds = array<i64: 8, 40, 64>}, {transform_indices = @transform_1, window_bounds = array<i64: 8, 40, 64>}, {pipeline_mode = #tpu.pipeline_mode<synchronous>, transform_indices = @transform_2, window_bounds = array<i64: 64, 64>}, {pipeline_mode = #tpu.pipeline_mode<synchronous>, transform_indices = @transform_3, window_bounds = array<i64: 64, 64>}, {pipeline_mode = #tpu.pipeline_mode<synchronous>, transform_indices = @transform_4, window_bounds = array<i64: 64, 64>}, {pipeline_mode = #tpu.pipeline_mode<synchronous>, transform_indices = @transform_5, window_bounds = array<i64: 64, 64>}, {pipeline_mode = #tpu.pipeline_mode<synchronous>, transform_indices = @transform_6, window_bounds = array<i64: 64, 512>}, {pipeline_mode = #tpu.pipeline_mode<synchronous>, transform_indices = @transform_7, window_bounds = array<i64: 512, 64>}, {transform_indices = @transform_8, window_bounds = array<i64: 8, 40, 64>}, {transform_indices = @transform_9, window_bounds = array<i64: 8, 40, 128>}]} {
    %c0 = arith.constant 0 : index
    %c0_0 = arith.constant 0 : index
    %c0_1 = arith.constant 0 : index
    %0 = vector.load %arg1[%c0, %c0_0, %c0_1] : memref<8x40x64xf32, #tpu.memory_space<vmem>>, vector<8x40x64xf32>
    %c0_2 = arith.constant 0 : index
    %c0_3 = arith.constant 0 : index
    %c0_4 = arith.constant 0 : index
    %1 = vector.load %arg2[%c0_2, %c0_3, %c0_4] : memref<8x40x64xf32, #tpu.memory_space<vmem>>, vector<8x40x64xf32>
    %2 = vector.shape_cast %0 : vector<8x40x64xf32> to vector<320x64xf32>
    %3 = vector.shape_cast %1 : vector<8x40x64xf32> to vector<320x64xf32>
    %c0_5 = arith.constant 0 : index
    %c0_6 = arith.constant 0 : index
    %4 = vector.load %arg3[%c0_5, %c0_6] : memref<64x64xf32, #tpu.memory_space<vmem>>, vector<64x64xf32>
    %cst = arith.constant dense<0.000000e+00> : vector<320x64xf32>
    %5 = tpu.matmul %2, %4, %cst {dimension_numbers = #tpu.dot_dimension_numbers<[1], [0], [0], [1], [0, 0, 1, 1], [], []>} : vector<320x64xf32>, vector<64x64xf32>, vector<320x64xf32> -> vector<320x64xf32>
    %c0_7 = arith.constant 0 : index
    %c0_8 = arith.constant 0 : index
    %6 = vector.load %arg4[%c0_7, %c0_8] : memref<64x64xf32, #tpu.memory_space<vmem>>, vector<64x64xf32>
    %cst_9 = arith.constant dense<0.000000e+00> : vector<320x64xf32>
    %7 = tpu.matmul %3, %6, %cst_9 {dimension_numbers = #tpu.dot_dimension_numbers<[1], [0], [0], [1], [0, 0, 1, 1], [], []>} : vector<320x64xf32>, vector<64x64xf32>, vector<320x64xf32> -> vector<320x64xf32>
    %c0_10 = arith.constant 0 : index
    %c0_11 = arith.constant 0 : index
    %8 = vector.load %arg5[%c0_10, %c0_11] : memref<64x64xf32, #tpu.memory_space<vmem>>, vector<64x64xf32>
    %cst_12 = arith.constant dense<0.000000e+00> : vector<320x64xf32>
    %9 = tpu.matmul %3, %8, %cst_12 {dimension_numbers = #tpu.dot_dimension_numbers<[1], [0], [0], [1], [0, 0, 1, 1], [], []>} : vector<320x64xf32>, vector<64x64xf32>, vector<320x64xf32> -> vector<320x64xf32>
    %10 = vector.shape_cast %5 : vector<320x64xf32> to vector<8x40x64xf32>
    %11 = vector.shape_cast %7 : vector<320x64xf32> to vector<8x40x64xf32>
    %12 = vector.shape_cast %9 : vector<320x64xf32> to vector<8x40x64xf32>
    "tpu.trace_start"() <{level = 10 : i32, message = "bqd,bkd->bqk"}> : () -> ()
    %cst_13 = arith.constant dense<0.000000e+00> : vector<8x40x40xf32>
    %13 = tpu.matmul %10, %11, %cst_13 {dimension_numbers = #tpu.dot_dimension_numbers<[2], [2], [1], [1], [0, 0, 0, 1, 1, 1], [0], [0]>} : vector<8x40x64xf32>, vector<8x40x64xf32>, vector<8x40x40xf32> -> vector<8x40x40xf32>
    "tpu.trace_stop"() : () -> ()
    %cst_14 = arith.constant 1.250000e-01 : f32
    %14 = vector.broadcast %cst_14 : f32 to vector<8x40x40xf32>
    %15 = arith.mulf %13, %14 : vector<8x40x40xf32>
    %16 = tpu.iota {dimensions = array<i32: 2>} : vector<1x1x40xi32>
    %c34_i32 = arith.constant 34 : i32
    %17 = vector.broadcast %c34_i32 : i32 to vector<1x1x40xi32>
    %18 = arith.cmpi slt, %16, %17 : vector<1x1x40xi32>
    %cst_15 = arith.constant -1.000000e+09 : f32
    %19 = vector.shape_cast %18 : vector<1x1x40xi1> to vector<1x1x40xi1>
    %20 = vector.broadcast %19 : vector<1x1x40xi1> to vector<8x40x40xi1>
    %21 = vector.broadcast %cst_15 : f32 to vector<8x40x40xf32>
    %22 = arith.select %20, %15, %21 : vector<8x40x40xi1>, vector<8x40x40xf32>
    %cst_16 = arith.constant dense<0xFF800000> : vector<8x40xf32>
    %23 = vector.multi_reduction <maximumf>, %22, %cst_16 [2] : vector<8x40x40xf32> to vector<8x40xf32>
    %24 = vector.shape_cast %23 : vector<8x40xf32> to vector<8x40x1xf32>
    %25 = vector.broadcast %24 : vector<8x40x1xf32> to vector<8x40x40xf32>
    %26 = arith.subf %22, %25 : vector<8x40x40xf32>
    %27 = math.exp %26 : vector<8x40x40xf32>
    %cst_17 = arith.constant dense<0.000000e+00> : vector<8x40xf32>
    %28 = vector.multi_reduction <add>, %27, %cst_17 [2] : vector<8x40x40xf32> to vector<8x40xf32>
    %29 = vector.shape_cast %28 : vector<8x40xf32> to vector<8x40x1xf32>
    %30 = tpu.reciprocal %29 {approx = true} : vector<8x40x1xf32> -> vector<8x40x1xf32>
    %31 = arith.mulf %29, %30 : vector<8x40x1xf32>
    %cst_18 = arith.constant 2.000000e+00 : f32
    %32 = vector.broadcast %cst_18 : f32 to vector<8x40x1xf32>
    %33 = arith.subf %32, %31 : vector<8x40x1xf32>
    %34 = arith.mulf %30, %33 : vector<8x40x1xf32>
    %35 = vector.broadcast %34 : vector<8x40x1xf32> to vector<8x40x40xf32>
    %36 = arith.mulf %27, %35 : vector<8x40x40xf32>
    "tpu.trace_start"() <{level = 10 : i32, message = "bqk,bkd->bqd"}> : () -> ()
    %cst_19 = arith.constant dense<0.000000e+00> : vector<8x40x64xf32>
    %37 = tpu.matmul %36, %12, %cst_19 {dimension_numbers = #tpu.dot_dimension_numbers<[2], [1], [1], [2], [0, 0, 0, 1, 1, 2], [0], [0]>} : vector<8x40x40xf32>, vector<8x40x64xf32>, vector<8x40x64xf32> -> vector<8x40x64xf32>
    "tpu.trace_stop"() : () -> ()
    %38 = vector.shape_cast %37 : vector<8x40x64xf32> to vector<320x64xf32>
    %c0_20 = arith.constant 0 : index
    %c0_21 = arith.constant 0 : index
    %39 = vector.load %arg6[%c0_20, %c0_21] : memref<64x64xf32, #tpu.memory_space<vmem>>, vector<64x64xf32>
    %cst_22 = arith.constant dense<0.000000e+00> : vector<320x64xf32>
    %40 = tpu.matmul %38, %39, %cst_22 {dimension_numbers = #tpu.dot_dimension_numbers<[1], [0], [0], [1], [0, 0, 1, 1], [], []>} : vector<320x64xf32>, vector<64x64xf32>, vector<320x64xf32> -> vector<320x64xf32>
    %41 = arith.addf %40, %2 : vector<320x64xf32>
    %cst_23 = arith.constant dense<0.000000e+00> : vector<320xf32>
    %42 = vector.multi_reduction <add>, %41, %cst_23 [1] : vector<320x64xf32> to vector<320xf32>
    %43 = vector.shape_cast %42 : vector<320xf32> to vector<320x1xf32>
    %cst_24 = arith.constant 6.400000e+01 : f32
    %44 = vector.broadcast %cst_24 : f32 to vector<320x1xf32>
    %45 = arith.divf %43, %44 : vector<320x1xf32>
    %46 = vector.broadcast %45 : vector<320x1xf32> to vector<320x64xf32>
    %47 = arith.subf %41, %46 : vector<320x64xf32>
    %48 = arith.mulf %47, %47 : vector<320x64xf32>
    %cst_25 = arith.constant dense<0.000000e+00> : vector<320xf32>
    %49 = vector.multi_reduction <add>, %48, %cst_25 [1] : vector<320x64xf32> to vector<320xf32>
    %50 = vector.shape_cast %49 : vector<320xf32> to vector<320x1xf32>
    %cst_26 = arith.constant 6.400000e+01 : f32
    %51 = vector.broadcast %cst_26 : f32 to vector<320x1xf32>
    %52 = arith.divf %50, %51 : vector<320x1xf32>
    %53 = vector.broadcast %45 : vector<320x1xf32> to vector<320x64xf32>
    %54 = arith.subf %41, %53 : vector<320x64xf32>
    %cst_27 = arith.constant 9.99999974E-6 : f32
    %55 = vector.broadcast %cst_27 : f32 to vector<320x1xf32>
    %56 = arith.addf %52, %55 : vector<320x1xf32>
    %57 = math.rsqrt %56 : vector<320x1xf32>
    %58 = vector.broadcast %57 : vector<320x1xf32> to vector<320x64xf32>
    %59 = arith.mulf %54, %58 : vector<320x64xf32>
    %c0_28 = arith.constant 0 : index
    %c0_29 = arith.constant 0 : index
    %60 = vector.load %arg7[%c0_28, %c0_29] : memref<64x512xf32, #tpu.memory_space<vmem>>, vector<64x512xf32>
    %cst_30 = arith.constant dense<0.000000e+00> : vector<320x512xf32>
    %61 = tpu.matmul %59, %60, %cst_30 {dimension_numbers = #tpu.dot_dimension_numbers<[1], [0], [0], [1], [0, 0, 1, 1], [], []>} : vector<320x64xf32>, vector<64x512xf32>, vector<320x512xf32> -> vector<320x512xf32>
    %cst_31 = arith.constant 0.000000e+00 : f32
    %62 = vector.broadcast %cst_31 : f32 to vector<320x512xf32>
    %63 = arith.maximumf %61, %62 : vector<320x512xf32>
    %c0_32 = arith.constant 0 : index
    %c0_33 = arith.constant 0 : index
    %64 = vector.load %arg8[%c0_32, %c0_33] : memref<512x64xf32, #tpu.memory_space<vmem>>, vector<512x64xf32>
    %cst_34 = arith.constant dense<0.000000e+00> : vector<320x64xf32>
    %65 = tpu.matmul %63, %64, %cst_34 {dimension_numbers = #tpu.dot_dimension_numbers<[1], [0], [0], [1], [0, 0, 1, 1], [], []>} : vector<320x512xf32>, vector<512x64xf32>, vector<320x64xf32> -> vector<320x64xf32>
    %66 = arith.addf %65, %59 : vector<320x64xf32>
    %cst_35 = arith.constant dense<0.000000e+00> : vector<320xf32>
    %67 = vector.multi_reduction <add>, %66, %cst_35 [1] : vector<320x64xf32> to vector<320xf32>
    %68 = vector.shape_cast %67 : vector<320xf32> to vector<320x1xf32>
    %cst_36 = arith.constant 6.400000e+01 : f32
    %69 = vector.broadcast %cst_36 : f32 to vector<320x1xf32>
    %70 = arith.divf %68, %69 : vector<320x1xf32>
    %71 = vector.broadcast %70 : vector<320x1xf32> to vector<320x64xf32>
    %72 = arith.subf %66, %71 : vector<320x64xf32>
    %73 = arith.mulf %72, %72 : vector<320x64xf32>
    %cst_37 = arith.constant dense<0.000000e+00> : vector<320xf32>
    %74 = vector.multi_reduction <add>, %73, %cst_37 [1] : vector<320x64xf32> to vector<320xf32>
    %75 = vector.shape_cast %74 : vector<320xf32> to vector<320x1xf32>
    %cst_38 = arith.constant 6.400000e+01 : f32
    %76 = vector.broadcast %cst_38 : f32 to vector<320x1xf32>
    %77 = arith.divf %75, %76 : vector<320x1xf32>
    %78 = vector.broadcast %70 : vector<320x1xf32> to vector<320x64xf32>
    %79 = arith.subf %66, %78 : vector<320x64xf32>
    %cst_39 = arith.constant 9.99999974E-6 : f32
    %80 = vector.broadcast %cst_39 : f32 to vector<320x1xf32>
    %81 = arith.addf %77, %80 : vector<320x1xf32>
    %82 = math.rsqrt %81 : vector<320x1xf32>
    %83 = vector.broadcast %82 : vector<320x1xf32> to vector<320x64xf32>
    %84 = arith.mulf %79, %83 : vector<320x64xf32>
    %85 = vector.shape_cast %84 : vector<320x64xf32> to vector<8x40x64xf32>
    %c0_40 = arith.constant 0 : index
    %c0_41 = arith.constant 0 : index
    %c0_42 = arith.constant 0 : index
    %86 = vector.load %arg9[%c0_40, %c0_41, %c0_42] : memref<8x40x64xf32, #tpu.memory_space<vmem>>, vector<8x40x64xf32>
    tpu.vector_store %arg9[%c0_40, %c0_41, %c0_42], %85 {strides = array<i32>} : memref<8x40x64xf32, #tpu.memory_space<vmem>>, vector<8x40x64xf32>,
    %cst_43 = arith.constant 0.000000e+00 : f32
    %87 = vector.broadcast %cst_43 : f32 to vector<8x40x88xf32>
    %88 = tpu.concatenate %36, %87 in 2 : vector<8x40x40xf32>, vector<8x40x88xf32> -> vector<8x40x128xf32>
    %c0_44 = arith.constant 0 : index
    %c0_45 = arith.constant 0 : index
    %c0_46 = arith.constant 0 : index
    %89 = vector.load %arg10[%c0_44, %c0_45, %c0_46] : memref<8x40x128xf32, #tpu.memory_space<vmem>>, vector<8x40x128xf32>
    tpu.vector_store %arg10[%c0_44, %c0_45, %c0_46], %88 {strides = array<i32>} : memref<8x40x128xf32, #tpu.memory_space<vmem>>, vector<8x40x128xf32>,
    return
  }
  func.func @transform_0(%arg0: i32) -> (i32, i32, i32) {
    %c0_i32 = arith.constant 0 : i32
    %c0_i32_0 = arith.constant 0 : i32
    %c0_i32_1 = arith.constant 0 : i32
    return %arg0, %c0_i32, %c0_i32_0 : i32, i32, i32
  }
  func.func @transform_1(%arg0: i32) -> (i32, i32, i32) {
    %c0_i32 = arith.constant 0 : i32
    %c0_i32_0 = arith.constant 0 : i32
    %c0_i32_1 = arith.constant 0 : i32
    return %arg0, %c0_i32, %c0_i32_0 : i32, i32, i32
  }
  func.func @transform_2(%arg0: i32) -> (i32, i32) {
    %c0_i32 = arith.constant 0 : i32
    %c0_i32_0 = arith.constant 0 : i32
    %c0_i32_1 = arith.constant 0 : i32
    return %c0_i32, %c0_i32_0 : i32, i32
  }
  func.func @transform_3(%arg0: i32) -> (i32, i32) {
    %c0_i32 = arith.constant 0 : i32
    %c0_i32_0 = arith.constant 0 : i32
    %c0_i32_1 = arith.constant 0 : i32
    return %c0_i32, %c0_i32_0 : i32, i32
  }
  func.func @transform_4(%arg0: i32) -> (i32, i32) {
    %c0_i32 = arith.constant 0 : i32
    %c0_i32_0 = arith.constant 0 : i32
    %c0_i32_1 = arith.constant 0 : i32
    return %c0_i32, %c0_i32_0 : i32, i32
  }
  func.func @transform_5(%arg0: i32) -> (i32, i32) {
    %c0_i32 = arith.constant 0 : i32
    %c0_i32_0 = arith.constant 0 : i32
    %c0_i32_1 = arith.constant 0 : i32
    return %c0_i32, %c0_i32_0 : i32, i32
  }
  func.func @transform_6(%arg0: i32) -> (i32, i32) {
    %c0_i32 = arith.constant 0 : i32
    %c0_i32_0 = arith.constant 0 : i32
    %c0_i32_1 = arith.constant 0 : i32
    return %c0_i32, %c0_i32_0 : i32, i32
  }
  func.func @transform_7(%arg0: i32) -> (i32, i32) {
    %c0_i32 = arith.constant 0 : i32
    %c0_i32_0 = arith.constant 0 : i32
    %c0_i32_1 = arith.constant 0 : i32
    return %c0_i32, %c0_i32_0 : i32, i32
  }
  func.func @transform_8(%arg0: i32) -> (i32, i32, i32) {
    %c0_i32 = arith.constant 0 : i32
    %c0_i32_0 = arith.constant 0 : i32
    %c0_i32_1 = arith.constant 0 : i32
    return %arg0, %c0_i32, %c0_i32_0 : i32, i32, i32
  }
  func.func @transform_9(%arg0: i32) -> (i32, i32, i32) {
    %c0_i32 = arith.constant 0 : i32
    %c0_i32_0 = arith.constant 0 : i32
    %c0_i32_1 = arith.constant 0 : i32
    return %arg0, %c0_i32, %c0_i32_0 : i32, i32, i32
  }
}

</mosaic_0001>

<llo_original>
// kernel: cross_attention.1
$region0: #{cross_attention.1}
  #allocation0 [shape = 'u32[]', space=smem, size = 0x4, offset = 0x4, fixed_abs, tag = 'smem constant byte address 0x4 - core index']
  #allocation1 [shape = 'u32[72,128]{1,0:T(1,128)}', space=vmem, size = 0x9000, scoped, tag = 'internal scratch']
  %s0 = inlined_call_operand.vmem [shape: f32[16,40,64], index: 0, kind: input, shape index: {}]
  %s1 = inlined_call_operand.vmem [shape: f32[16,40,64], index: 1, kind: input, shape index: {}]
  %s2 = inlined_call_operand.vmem [shape: f32[64,64], index: 2, kind: input, shape index: {}]
  %s3 = inlined_call_operand.vmem [shape: f32[64,64], index: 3, kind: input, shape index: {}]
  %s4 = inlined_call_operand.vmem [shape: f32[64,64], index: 4, kind: input, shape index: {}]
  %s5 = inlined_call_operand.vmem [shape: f32[64,64], index: 5, kind: input, shape index: {}]
  %s6 = inlined_call_operand.vmem [shape: f32[64,512], index: 6, kind: input, shape index: {}]
  %s7 = inlined_call_operand.vmem [shape: f32[512,64], index: 7, kind: input, shape index: {}]
  %s8 = inlined_call_operand.vmem [shape: f32[16,40,64], index: 8, kind: output, shape index: {0}]
  %s9 = inlined_call_operand.vmem [shape: f32[16,40,128], index: 9, kind: output, shape index: {1}]
  %10 = xla_tuple %s8, %s9
  %s11 = sld [smem:[#allocation0]]
  $region73: #{cross_attention.1} parent=0
    _
  %s13 = ssub.s32 1, %s11
  %s14 = scalar_select 0, %s13, %s11
  loop: start=0, step=1, limit=4
  $region2: #{cross_attention.1} parent=0 // loop_pre_header
    _
  $region3: #{cross_attention.1} parent=0 // loop_header
    %s16 = sphi 0, %s20
    %p17 = scmp.ge.s32.totalorder %s16, 4
    %s26 = sphi 0, %s28
    %s29 = sphi 0, %s26
    %s30 = sphi 0, %s29
    %s46 = sphi 0, %s30
    %s52 = sphi 0, %s54
    %s55 = sphi 0, %s52
    %s56 = sphi 0, %s55
    %s72 = sphi 0, %s56
    %s76 = sphi 0, %s76
    %s78 = sphi 0, %s76
    %s79 = sphi 0, %s78
    %s93 = sphi 0, %s79
    %s97 = sphi 0, %s97
    %s99 = sphi 0, %s97
    %s100 = sphi 0, %s99
    %s114 = sphi 0, %s100
    %s118 = sphi 0, %s118
    %s120 = sphi 0, %s118
    %s121 = sphi 0, %s120
    %s135 = sphi 0, %s121
    %s139 = sphi 0, %s139
    %s141 = sphi 0, %s139
    %s142 = sphi 0, %s141
    %s156 = sphi 0, %s142
    %s160 = sphi 0, %s160
    %s162 = sphi 0, %s160
    %s163 = sphi 0, %s162
    %s177 = sphi 0, %s163
    %s181 = sphi 0, %s181
    %s183 = sphi 0, %s181
    %s184 = sphi 0, %s183
    %s198 = sphi 0, %s184
    %s204 = sphi 0, %s206
    %s207 = sphi 0, %s204
    %s208 = sphi 0, %s207
    %s224 = sphi 0, %s208
    %s230 = sphi 0, %s232
    %s233 = sphi 0, %s230
    %s234 = sphi 0, %s233
    %s250 = sphi 0, %s234
  $region4: #{cross_attention.1} parent=0 // loop_header_branch
    %19 = sbr.rel (%p17) target = $region8
  $region5: #{cross_attention.1} parent=0 // loop_body
    %s21 = ssub.s32 %s16, 1
    %s22 = ssub.s32 %s16, 2
    %s23 = sadd.s32 %s16, 1
    %s24 = ssub.s32 %s16, %s23
    %p25 = scmp.eq.s32.totalorder %s24, 0
    %s27 = sadd.s32 %s26, 1
    %s28 = scalar_select %p25, %s26, %s27
    %p31 = pneg %p25
    %p32 = scmp.eq.s32.totalorder %s16, 1
    %p33 = por %p31, %p32
    %p34 = scmp.ne.s32.totalorder %s26, %s29
    %p35 = scmp.eq.s32.totalorder %s16, 0
    %p36 = por %p34, %p35
    %p37 = scmp.ne.s32.totalorder %s26, %s29
    %p38 = scmp.eq.s32.totalorder %s21, 1
    %p39 = por %p37, %p38
    %p40 = scmp.ne.s32.totalorder %s29, %s30
    %p41 = scmp.eq.s32.totalorder %s21, 0
    %p42 = por %p40, %p41
    %p43 = scmp.ne.s32.totalorder %s29, %s30
    %p44 = scmp.eq.s32.totalorder %s22, 1
    %p45 = por %p43, %p44
    %p47 = scmp.ne.s32.totalorder %s30, %s46
    %p48 = scmp.eq.s32.totalorder %s22, 0
    %p49 = por %p47, %p48
    %s50 = ssub.s32 %s16, %s23
    %p51 = scmp.eq.s32.totalorder %s50, 0
    %s53 = sadd.s32 %s52, 1
    %s54 = scalar_select %p51, %s52, %s53
    %p57 = pneg %p51
    %p58 = scmp.eq.s32.totalorder %s16, 1
    %p59 = por %p57, %p58
    %p60 = scmp.ne.s32.totalorder %s52, %s55
    %p61 = scmp.eq.s32.totalorder %s16, 0
    %p62 = por %p60, %p61
    %p63 = scmp.ne.s32.totalorder %s52, %s55
    %p64 = scmp.eq.s32.totalorder %s21, 1
    %p65 = por %p63, %p64
    %p66 = scmp.ne.s32.totalorder %s55, %s56
    %p67 = scmp.eq.s32.totalorder %s21, 0
    %p68 = por %p66, %p67
    %p69 = scmp.ne.s32.totalorder %s55, %s56
    %p70 = scmp.eq.s32.totalorder %s22, 1
    %p71 = por %p69, %p70
    %p73 = scmp.ne.s32.totalorder %s56, %s72
    %p74 = scmp.eq.s32.totalorder %s22, 0
    %p75 = por %p73, %p74
    %s77 = sadd.s32 %s76, 1
    %p80 = scmp.eq.s32.totalorder %s16, 1
    %p81 = scmp.ne.s32.totalorder %s76, %s78
    %p82 = scmp.eq.s32.totalorder %s16, 0
    %p83 = por %p81, %p82
    %p84 = scmp.ne.s32.totalorder %s76, %s78
    %p85 = scmp.eq.s32.totalorder %s21, 1
    %p86 = por %p84, %p85
    %p87 = scmp.ne.s32.totalorder %s78, %s79
    %p88 = scmp.eq.s32.totalorder %s21, 0
    %p89 = por %p87, %p88
    %p90 = scmp.ne.s32.totalorder %s78, %s79
    %p91 = scmp.eq.s32.totalorder %s22, 1
    %p92 = por %p90, %p91
    %p94 = scmp.ne.s32.totalorder %s79, %s93
    %p95 = scmp.eq.s32.totalorder %s22, 0
    %p96 = por %p94, %p95
    %s98 = sadd.s32 %s97, 1
    %p101 = scmp.eq.s32.totalorder %s16, 1
    %p102 = scmp.ne.s32.totalorder %s97, %s99
    %p103 = scmp.eq.s32.totalorder %s16, 0
    %p104 = por %p102, %p103
    %p105 = scmp.ne.s32.totalorder %s97, %s99
    %p106 = scmp.eq.s32.totalorder %s21, 1
    %p107 = por %p105, %p106
    %p108 = scmp.ne.s32.totalorder %s99, %s100
    %p109 = scmp.eq.s32.totalorder %s21, 0
    %p110 = por %p108, %p109
    %p111 = scmp.ne.s32.totalorder %s99, %s100
    %p112 = scmp.eq.s32.totalorder %s22, 1
    %p113 = por %p111, %p112
    %p115 = scmp.ne.s32.totalorder %s100, %s114
    %p116 = scmp.eq.s32.totalorder %s22, 0
    %p117 = por %p115, %p116
    %s119 = sadd.s32 %s118, 1
    %p122 = scmp.eq.s32.totalorder %s16, 1
    %p123 = scmp.ne.s32.totalorder %s118, %s120
    %p124 = scmp.eq.s32.totalorder %s16, 0
    %p125 = por %p123, %p124
    %p126 = scmp.ne.s32.totalorder %s118, %s120
    %p127 = scmp.eq.s32.totalorder %s21, 1
    %p128 = por %p126, %p127
    %p129 = scmp.ne.s32.totalorder %s120, %s121
    %p130 = scmp.eq.s32.totalorder %s21, 0
    %p131 = por %p129, %p130
    %p132 = scmp.ne.s32.totalorder %s120, %s121
    %p133 = scmp.eq.s32.totalorder %s22, 1
    %p134 = por %p132, %p133
    %p136 = scmp.ne.s32.totalorder %s121, %s135
    %p137 = scmp.eq.s32.totalorder %s22, 0
    %p138 = por %p136, %p137
    %s140 = sadd.s32 %s139, 1
    %p143 = scmp.eq.s32.totalorder %s16, 1
    %p144 = scmp.ne.s32.totalorder %s139, %s141
    %p145 = scmp.eq.s32.totalorder %s16, 0
    %p146 = por %p144, %p145
    %p147 = scmp.ne.s32.totalorder %s139, %s141
    %p148 = scmp.eq.s32.totalorder %s21, 1
    %p149 = por %p147, %p148
    %p150 = scmp.ne.s32.totalorder %s141, %s142
    %p151 = scmp.eq.s32.totalorder %s21, 0
    %p152 = por %p150, %p151
    %p153 = scmp.ne.s32.totalorder %s141, %s142
    %p154 = scmp.eq.s32.totalorder %s22, 1
    %p155 = por %p153, %p154
    %p157 = scmp.ne.s32.totalorder %s142, %s156
    %p158 = scmp.eq.s32.totalorder %s22, 0
    %p159 = por %p157, %p158
    %s161 = sadd.s32 %s160, 1
    %p164 = scmp.eq.s32.totalorder %s16, 1
    %p165 = scmp.ne.s32.totalorder %s160, %s162
    %p166 = scmp.eq.s32.totalorder %s16, 0
    %p167 = por %p165, %p166
    %p168 = scmp.ne.s32.totalorder %s160, %s162
    %p169 = scmp.eq.s32.totalorder %s21, 1
    %p170 = por %p168, %p169
    %p171 = scmp.ne.s32.totalorder %s162, %s163
    %p172 = scmp.eq.s32.totalorder %s21, 0
    %p173 = por %p171, %p172
    %p174 = scmp.ne.s32.totalorder %s162, %s163
    %p175 = scmp.eq.s32.totalorder %s22, 1
    %p176 = por %p174, %p175
    %p178 = scmp.ne.s32.totalorder %s163, %s177
    %p179 = scmp.eq.s32.totalorder %s22, 0
    %p180 = por %p178, %p179
    %s182 = sadd.s32 %s181, 1
    %p185 = scmp.eq.s32.totalorder %s16, 1
    %p186 = scmp.ne.s32.totalorder %s181, %s183
    %p187 = scmp.eq.s32.totalorder %s16, 0
    %p188 = por %p186, %p187
    %p189 = scmp.ne.s32.totalorder %s181, %s183
    %p190 = scmp.eq.s32.totalorder %s21, 1
    %p191 = por %p189, %p190
    %p192 = scmp.ne.s32.totalorder %s183, %s184
    %p193 = scmp.eq.s32.totalorder %s21, 0
    %p194 = por %p192, %p193
    %p195 = scmp.ne.s32.totalorder %s183, %s184
    %p196 = scmp.eq.s32.totalorder %s22, 1
    %p197 = por %p195, %p196
    %p199 = scmp.ne.s32.totalorder %s184, %s198
    %p200 = scmp.eq.s32.totalorder %s22, 0
    %p201 = por %p199, %p200
    %s202 = ssub.s32 %s16, %s23
    %p203 = scmp.eq.s32.totalorder %s202, 0
    %s205 = sadd.s32 %s204, 1
    %s206 = scalar_select %p203, %s204, %s205
    %p209 = pneg %p203
    %p210 = scmp.eq.s32.totalorder %s16, 1
    %p211 = por %p209, %p210
    %p212 = scmp.ne.s32.totalorder %s204, %s207
    %p213 = scmp.eq.s32.totalorder %s16, 0
    %p214 = por %p212, %p213
    %p215 = scmp.ne.s32.totalorder %s204, %s207
    %p216 = scmp.eq.s32.totalorder %s21, 1
    %p217 = por %p215, %p216
    %p218 = scmp.ne.s32.totalorder %s207, %s208
    %p219 = scmp.eq.s32.totalorder %s21, 0
    %p220 = por %p218, %p219
    %p221 = scmp.ne.s32.totalorder %s207, %s208
    %p222 = scmp.eq.s32.totalorder %s22, 1
    %p223 = por %p221, %p222
    %p225 = scmp.ne.s32.totalorder %s208, %s224
    %p226 = scmp.eq.s32.totalorder %s22, 0
    %p227 = por %p225, %p226
    %s228 = ssub.s32 %s16, %s23
    %p229 = scmp.eq.s32.totalorder %s228, 0
    %s231 = sadd.s32 %s230, 1
    %s232 = scalar_select %p229, %s230, %s231
    %p235 = pneg %p229
    %p236 = scmp.eq.s32.totalorder %s16, 1
    %p237 = por %p235, %p236
    %p238 = scmp.ne.s32.totalorder %s230, %s233
    %p239 = scmp.eq.s32.totalorder %s16, 0
    %p240 = por %p238, %p239
    %p241 = scmp.ne.s32.totalorder %s230, %s233
    %p242 = scmp.eq.s32.totalorder %s21, 1
    %p243 = por %p241, %p242
    %p244 = scmp.ne.s32.totalorder %s233, %s234
    %p245 = scmp.eq.s32.totalorder %s21, 0
    %p246 = por %p244, %p245
    %p247 = scmp.ne.s32.totalorder %s233, %s234
    %p248 = scmp.eq.s32.totalorder %s22, 1
    %p249 = por %p247, %p248
    %p251 = scmp.ne.s32.totalorder %s234, %s250
    %p252 = scmp.eq.s32.totalorder %s22, 0
    %p253 = por %p251, %p252
    %p254 = scmp.le.s32.totalorder 1, %s16
    %p255 = scmp.lt.s32.totalorder %s16, 3
    %p256 = pnand %p254, %p255
    %p257 = pneg %p256
    // Predicated region
    $region9: #{cross_attention.1} parent=5 // pred_check
      _
    $region10: #{cross_attention.1} parent=5 // pred_check_branch
      %259 = sbr.rel (%p256) target = $region12
    $region11: #{cross_attention.1} parent=5 // pred_region
      %s260 = ssub.s32 %s16, 1
      // Predicated region
      $region13: #{cross_attention.1} parent=11 // pred_check
        %p261 = pneg %p89
      $region14: #{cross_attention.1} parent=11 // pred_check_branch
        %263 = sbr.rel (%p261) target = $region16
      $region15: #{cross_attention.1} parent=11 // pred_region
        _
      $region16: #{cross_attention.1} parent=11 // pred_fallthru
        _
      // Predicated region
      $region17: #{cross_attention.1} parent=11 // pred_check
        %p264 = pneg %p110
      $region18: #{cross_attention.1} parent=11 // pred_check_branch
        %266 = sbr.rel (%p264) target = $region20
      $region19: #{cross_attention.1} parent=11 // pred_region
        _
      $region20: #{cross_attention.1} parent=11 // pred_fallthru
        _
      // Predicated region
      $region21: #{cross_attention.1} parent=11 // pred_check
        %p267 = pneg %p131
      $region22: #{cross_attention.1} parent=11 // pred_check_branch
        %269 = sbr.rel (%p267) target = $region24
      $region23: #{cross_attention.1} parent=11 // pred_region
        _
      $region24: #{cross_attention.1} parent=11 // pred_fallthru
        _
      // Predicated region
      $region25: #{cross_attention.1} parent=11 // pred_check
        %p270 = pneg %p152
      $region26: #{cross_attention.1} parent=11 // pred_check_branch
        %272 = sbr.rel (%p270) target = $region28
      $region27: #{cross_attention.1} parent=11 // pred_region
        _
      $region28: #{cross_attention.1} parent=11 // pred_fallthru
        _
      // Predicated region
      $region29: #{cross_attention.1} parent=11 // pred_check
        %p273 = pneg %p173
      $region30: #{cross_attention.1} parent=11 // pred_check_branch
        %275 = sbr.rel (%p273) target = $region32
      $region31: #{cross_attention.1} parent=11 // pred_region
        _
      $region32: #{cross_attention.1} parent=11 // pred_fallthru
        _
      // Predicated region
      $region33: #{cross_attention.1} parent=11 // pred_check
        %p276 = pneg %p194
      $region34: #{cross_attention.1} parent=11 // pred_check_branch
        %278 = sbr.rel (%p276) target = $region36
      $region35: #{cross_attention.1} parent=11 // pred_region
        _
      $region36: #{cross_attention.1} parent=11 // pred_fallthru
        _
    $region12: #{cross_attention.1} parent=5 // pred_fallthru
      _
    %p279 = scmp.lt.s32.totalorder %s16, 2
    // Predicated region
    $region37: #{cross_attention.1} parent=5 // pred_check
      %p280 = pneg %p279
    $region38: #{cross_attention.1} parent=5 // pred_check_branch
      %282 = sbr.rel (%p280) target = $region40
    $region39: #{cross_attention.1} parent=5 // pred_region
      // Predicated region
      $region41: #{cross_attention.1} parent=39 // pred_check
        %p283 = pneg %p36
      $region42: #{cross_attention.1} parent=39 // pred_check_branch
        %285 = sbr.rel (%p283) target = $region44
      $region43: #{cross_attention.1} parent=39 // pred_region
        %s286 = smul.u32 8, %s16
        %p287 = scmp.lt.s32.totalorder %s286, 15
        %s288 = scalar_select %p287, %s286, 15
        %s289 = smul.addr %s288, 5
        %s290 = smul.addr %s289, 8
        %s291 = scalar_lea.vmem %s0, %s290
        %s292 = smul.u32 8, %s16
      $region44: #{cross_attention.1} parent=39 // pred_fallthru
        _
      // Predicated region
      $region45: #{cross_attention.1} parent=39 // pred_check
        %p293 = pneg %p62
      $region46: #{cross_attention.1} parent=39 // pred_check_branch
        %295 = sbr.rel (%p293) target = $region48
      $region47: #{cross_attention.1} parent=39 // pred_region
        %s296 = smul.u32 8, %s16
        %p297 = scmp.lt.s32.totalorder %s296, 15
        %s298 = scalar_select %p297, %s296, 15
        %s299 = smul.addr %s298, 5
        %s300 = smul.addr %s299, 8
        %s301 = scalar_lea.vmem %s1, %s300
        %s302 = smul.u32 8, %s16
      $region48: #{cross_attention.1} parent=39 // pred_fallthru
        _
    $region40: #{cross_attention.1} parent=5 // pred_fallthru
      _
    %p303 = scmp.le.s32.totalorder 1, %s16
    %p304 = scmp.lt.s32.totalorder %s16, 3
    %p305 = pnand %p303, %p304
    %p306 = pneg %p305
    // Predicated region
    $region49: #{cross_attention.1} parent=5 // pred_check
      _
    $region50: #{cross_attention.1} parent=5 // pred_check_branch
      %308 = sbr.rel (%p305) target = $region52
    $region51: #{cross_attention.1} parent=5 // pred_region
      %s309 = ssub.s32 %s16, 1
      %s310 = smul.u32 8, %s21
      %p311 = scmp.lt.s32.totalorder %s310, 15
      %s312 = scalar_select %p311, %s310, 15
      %s313 = smul.addr %s312, 5
      %s314 = smul.addr %s313, 8
      %s315 = scalar_lea.vmem %s0, %s314
      %p316 = pneg %p42
      %p317 = pneg %p39
      %s318 = smul.u32 8, %s21
      %p319 = scmp.lt.s32.totalorder %s318, 15
      %s320 = scalar_select %p319, %s318, 15
      %s321 = smul.addr %s320, 5
      %s322 = smul.addr %s321, 8
      %s323 = scalar_lea.vmem %s1, %s322
      %p324 = pneg %p68
      %p325 = pneg %p65
      %p326 = pneg %p89
      %p327 = pneg %p86
      %p328 = pneg %p110
      %p329 = pneg %p107
      %p330 = pneg %p131
      %p331 = pneg %p128
      %p332 = pneg %p152
      %p333 = pneg %p149
      %p334 = pneg %p173
      %p335 = pneg %p170
      %p336 = pneg %p194
      %p337 = pneg %p191
      %p338 = pneg %p220
      %p339 = pneg %p217
      %s340 = smul.u32 8, %s21
      %p341 = scmp.lt.s32.totalorder %s340, 15
      %s342 = scalar_select %p341, %s340, 15
      %s343 = smul.addr %s342, 5
      %s344 = smul.addr %s343, 8
      %s345 = scalar_lea.vmem %s8, %s344
      %p346 = pneg %p246
      %p347 = pneg %p243
      %s348 = smul.u32 8, %s21
      %p349 = scmp.lt.s32.totalorder %s348, 15
      %s350 = scalar_select %p349, %s348, 15
      %s351 = smul.addr %s350, 5
      %s352 = smul.addr %s351, 8
      %s353 = scalar_lea.vmem %s9, %s352
      %s354 = smul.u32 8, %s21
      %p355 = scmp.lt.s32.totalorder %s354, 15
      %s356 = scalar_select %p355, %s354, 15
      %s357 = smul.addr %s356, 5
      %s358 = smul.addr %s357, 8
      %s359 = scalar_lea.vmem %s0, %s358
      %s360 = smul.u32 8, %s21
      %s361 = smul.u32 8, %s21
      %p362 = scmp.lt.s32.totalorder %s361, 15
      %s363 = scalar_select %p362, %s361, 15
      %s364 = smul.addr %s363, 5
      %s365 = smul.addr %s364, 8
      %s366 = scalar_lea.vmem %s1, %s365
      %s367 = smul.u32 8, %s21
      %s368 = smul.u32 8, %s21
      %p369 = scmp.lt.s32.totalorder %s368, 15
      %s370 = scalar_select %p369, %s368, 15
      %s371 = smul.addr %s370, 5
      %s372 = smul.addr %s371, 8
      %s373 = scalar_lea.vmem %s8, %s372
      %s374 = smul.u32 8, %s21
      %s375 = smul.u32 8, %s21
      %p376 = scmp.lt.s32.totalorder %s375, 15
      %s377 = scalar_select %p376, %s375, 15
      %s378 = smul.addr %s377, 5
      %s379 = smul.addr %s378, 8
      %s380 = scalar_lea.vmem %s9, %s379
      %s381 = smul.u32 8, %s21
      %v382 = vld [vmem:[%s359] sm:$0xff]
      %v383 = vld [vmem:[%s359 + $0x8] sm:$0xff]
      %v384 = vld [vmem:[%s359 + $0x10] sm:$0xff]
      %v385 = vld [vmem:[%s359 + $0x18] sm:$0xff]
      %v386 = vld [vmem:[%s359 + $0x20] sm:$0xff]
      %v387 = vld [vmem:[%s359 + $0x28] sm:$0xff]
      %v388 = vld [vmem:[%s359 + $0x30] sm:$0xff]
      %v389 = vld [vmem:[%s359 + $0x38] sm:$0xff]
      %v390 = vld [vmem:[%s359 + $0x40] sm:$0xff]
      %v391 = vld [vmem:[%s359 + $0x48] sm:$0xff]
      %v392 = vld [vmem:[%s359 + $0x50] sm:$0xff]
      %v393 = vld [vmem:[%s359 + $0x58] sm:$0xff]
      %v394 = vld [vmem:[%s359 + $0x60] sm:$0xff]
      %v395 = vld [vmem:[%s359 + $0x68] sm:$0xff]
      %v396 = vld [vmem:[%s359 + $0x70] sm:$0xff]
      %v397 = vld [vmem:[%s359 + $0x78] sm:$0xff]
      %v398 = vld [vmem:[%s359 + $0x80] sm:$0xff]
      %v399 = vld [vmem:[%s359 + $0x88] sm:$0xff]
      %v400 = vld [vmem:[%s359 + $0x90] sm:$0xff]
      %v401 = vld [vmem:[%s359 + $0x98] sm:$0xff]
      %v402 = vld [vmem:[%s359 + $0xa0] sm:$0xff]
      %v403 = vld [vmem:[%s359 + $0xa8] sm:$0xff]
      %v404 = vld [vmem:[%s359 + $0xb0] sm:$0xff]
      %v405 = vld [vmem:[%s359 + $0xb8] sm:$0xff]
      %v406 = vld [vmem:[%s359 + $0xc0] sm:$0xff]
      %v407 = vld [vmem:[%s359 + $0xc8] sm:$0xff]
      %v408 = vld [vmem:[%s359 + $0xd0] sm:$0xff]
      %v409 = vld [vmem:[%s359 + $0xd8] sm:$0xff]
      %v410 = vld [vmem:[%s359 + $0xe0] sm:$0xff]
      %v411 = vld [vmem:[%s359 + $0xe8] sm:$0xff]
      %v412 = vld [vmem:[%s359 + $0xf0] sm:$0xff]
      %v413 = vld [vmem:[%s359 + $0xf8] sm:$0xff]
      %v414 = vld [vmem:[%s359 + $0x100] sm:$0xff]
      %v415 = vld [vmem:[%s359 + $0x108] sm:$0xff]
      %v416 = vld [vmem:[%s359 + $0x110] sm:$0xff]
      %v417 = vld [vmem:[%s359 + $0x118] sm:$0xff]
      %v418 = vld [vmem:[%s359 + $0x120] sm:$0xff]
      %v419 = vld [vmem:[%s359 + $0x128] sm:$0xff]
      %v420 = vld [vmem:[%s359 + $0x130] sm:$0xff]
      %v421 = vld [vmem:[%s359 + $0x138] sm:$0xff]
      %v422 = vld [vmem:[%s366] sm:$0xff]
      %v423 = vld [vmem:[%s366 + $0x8] sm:$0xff]
      %v424 = vld [vmem:[%s366 + $0x10] sm:$0xff]
      %v425 = vld [vmem:[%s366 + $0x18] sm:$0xff]
      %v426 = vld [vmem:[%s366 + $0x20] sm:$0xff]
      %v427 = vld [vmem:[%s366 + $0x28] sm:$0xff]
      %v428 = vld [vmem:[%s366 + $0x30] sm:$0xff]
      %v429 = vld [vmem:[%s366 + $0x38] sm:$0xff]
      %v430 = vld [vmem:[%s366 + $0x40] sm:$0xff]
      %v431 = vld [vmem:[%s366 + $0x48] sm:$0xff]
      %v432 = vld [vmem:[%s366 + $0x50] sm:$0xff]
      %v433 = vld [vmem:[%s366 + $0x58] sm:$0xff]
      %v434 = vld [vmem:[%s366 + $0x60] sm:$0xff]
      %v435 = vld [vmem:[%s366 + $0x68] sm:$0xff]
      %v436 = vld [vmem:[%s366 + $0x70] sm:$0xff]
      %v437 = vld [vmem:[%s366 + $0x78] sm:$0xff]
      %v438 = vld [vmem:[%s366 + $0x80] sm:$0xff]
      %v439 = vld [vmem:[%s366 + $0x88] sm:$0xff]
      %v440 = vld [vmem:[%s366 + $0x90] sm:$0xff]
      %v441 = vld [vmem:[%s366 + $0x98] sm:$0xff]
      %v442 = vld [vmem:[%s366 + $0xa0] sm:$0xff]
      %v443 = vld [vmem:[%s366 + $0xa8] sm:$0xff]
      %v444 = vld [vmem:[%s366 + $0xb0] sm:$0xff]
      %v445 = vld [vmem:[%s366 + $0xb8] sm:$0xff]
      %v446 = vld [vmem:[%s366 + $0xc0] sm:$0xff]
      %v447 = vld [vmem:[%s366 + $0xc8] sm:$0xff]
      %v448 = vld [vmem:[%s366 + $0xd0] sm:$0xff]
      %v449 = vld [vmem:[%s366 + $0xd8] sm:$0xff]
      %v450 = vld [vmem:[%s366 + $0xe0] sm:$0xff]
      %v451 = vld [vmem:[%s366 + $0xe8] sm:$0xff]
      %v452 = vld [vmem:[%s366 + $0xf0] sm:$0xff]
      %v453 = vld [vmem:[%s366 + $0xf8] sm:$0xff]
      %v454 = vld [vmem:[%s366 + $0x100] sm:$0xff]
      %v455 = vld [vmem:[%s366 + $0x108] sm:$0xff]
      %v456 = vld [vmem:[%s366 + $0x110] sm:$0xff]
      %v457 = vld [vmem:[%s366 + $0x118] sm:$0xff]
      %v458 = vld [vmem:[%s366 + $0x120] sm:$0xff]
      %v459 = vld [vmem:[%s366 + $0x128] sm:$0xff]
      %v460 = vld [vmem:[%s366 + $0x130] sm:$0xff]
      %v461 = vld [vmem:[%s366 + $0x138] sm:$0xff]
      %v462 = vld [vmem:[%s2] sm:$0xff]
      %v463 = vld [vmem:[%s2 + $0x8] sm:$0xff]
      %v464 = vld [vmem:[%s2 + $0x10] sm:$0xff]
      %v465 = vld [vmem:[%s2 + $0x18] sm:$0xff]
      %v466 = vld [vmem:[%s2 + $0x20] sm:$0xff]
      %v467 = vld [vmem:[%s2 + $0x28] sm:$0xff]
      %v468 = vld [vmem:[%s2 + $0x30] sm:$0xff]
      %v469 = vld [vmem:[%s2 + $0x38] sm:$0xff]
      %vm470 = vcmask 523264
      %v472 = vsel %vm470, %v382, 0
      %v475 = vsel %vm470, %v383, 0
      %v478 = vsel %vm470, %v384, 0
      %v481 = vsel %vm470, %v385, 0
      %v484 = vsel %vm470, %v386, 0
      %v487 = vsel %vm470, %v387, 0
      %v490 = vsel %vm470, %v388, 0
      %v493 = vsel %vm470, %v389, 0
      %v496 = vsel %vm470, %v390, 0
      %v499 = vsel %vm470, %v391, 0
      %v502 = vsel %vm470, %v392, 0
      %v505 = vsel %vm470, %v393, 0
      %v508 = vsel %vm470, %v394, 0
      %v511 = vsel %vm470, %v395, 0
      %v514 = vsel %vm470, %v396, 0
      %v517 = vsel %vm470, %v397, 0
      %v520 = vsel %vm470, %v398, 0
      %v523 = vsel %vm470, %v399, 0
      %v526 = vsel %vm470, %v400, 0
      %v529 = vsel %vm470, %v401, 0
      %v532 = vsel %vm470, %v402, 0
      %v535 = vsel %vm470, %v403, 0
      %v538 = vsel %vm470, %v404, 0
      %v541 = vsel %vm470, %v405, 0
      %v544 = vsel %vm470, %v406, 0
      %v547 = vsel %vm470, %v407, 0
      %v550 = vsel %vm470, %v408, 0
      %v553 = vsel %vm470, %v409, 0
      %v556 = vsel %vm470, %v410, 0
      %v559 = vsel %vm470, %v411, 0
      %v562 = vsel %vm470, %v412, 0
      %v565 = vsel %vm470, %v413, 0
      %v568 = vsel %vm470, %v414, 0
      %v571 = vsel %vm470, %v415, 0
      %v574 = vsel %vm470, %v416, 0
      %v577 = vsel %vm470, %v417, 0
      %v580 = vsel %vm470, %v418, 0
      %v583 = vsel %vm470, %v419, 0
      %v586 = vsel %vm470, %v420, 0
      %v589 = vsel %vm470, %v421, 0
      %591 = vmatpush.msra.mxu0 0.0
      %592 = vmatpush.msra.mxu0 0.0
      %593 = vmatpush.msra.mxu0 0.0
      %594 = vmatpush.msra.mxu0 0.0
      %595 = vmatpush.msra.mxu0 0.0
      %596 = vmatpush.msra.mxu0 0.0
      %597 = vmatpush.msra.mxu0 0.0
      %598 = vmatpush.msra.mxu0 0.0
      %599 = vmatpush.msra.mxu0 %v469
      %600 = vmatpush.msra.mxu0 %v468
      %601 = vmatpush.msra.mxu0 %v467
      %602 = vmatpush.msra.mxu0 %v466
      %603 = vmatpush.msra.mxu0 %v465
      %604 = vmatpush.msra.mxu0 %v464
      %605 = vmatpush.msra.mxu0 %v463
      %606 = vmatpush.msra.mxu0 %v462
      %607 = vmatmul.f32.gmra.mxu0 %v472
      %v608 = vpop.f32.mrf.mxu0
      %v609 = vadd.f32 0.0, %v608
      %610 = vmatmul.f32.gmra.mxu0 %v475
      %v611 = vpop.f32.mrf.mxu0
      %v612 = vadd.f32 0.0, %v611
      %613 = vmatmul.f32.gmra.mxu0 %v478
      %v614 = vpop.f32.mrf.mxu0
      %v615 = vadd.f32 0.0, %v614
      %616 = vmatmul.f32.gmra.mxu0 %v481
      %v617 = vpop.f32.mrf.mxu0
      %v618 = vadd.f32 0.0, %v617
      %619 = vmatmul.f32.gmra.mxu0 %v484
      %v620 = vpop.f32.mrf.mxu0
      %v621 = vadd.f32 0.0, %v620
      %622 = vmatmul.f32.gmra.mxu0 %v487
      %v623 = vpop.f32.mrf.mxu0
      %v624 = vadd.f32 0.0, %v623
      %625 = vmatmul.f32.gmra.mxu0 %v490
      %v626 = vpop.f32.mrf.mxu0
      %v627 = vadd.f32 0.0, %v626
      %628 = vmatmul.f32.gmra.mxu0 %v493
      %v629 = vpop.f32.mrf.mxu0
      %v630 = vadd.f32 0.0, %v629
      %631 = vmatmul.f32.gmra.mxu0 %v496
      %v632 = vpop.f32.mrf.mxu0
      %v633 = vadd.f32 0.0, %v632
      %634 = vmatmul.f32.gmra.mxu0 %v499
      %v635 = vpop.f32.mrf.mxu0
      %v636 = vadd.f32 0.0, %v635
      %637 = vmatmul.f32.gmra.mxu0 %v502
      %v638 = vpop.f32.mrf.mxu0
      %v639 = vadd.f32 0.0, %v638
      %640 = vmatmul.f32.gmra.mxu0 %v505
      %v641 = vpop.f32.mrf.mxu0
      %v642 = vadd.f32 0.0, %v641
      %643 = vmatmul.f32.gmra.mxu0 %v508
      %v644 = vpop.f32.mrf.mxu0
      %v645 = vadd.f32 0.0, %v644
      %646 = vmatmul.f32.gmra.mxu0 %v511
      %v647 = vpop.f32.mrf.mxu0
      %v648 = vadd.f32 0.0, %v647
      %649 = vmatmul.f32.gmra.mxu0 %v514
      %v650 = vpop.f32.mrf.mxu0
      %v651 = vadd.f32 0.0, %v650
      %652 = vmatmul.f32.gmra.mxu0 %v517
      %v653 = vpop.f32.mrf.mxu0
      %v654 = vadd.f32 0.0, %v653
      %655 = vmatmul.f32.gmra.mxu0 %v520
      %v656 = vpop.f32.mrf.mxu0
      %v657 = vadd.f32 0.0, %v656
      %658 = vmatmul.f32.gmra.mxu0 %v523
      %v659 = vpop.f32.mrf.mxu0
      %v660 = vadd.f32 0.0, %v659
      %661 = vmatmul.f32.gmra.mxu0 %v526
      %v662 = vpop.f32.mrf.mxu0
      %v663 = vadd.f32 0.0, %v662
      %664 = vmatmul.f32.gmra.mxu0 %v529
      %v665 = vpop.f32.mrf.mxu0
      %v666 = vadd.f32 0.0, %v665
      %667 = vmatmul.f32.gmra.mxu0 %v532
      %v668 = vpop.f32.mrf.mxu0
      %v669 = vadd.f32 0.0, %v668
      %670 = vmatmul.f32.gmra.mxu0 %v535
      %v671 = vpop.f32.mrf.mxu0
      %v672 = vadd.f32 0.0, %v671
      %673 = vmatmul.f32.gmra.mxu0 %v538
      %v674 = vpop.f32.mrf.mxu0
      %v675 = vadd.f32 0.0, %v674
      %676 = vmatmul.f32.gmra.mxu0 %v541
      %v677 = vpop.f32.mrf.mxu0
      %v678 = vadd.f32 0.0, %v677
      %679 = vmatmul.f32.gmra.mxu0 %v544
      %v680 = vpop.f32.mrf.mxu0
      %v681 = vadd.f32 0.0, %v680
      %682 = vmatmul.f32.gmra.mxu0 %v547
      %v683 = vpop.f32.mrf.mxu0
      %v684 = vadd.f32 0.0, %v683
      %685 = vmatmul.f32.gmra.mxu0 %v550
      %v686 = vpop.f32.mrf.mxu0
      %v687 = vadd.f32 0.0, %v686
      %688 = vmatmul.f32.gmra.mxu0 %v553
      %v689 = vpop.f32.mrf.mxu0
      %v690 = vadd.f32 0.0, %v689
      %691 = vmatmul.f32.gmra.mxu0 %v556
      %v692 = vpop.f32.mrf.mxu0
      %v693 = vadd.f32 0.0, %v692
      %694 = vmatmul.f32.gmra.mxu0 %v559
      %v695 = vpop.f32.mrf.mxu0
      %v696 = vadd.f32 0.0, %v695
      %697 = vmatmul.f32.gmra.mxu0 %v562
      %v698 = vpop.f32.mrf.mxu0
      %v699 = vadd.f32 0.0, %v698
      %700 = vmatmul.f32.gmra.mxu0 %v565
      %v701 = vpop.f32.mrf.mxu0
      %v702 = vadd.f32 0.0, %v701
      %703 = vmatmul.f32.gmra.mxu0 %v568
      %v704 = vpop.f32.mrf.mxu0
      %v705 = vadd.f32 0.0, %v704
      %706 = vmatmul.f32.gmra.mxu0 %v571
      %v707 = vpop.f32.mrf.mxu0
      %v708 = vadd.f32 0.0, %v707
      %709 = vmatmul.f32.gmra.mxu0 %v574
      %v710 = vpop.f32.mrf.mxu0
      %v711 = vadd.f32 0.0, %v710
      %712 = vmatmul.f32.gmra.mxu0 %v577
      %v713 = vpop.f32.mrf.mxu0
      %v714 = vadd.f32 0.0, %v713
      %715 = vmatmul.f32.gmra.mxu0 %v580
      %v716 = vpop.f32.mrf.mxu0
      %v717 = vadd.f32 0.0, %v716
      %718 = vmatmul.f32.gmra.mxu0 %v583
      %v719 = vpop.f32.mrf.mxu0
      %v720 = vadd.f32 0.0, %v719
      %721 = vmatmul.f32.gmra.mxu0 %v586
      %v722 = vpop.f32.mrf.mxu0
      %v723 = vadd.f32 0.0, %v722
      %724 = vmatmul.f32.gmra.mxu0 %v589
      %v725 = vpop.f32.mrf.mxu0
      %v726 = vadd.f32 0.0, %v725
      %727 = vdwg.mxu0
      %v728 = vld [vmem:[%s3] sm:$0xff]
      %v729 = vld [vmem:[%s3 + $0x8] sm:$0xff]
      %v730 = vld [vmem:[%s3 + $0x10] sm:$0xff]
      %v731 = vld [vmem:[%s3 + $0x18] sm:$0xff]
      %v732 = vld [vmem:[%s3 + $0x20] sm:$0xff]
      %v733 = vld [vmem:[%s3 + $0x28] sm:$0xff]
      %v734 = vld [vmem:[%s3 + $0x30] sm:$0xff]
      %v735 = vld [vmem:[%s3 + $0x38] sm:$0xff]
      %v737 = vsel %vm470, %v422, 0
      %v740 = vsel %vm470, %v423, 0
      %v743 = vsel %vm470, %v424, 0
      %v746 = vsel %vm470, %v425, 0
      %v749 = vsel %vm470, %v426, 0
      %v752 = vsel %vm470, %v427, 0
      %v755 = vsel %vm470, %v428, 0
      %v758 = vsel %vm470, %v429, 0
      %v761 = vsel %vm470, %v430, 0
      %v764 = vsel %vm470, %v431, 0
      %v767 = vsel %vm470, %v432, 0
      %v770 = vsel %vm470, %v433, 0
      %v773 = vsel %vm470, %v434, 0
      %v776 = vsel %vm470, %v435, 0
      %v779 = vsel %vm470, %v436, 0
      %v782 = vsel %vm470, %v437, 0
      %v785 = vsel %vm470, %v438, 0
      %v788 = vsel %vm470, %v439, 0
      %v791 = vsel %vm470, %v440, 0
      %v794 = vsel %vm470, %v441, 0
      %v797 = vsel %vm470, %v442, 0
      %v800 = vsel %vm470, %v443, 0
      %v803 = vsel %vm470, %v444, 0
      %v806 = vsel %vm470, %v445, 0
      %v809 = vsel %vm470, %v446, 0
      %v812 = vsel %vm470, %v447, 0
      %v815 = vsel %vm470, %v448, 0
      %v818 = vsel %vm470, %v449, 0
      %v821 = vsel %vm470, %v450, 0
      %v824 = vsel %vm470, %v451, 0
      %v827 = vsel %vm470, %v452, 0
      %v830 = vsel %vm470, %v453, 0
      %v833 = vsel %vm470, %v454, 0
      %v836 = vsel %vm470, %v455, 0
      %v839 = vsel %vm470, %v456, 0
      %v842 = vsel %vm470, %v457, 0
      %v845 = vsel %vm470, %v458, 0
      %v848 = vsel %vm470, %v459, 0
      %v851 = vsel %vm470, %v460, 0
      %v854 = vsel %vm470, %v461, 0
      %856 = vmatpush.msra.mxu0 0.0
      %857 = vmatpush.msra.mxu0 0.0
      %858 = vmatpush.msra.mxu0 0.0
      %859 = vmatpush.msra.mxu0 0.0
      %860 = vmatpush.msra.mxu0 0.0
      %861 = vmatpush.msra.mxu0 0.0
      %862 = vmatpush.msra.mxu0 0.0
      %863 = vmatpush.msra.mxu0 0.0
      %864 = vmatpush.msra.mxu0 %v735
      %865 = vmatpush.msra.mxu0 %v734
      %866 = vmatpush.msra.mxu0 %v733
      %867 = vmatpush.msra.mxu0 %v732
      %868 = vmatpush.msra.mxu0 %v731
      %869 = vmatpush.msra.mxu0 %v730
      %870 = vmatpush.msra.mxu0 %v729
      %871 = vmatpush.msra.mxu0 %v728
      %872 = vmatmul.f32.gmra.mxu0 %v737
      %v873 = vpop.f32.mrf.mxu0
      %v874 = vadd.f32 0.0, %v873
      %875 = vmatmul.f32.gmra.mxu0 %v740
      %v876 = vpop.f32.mrf.mxu0
      %v877 = vadd.f32 0.0, %v876
      %878 = vmatmul.f32.gmra.mxu0 %v743
      %v879 = vpop.f32.mrf.mxu0
      %v880 = vadd.f32 0.0, %v879
      %881 = vmatmul.f32.gmra.mxu0 %v746
      %v882 = vpop.f32.mrf.mxu0
      %v883 = vadd.f32 0.0, %v882
      %884 = vmatmul.f32.gmra.mxu0 %v749
      %v885 = vpop.f32.mrf.mxu0
      %v886 = vadd.f32 0.0, %v885
      %887 = vmatmul.f32.gmra.mxu0 %v752
      %v888 = vpop.f32.mrf.mxu0
      %v889 = vadd.f32 0.0, %v888
      %890 = vmatmul.f32.gmra.mxu0 %v755
      %v891 = vpop.f32.mrf.mxu0
      %v892 = vadd.f32 0.0, %v891
      %893 = vmatmul.f32.gmra.mxu0 %v758
      %v894 = vpop.f32.mrf.mxu0
      %v895 = vadd.f32 0.0, %v894
      %896 = vmatmul.f32.gmra.mxu0 %v761
      %v897 = vpop.f32.mrf.mxu0
      %v898 = vadd.f32 0.0, %v897
      %899 = vmatmul.f32.gmra.mxu0 %v764
      %v900 = vpop.f32.mrf.mxu0
      %v901 = vadd.f32 0.0, %v900
      %902 = vmatmul.f32.gmra.mxu0 %v767
      %v903 = vpop.f32.mrf.mxu0
      %v904 = vadd.f32 0.0, %v903
      %905 = vmatmul.f32.gmra.mxu0 %v770
      %v906 = vpop.f32.mrf.mxu0
      %v907 = vadd.f32 0.0, %v906
      %908 = vmatmul.f32.gmra.mxu0 %v773
      %v909 = vpop.f32.mrf.mxu0
      %v910 = vadd.f32 0.0, %v909
      %911 = vmatmul.f32.gmra.mxu0 %v776
      %v912 = vpop.f32.mrf.mxu0
      %v913 = vadd.f32 0.0, %v912
      %914 = vmatmul.f32.gmra.mxu0 %v779
      %v915 = vpop.f32.mrf.mxu0
      %v916 = vadd.f32 0.0, %v915
      %917 = vmatmul.f32.gmra.mxu0 %v782
      %v918 = vpop.f32.mrf.mxu0
      %v919 = vadd.f32 0.0, %v918
      %920 = vmatmul.f32.gmra.mxu0 %v785
      %v921 = vpop.f32.mrf.mxu0
      %v922 = vadd.f32 0.0, %v921
      %923 = vmatmul.f32.gmra.mxu0 %v788
      %v924 = vpop.f32.mrf.mxu0
      %v925 = vadd.f32 0.0, %v924
      %926 = vmatmul.f32.gmra.mxu0 %v791
      %v927 = vpop.f32.mrf.mxu0
      %v928 = vadd.f32 0.0, %v927
      %929 = vmatmul.f32.gmra.mxu0 %v794
      %v930 = vpop.f32.mrf.mxu0
      %v931 = vadd.f32 0.0, %v930
      %932 = vmatmul.f32.gmra.mxu0 %v797
      %v933 = vpop.f32.mrf.mxu0
      %v934 = vadd.f32 0.0, %v933
      %935 = vmatmul.f32.gmra.mxu0 %v800
      %v936 = vpop.f32.mrf.mxu0
      %v937 = vadd.f32 0.0, %v936
      %938 = vmatmul.f32.gmra.mxu0 %v803
      %v939 = vpop.f32.mrf.mxu0
      %v940 = vadd.f32 0.0, %v939
      %941 = vmatmul.f32.gmra.mxu0 %v806
      %v942 = vpop.f32.mrf.mxu0
      %v943 = vadd.f32 0.0, %v942
      %944 = vmatmul.f32.gmra.mxu0 %v809
      %v945 = vpop.f32.mrf.mxu0
      %v946 = vadd.f32 0.0, %v945
      %947 = vmatmul.f32.gmra.mxu0 %v812
      %v948 = vpop.f32.mrf.mxu0
      %v949 = vadd.f32 0.0, %v948
      %950 = vmatmul.f32.gmra.mxu0 %v815
      %v951 = vpop.f32.mrf.mxu0
      %v952 = vadd.f32 0.0, %v951
      %953 = vmatmul.f32.gmra.mxu0 %v818
      %v954 = vpop.f32.mrf.mxu0
      %v955 = vadd.f32 0.0, %v954
      %956 = vmatmul.f32.gmra.mxu0 %v821
      %v957 = vpop.f32.mrf.mxu0
      %v958 = vadd.f32 0.0, %v957
      %959 = vmatmul.f32.gmra.mxu0 %v824
      %v960 = vpop.f32.mrf.mxu0
      %v961 = vadd.f32 0.0, %v960
      %962 = vmatmul.f32.gmra.mxu0 %v827
      %v963 = vpop.f32.mrf.mxu0
      %v964 = vadd.f32 0.0, %v963
      %965 = vmatmul.f32.gmra.mxu0 %v830
      %v966 = vpop.f32.mrf.mxu0
      %v967 = vadd.f32 0.0, %v966
      %968 = vmatmul.f32.gmra.mxu0 %v833
      %v969 = vpop.f32.mrf.mxu0
      %v970 = vadd.f32 0.0, %v969
      %971 = vmatmul.f32.gmra.mxu0 %v836
      %v972 = vpop.f32.mrf.mxu0
      %v973 = vadd.f32 0.0, %v972
      %974 = vmatmul.f32.gmra.mxu0 %v839
      %v975 = vpop.f32.mrf.mxu0
      %v976 = vadd.f32 0.0, %v975
      %977 = vmatmul.f32.gmra.mxu0 %v842
      %v978 = vpop.f32.mrf.mxu0
      %v979 = vadd.f32 0.0, %v978
      %980 = vmatmul.f32.gmra.mxu0 %v845
      %v981 = vpop.f32.mrf.mxu0
      %v982 = vadd.f32 0.0, %v981
      %983 = vmatmul.f32.gmra.mxu0 %v848
      %v984 = vpop.f32.mrf.mxu0
      %v985 = vadd.f32 0.0, %v984
      %986 = vmatmul.f32.gmra.mxu0 %v851
      %v987 = vpop.f32.mrf.mxu0
      %v988 = vadd.f32 0.0, %v987
      %989 = vmatmul.f32.gmra.mxu0 %v854
      %v990 = vpop.f32.mrf.mxu0
      %v991 = vadd.f32 0.0, %v990
      %992 = vdwg.mxu0
      %v993 = vld [vmem:[%s4] sm:$0xff]
      %v994 = vld [vmem:[%s4 + $0x8] sm:$0xff]
      %v995 = vld [vmem:[%s4 + $0x10] sm:$0xff]
      %v996 = vld [vmem:[%s4 + $0x18] sm:$0xff]
      %v997 = vld [vmem:[%s4 + $0x20] sm:$0xff]
      %v998 = vld [vmem:[%s4 + $0x28] sm:$0xff]
      %v999 = vld [vmem:[%s4 + $0x30] sm:$0xff]
      %v1000 = vld [vmem:[%s4 + $0x38] sm:$0xff]
      %1001 = vmatpush.msra.mxu0 0.0
      %1002 = vmatpush.msra.mxu0 0.0
      %1003 = vmatpush.msra.mxu0 0.0
      %1004 = vmatpush.msra.mxu0 0.0
      %1005 = vmatpush.msra.mxu0 0.0
      %1006 = vmatpush.msra.mxu0 0.0
      %1007 = vmatpush.msra.mxu0 0.0
      %1008 = vmatpush.msra.mxu0 0.0
      %1009 = vmatpush.msra.mxu0 %v1000
      %1010 = vmatpush.msra.mxu0 %v999
      %1011 = vmatpush.msra.mxu0 %v998
      %1012 = vmatpush.msra.mxu0 %v997
      %1013 = vmatpush.msra.mxu0 %v996
      %1014 = vmatpush.msra.mxu0 %v995
      %1015 = vmatpush.msra.mxu0 %v994
      %1016 = vmatpush.msra.mxu0 %v993
      %1017 = vmatmul.f32.gmra.mxu0 %v737
      %v1018 = vpop.f32.mrf.mxu0
      %v1019 = vadd.f32 0.0, %v1018
      %1020 = vmatmul.f32.gmra.mxu0 %v740
      %v1021 = vpop.f32.mrf.mxu0
      %v1022 = vadd.f32 0.0, %v1021
      %1023 = vmatmul.f32.gmra.mxu0 %v743
      %v1024 = vpop.f32.mrf.mxu0
      %v1025 = vadd.f32 0.0, %v1024
      %1026 = vmatmul.f32.gmra.mxu0 %v746
      %v1027 = vpop.f32.mrf.mxu0
      %v1028 = vadd.f32 0.0, %v1027
      %1029 = vmatmul.f32.gmra.mxu0 %v749
      %v1030 = vpop.f32.mrf.mxu0
      %v1031 = vadd.f32 0.0, %v1030
      %1032 = vmatmul.f32.gmra.mxu0 %v752
      %v1033 = vpop.f32.mrf.mxu0
      %v1034 = vadd.f32 0.0, %v1033
      %1035 = vmatmul.f32.gmra.mxu0 %v755
      %v1036 = vpop.f32.mrf.mxu0
      %v1037 = vadd.f32 0.0, %v1036
      %1038 = vmatmul.f32.gmra.mxu0 %v758
      %v1039 = vpop.f32.mrf.mxu0
      %v1040 = vadd.f32 0.0, %v1039
      %1041 = vmatmul.f32.gmra.mxu0 %v761
      %v1042 = vpop.f32.mrf.mxu0
      %v1043 = vadd.f32 0.0, %v1042
      %1044 = vmatmul.f32.gmra.mxu0 %v764
      %v1045 = vpop.f32.mrf.mxu0
      %v1046 = vadd.f32 0.0, %v1045
      %1047 = vmatmul.f32.gmra.mxu0 %v767
      %v1048 = vpop.f32.mrf.mxu0
      %v1049 = vadd.f32 0.0, %v1048
      %1050 = vmatmul.f32.gmra.mxu0 %v770
      %v1051 = vpop.f32.mrf.mxu0
      %v1052 = vadd.f32 0.0, %v1051
      %1053 = vmatmul.f32.gmra.mxu0 %v773
      %v1054 = vpop.f32.mrf.mxu0
      %v1055 = vadd.f32 0.0, %v1054
      %1056 = vmatmul.f32.gmra.mxu0 %v776
      %v1057 = vpop.f32.mrf.mxu0
      %v1058 = vadd.f32 0.0, %v1057
      %1059 = vmatmul.f32.gmra.mxu0 %v779
      %v1060 = vpop.f32.mrf.mxu0
      %v1061 = vadd.f32 0.0, %v1060
      %1062 = vmatmul.f32.gmra.mxu0 %v782
      %v1063 = vpop.f32.mrf.mxu0
      %v1064 = vadd.f32 0.0, %v1063
      %1065 = vmatmul.f32.gmra.mxu0 %v785
      %v1066 = vpop.f32.mrf.mxu0
      %v1067 = vadd.f32 0.0, %v1066
      %1068 = vmatmul.f32.gmra.mxu0 %v788
      %v1069 = vpop.f32.mrf.mxu0
      %v1070 = vadd.f32 0.0, %v1069
      %1071 = vmatmul.f32.gmra.mxu0 %v791
      %v1072 = vpop.f32.mrf.mxu0
      %v1073 = vadd.f32 0.0, %v1072
      %1074 = vmatmul.f32.gmra.mxu0 %v794
      %v1075 = vpop.f32.mrf.mxu0
      %v1076 = vadd.f32 0.0, %v1075
      %1077 = vmatmul.f32.gmra.mxu0 %v797
      %v1078 = vpop.f32.mrf.mxu0
      %v1079 = vadd.f32 0.0, %v1078
      %1080 = vmatmul.f32.gmra.mxu0 %v800
      %v1081 = vpop.f32.mrf.mxu0
      %v1082 = vadd.f32 0.0, %v1081
      %1083 = vmatmul.f32.gmra.mxu0 %v803
      %v1084 = vpop.f32.mrf.mxu0
      %v1085 = vadd.f32 0.0, %v1084
      %1086 = vmatmul.f32.gmra.mxu0 %v806
      %v1087 = vpop.f32.mrf.mxu0
      %v1088 = vadd.f32 0.0, %v1087
      %1089 = vmatmul.f32.gmra.mxu0 %v809
      %v1090 = vpop.f32.mrf.mxu0
      %v1091 = vadd.f32 0.0, %v1090
      %1092 = vmatmul.f32.gmra.mxu0 %v812
      %v1093 = vpop.f32.mrf.mxu0
      %v1094 = vadd.f32 0.0, %v1093
      %1095 = vmatmul.f32.gmra.mxu0 %v815
      %v1096 = vpop.f32.mrf.mxu0
      %v1097 = vadd.f32 0.0, %v1096
      %1098 = vmatmul.f32.gmra.mxu0 %v818
      %v1099 = vpop.f32.mrf.mxu0
      %v1100 = vadd.f32 0.0, %v1099
      %1101 = vmatmul.f32.gmra.mxu0 %v821
      %v1102 = vpop.f32.mrf.mxu0
      %v1103 = vadd.f32 0.0, %v1102
      %1104 = vmatmul.f32.gmra.mxu0 %v824
      %v1105 = vpop.f32.mrf.mxu0
      %v1106 = vadd.f32 0.0, %v1105
      %1107 = vmatmul.f32.gmra.mxu0 %v827
      %v1108 = vpop.f32.mrf.mxu0
      %v1109 = vadd.f32 0.0, %v1108
      %1110 = vmatmul.f32.gmra.mxu0 %v830
      %v1111 = vpop.f32.mrf.mxu0
      %v1112 = vadd.f32 0.0, %v1111
      %1113 = vmatmul.f32.gmra.mxu0 %v833
      %v1114 = vpop.f32.mrf.mxu0
      %v1115 = vadd.f32 0.0, %v1114
      %1116 = vmatmul.f32.gmra.mxu0 %v836
      %v1117 = vpop.f32.mrf.mxu0
      %v1118 = vadd.f32 0.0, %v1117
      %1119 = vmatmul.f32.gmra.mxu0 %v839
      %v1120 = vpop.f32.mrf.mxu0
      %v1121 = vadd.f32 0.0, %v1120
      %1122 = vmatmul.f32.gmra.mxu0 %v842
      %v1123 = vpop.f32.mrf.mxu0
      %v1124 = vadd.f32 0.0, %v1123
      %1125 = vmatmul.f32.gmra.mxu0 %v845
      %v1126 = vpop.f32.mrf.mxu0
      %v1127 = vadd.f32 0.0, %v1126
      %1128 = vmatmul.f32.gmra.mxu0 %v848
      %v1129 = vpop.f32.mrf.mxu0
      %v1130 = vadd.f32 0.0, %v1129
      %1131 = vmatmul.f32.gmra.mxu0 %v851
      %v1132 = vpop.f32.mrf.mxu0
      %v1133 = vadd.f32 0.0, %v1132
      %1134 = vmatmul.f32.gmra.mxu0 %v854
      %v1135 = vpop.f32.mrf.mxu0
      %v1136 = vadd.f32 0.0, %v1135
      %1137 = vdwg.mxu0
      %v1139 = vsel %vm470, %v609, 0
      %v1142 = vsel %vm470, %v612, 0
      %v1145 = vsel %vm470, %v615, 0
      %v1148 = vsel %vm470, %v618, 0
      %v1151 = vsel %vm470, %v621, 0
      %v1154 = vsel %vm470, %v874, 0
      %v1157 = vsel %vm470, %v877, 0
      %v1160 = vsel %vm470, %v880, 0
      %v1163 = vsel %vm470, %v883, 0
      %v1166 = vsel %vm470, %v886, 0
      %1168 = vmatpush.xpose.msra.mxu0 0.0
      %1169 = vmatpush.xpose.msra.mxu0 0.0
      %1170 = vmatpush.xpose.msra.mxu0 0.0
      %1171 = vmatpush.xpose.msra.mxu0 0.0
      %1172 = vmatpush.xpose.msra.mxu0 0.0
      %1173 = vmatpush.xpose.msra.mxu0 0.0
      %1174 = vmatpush.xpose.msra.mxu0 0.0
      %1175 = vmatpush.xpose.msra.mxu0 0.0
      %1176 = vmatpush.xpose.msra.mxu0 0.0
      %1177 = vmatpush.xpose.msra.mxu0 0.0
      %1178 = vmatpush.xpose.msra.mxu0 0.0
      %1179 = vmatpush.xpose.msra.mxu0 %v1166
      %1180 = vmatpush.xpose.msra.mxu0 %v1163
      %1181 = vmatpush.xpose.msra.mxu0 %v1160
      %1182 = vmatpush.xpose.msra.mxu0 %v1157
      %1183 = vmatpush.xpose.msra.mxu0 %v1154
      %1184 = vmatmul.f32.gmra.mxu0 %v1139
      %v1185 = vpop.f32.mrf.mxu0
      %v1186 = vadd.f32 0.0, %v1185
      %1187 = vmatmul.f32.gmra.mxu0 %v1142
      %v1188 = vpop.f32.mrf.mxu0
      %v1189 = vadd.f32 0.0, %v1188
      %1190 = vmatmul.f32.gmra.mxu0 %v1145
      %v1191 = vpop.f32.mrf.mxu0
      %v1192 = vadd.f32 0.0, %v1191
      %1193 = vmatmul.f32.gmra.mxu0 %v1148
      %v1194 = vpop.f32.mrf.mxu0
      %v1195 = vadd.f32 0.0, %v1194
      %1196 = vmatmul.f32.gmra.mxu0 %v1151
      %v1197 = vpop.f32.mrf.mxu0
      %v1198 = vadd.f32 0.0, %v1197
      %1199 = vdwg.mxu0
      %v1201 = vsel %vm470, %v624, 0
      %v1204 = vsel %vm470, %v627, 0
      %v1207 = vsel %vm470, %v630, 0
      %v1210 = vsel %vm470, %v633, 0
      %v1213 = vsel %vm470, %v636, 0
      %v1216 = vsel %vm470, %v889, 0
      %v1219 = vsel %vm470, %v892, 0
      %v1222 = vsel %vm470, %v895, 0
      %v1225 = vsel %vm470, %v898, 0
      %v1228 = vsel %vm470, %v901, 0
      %1230 = vmatpush.xpose.msra.mxu0 0.0
      %1231 = vmatpush.xpose.msra.mxu0 0.0
      %1232 = vmatpush.xpose.msra.mxu0 0.0
      %1233 = vmatpush.xpose.msra.mxu0 0.0
      %1234 = vmatpush.xpose.msra.mxu0 0.0
      %1235 = vmatpush.xpose.msra.mxu0 0.0
      %1236 = vmatpush.xpose.msra.mxu0 0.0
      %1237 = vmatpush.xpose.msra.mxu0 0.0
      %1238 = vmatpush.xpose.msra.mxu0 0.0
      %1239 = vmatpush.xpose.msra.mxu0 0.0
      %1240 = vmatpush.xpose.msra.mxu0 0.0
      %1241 = vmatpush.xpose.msra.mxu0 %v1228
      %1242 = vmatpush.xpose.msra.mxu0 %v1225
      %1243 = vmatpush.xpose.msra.mxu0 %v1222
      %1244 = vmatpush.xpose.msra.mxu0 %v1219
      %1245 = vmatpush.xpose.msra.mxu0 %v1216
      %1246 = vmatmul.f32.gmra.mxu0 %v1201
      %v1247 = vpop.f32.mrf.mxu0
      %v1248 = vadd.f32 0.0, %v1247
      %1249 = vmatmul.f32.gmra.mxu0 %v1204
      %v1250 = vpop.f32.mrf.mxu0
      %v1251 = vadd.f32 0.0, %v1250
      %1252 = vmatmul.f32.gmra.mxu0 %v1207
      %v1253 = vpop.f32.mrf.mxu0
      %v1254 = vadd.f32 0.0, %v1253
      %1255 = vmatmul.f32.gmra.mxu0 %v1210
      %v1256 = vpop.f32.mrf.mxu0
      %v1257 = vadd.f32 0.0, %v1256
      %1258 = vmatmul.f32.gmra.mxu0 %v1213
      %v1259 = vpop.f32.mrf.mxu0
      %v1260 = vadd.f32 0.0, %v1259
      %1261 = vdwg.mxu0
      %v1263 = vsel %vm470, %v639, 0
      %v1266 = vsel %vm470, %v642, 0
      %v1269 = vsel %vm470, %v645, 0
      %v1272 = vsel %vm470, %v648, 0
      %v1275 = vsel %vm470, %v651, 0
      %v1278 = vsel %vm470, %v904, 0
      %v1281 = vsel %vm470, %v907, 0
      %v1284 = vsel %vm470, %v910, 0
      %v1287 = vsel %vm470, %v913, 0
      %v1290 = vsel %vm470, %v916, 0
      %1292 = vmatpush.xpose.msra.mxu0 0.0
      %1293 = vmatpush.xpose.msra.mxu0 0.0
      %1294 = vmatpush.xpose.msra.mxu0 0.0
      %1295 = vmatpush.xpose.msra.mxu0 0.0
      %1296 = vmatpush.xpose.msra.mxu0 0.0
      %1297 = vmatpush.xpose.msra.mxu0 0.0
      %1298 = vmatpush.xpose.msra.mxu0 0.0
      %1299 = vmatpush.xpose.msra.mxu0 0.0
      %1300 = vmatpush.xpose.msra.mxu0 0.0
      %1301 = vmatpush.xpose.msra.mxu0 0.0
      %1302 = vmatpush.xpose.msra.mxu0 0.0
      %1303 = vmatpush.xpose.msra.mxu0 %v1290
      %1304 = vmatpush.xpose.msra.mxu0 %v1287
      %1305 = vmatpush.xpose.msra.mxu0 %v1284
      %1306 = vmatpush.xpose.msra.mxu0 %v1281
      %1307 = vmatpush.xpose.msra.mxu0 %v1278
      %1308 = vmatmul.f32.gmra.mxu0 %v1263
      %v1309 = vpop.f32.mrf.mxu0
      %v1310 = vadd.f32 0.0, %v1309
      %1311 = vmatmul.f32.gmra.mxu0 %v1266
      %v1312 = vpop.f32.mrf.mxu0
      %v1313 = vadd.f32 0.0, %v1312
      %1314 = vmatmul.f32.gmra.mxu0 %v1269
      %v1315 = vpop.f32.mrf.mxu0
      %v1316 = vadd.f32 0.0, %v1315
      %1317 = vmatmul.f32.gmra.mxu0 %v1272
      %v1318 = vpop.f32.mrf.mxu0
      %v1319 = vadd.f32 0.0, %v1318
      %1320 = vmatmul.f32.gmra.mxu0 %v1275
      %v1321 = vpop.f32.mrf.mxu0
      %v1322 = vadd.f32 0.0, %v1321
      %1323 = vdwg.mxu0
      %v1325 = vsel %vm470, %v654, 0
      %v1328 = vsel %vm470, %v657, 0
      %v1331 = vsel %vm470, %v660, 0
      %v1334 = vsel %vm470, %v663, 0
      %v1337 = vsel %vm470, %v666, 0
      %v1340 = vsel %vm470, %v919, 0
      %v1343 = vsel %vm470, %v922, 0
      %v1346 = vsel %vm470, %v925, 0
      %v1349 = vsel %vm470, %v928, 0
      %v1352 = vsel %vm470, %v931, 0
      %1354 = vmatpush.xpose.msra.mxu0 0.0
      %1355 = vmatpush.xpose.msra.mxu0 0.0
      %1356 = vmatpush.xpose.msra.mxu0 0.0
      %1357 = vmatpush.xpose.msra.mxu0 0.0
      %1358 = vmatpush.xpose.msra.mxu0 0.0
      %1359 = vmatpush.xpose.msra.mxu0 0.0
      %1360 = vmatpush.xpose.msra.mxu0 0.0
      %1361 = vmatpush.xpose.msra.mxu0 0.0
      %1362 = vmatpush.xpose.msra.mxu0 0.0
      %1363 = vmatpush.xpose.msra.mxu0 0.0
      %1364 = vmatpush.xpose.msra.mxu0 0.0
      %1365 = vmatpush.xpose.msra.mxu0 %v1352
      %1366 = vmatpush.xpose.msra.mxu0 %v1349
      %1367 = vmatpush.xpose.msra.mxu0 %v1346
      %1368 = vmatpush.xpose.msra.mxu0 %v1343
      %1369 = vmatpush.xpose.msra.mxu0 %v1340
      %1370 = vmatmul.f32.gmra.mxu0 %v1325
      %v1371 = vpop.f32.mrf.mxu0
      %v1372 = vadd.f32 0.0, %v1371
      %1373 = vmatmul.f32.gmra.mxu0 %v1328
      %v1374 = vpop.f32.mrf.mxu0
      %v1375 = vadd.f32 0.0, %v1374
      %1376 = vmatmul.f32.gmra.mxu0 %v1331
      %v1377 = vpop.f32.mrf.mxu0
      %v1378 = vadd.f32 0.0, %v1377
      %1379 = vmatmul.f32.gmra.mxu0 %v1334
      %v1380 = vpop.f32.mrf.mxu0
      %v1381 = vadd.f32 0.0, %v1380
      %1382 = vmatmul.f32.gmra.mxu0 %v1337
      %v1383 = vpop.f32.mrf.mxu0
      %v1384 = vadd.f32 0.0, %v1383
      %1385 = vdwg.mxu0
      %v1387 = vsel %vm470, %v669, 0
      %v1390 = vsel %vm470, %v672, 0
      %v1393 = vsel %vm470, %v675, 0
      %v1396 = vsel %vm470, %v678, 0
      %v1399 = vsel %vm470, %v681, 0
      %v1402 = vsel %vm470, %v934, 0
      %v1405 = vsel %vm470, %v937, 0
      %v1408 = vsel %vm470, %v940, 0
      %v1411 = vsel %vm470, %v943, 0
      %v1414 = vsel %vm470, %v946, 0
      %1416 = vmatpush.xpose.msra.mxu0 0.0
      %1417 = vmatpush.xpose.msra.mxu0 0.0
      %1418 = vmatpush.xpose.msra.mxu0 0.0
      %1419 = vmatpush.xpose.msra.mxu0 0.0
      %1420 = vmatpush.xpose.msra.mxu0 0.0
      %1421 = vmatpush.xpose.msra.mxu0 0.0
      %1422 = vmatpush.xpose.msra.mxu0 0.0
      %1423 = vmatpush.xpose.msra.mxu0 0.0
      %1424 = vmatpush.xpose.msra.mxu0 0.0
      %1425 = vmatpush.xpose.msra.mxu0 0.0
      %1426 = vmatpush.xpose.msra.mxu0 0.0
      %1427 = vmatpush.xpose.msra.mxu0 %v1414
      %1428 = vmatpush.xpose.msra.mxu0 %v1411
      %1429 = vmatpush.xpose.msra.mxu0 %v1408
      %1430 = vmatpush.xpose.msra.mxu0 %v1405
      %1431 = vmatpush.xpose.msra.mxu0 %v1402
      %1432 = vmatmul.f32.gmra.mxu0 %v1387
      %v1433 = vpop.f32.mrf.mxu0
      %v1434 = vadd.f32 0.0, %v1433
      %1435 = vmatmul.f32.gmra.mxu0 %v1390
      %v1436 = vpop.f32.mrf.mxu0
      %v1437 = vadd.f32 0.0, %v1436
      %1438 = vmatmul.f32.gmra.mxu0 %v1393
      %v1439 = vpop.f32.mrf.mxu0
      %v1440 = vadd.f32 0.0, %v1439
      %1441 = vmatmul.f32.gmra.mxu0 %v1396
      %v1442 = vpop.f32.mrf.mxu0
      %v1443 = vadd.f32 0.0, %v1442
      %1444 = vmatmul.f32.gmra.mxu0 %v1399
      %v1445 = vpop.f32.mrf.mxu0
      %v1446 = vadd.f32 0.0, %v1445
      %1447 = vdwg.mxu0
      %v1449 = vsel %vm470, %v684, 0
      %v1452 = vsel %vm470, %v687, 0
      %v1455 = vsel %vm470, %v690, 0
      %v1458 = vsel %vm470, %v693, 0
      %v1461 = vsel %vm470, %v696, 0
      %v1464 = vsel %vm470, %v949, 0
      %v1467 = vsel %vm470, %v952, 0
      %v1470 = vsel %vm470, %v955, 0
      %v1473 = vsel %vm470, %v958, 0
      %v1476 = vsel %vm470, %v961, 0
      %1478 = vmatpush.xpose.msra.mxu0 0.0
      %1479 = vmatpush.xpose.msra.mxu0 0.0
      %1480 = vmatpush.xpose.msra.mxu0 0.0
      %1481 = vmatpush.xpose.msra.mxu0 0.0
      %1482 = vmatpush.xpose.msra.mxu0 0.0
      %1483 = vmatpush.xpose.msra.mxu0 0.0
      %1484 = vmatpush.xpose.msra.mxu0 0.0
      %1485 = vmatpush.xpose.msra.mxu0 0.0
      %1486 = vmatpush.xpose.msra.mxu0 0.0
      %1487 = vmatpush.xpose.msra.mxu0 0.0
      %1488 = vmatpush.xpose.msra.mxu0 0.0
      %1489 = vmatpush.xpose.msra.mxu0 %v1476
      %1490 = vmatpush.xpose.msra.mxu0 %v1473
      %1491 = vmatpush.xpose.msra.mxu0 %v1470
      %1492 = vmatpush.xpose.msra.mxu0 %v1467
      %1493 = vmatpush.xpose.msra.mxu0 %v1464
      %1494 = vmatmul.f32.gmra.mxu0 %v1449
      %v1495 = vpop.f32.mrf.mxu0
      %v1496 = vadd.f32 0.0, %v1495
      %1497 = vmatmul.f32.gmra.mxu0 %v1452
      %v1498 = vpop.f32.mrf.mxu0
      %v1499 = vadd.f32 0.0, %v1498
      %1500 = vmatmul.f32.gmra.mxu0 %v1455
      %v1501 = vpop.f32.mrf.mxu0
      %v1502 = vadd.f32 0.0, %v1501
      %1503 = vmatmul.f32.gmra.mxu0 %v1458
      %v1504 = vpop.f32.mrf.mxu0
      %v1505 = vadd.f32 0.0, %v1504
      %1506 = vmatmul.f32.gmra.mxu0 %v1461
      %v1507 = vpop.f32.mrf.mxu0
      %v1508 = vadd.f32 0.0, %v1507
      %1509 = vdwg.mxu0
      %v1511 = vsel %vm470, %v699, 0
      %v1514 = vsel %vm470, %v702, 0
      %v1517 = vsel %vm470, %v705, 0
      %v1520 = vsel %vm470, %v708, 0
      %v1523 = vsel %vm470, %v711, 0
      %v1526 = vsel %vm470, %v964, 0
      %v1529 = vsel %vm470, %v967, 0
      %v1532 = vsel %vm470, %v970, 0
      %v1535 = vsel %vm470, %v973, 0
      %v1538 = vsel %vm470, %v976, 0
      %1540 = vmatpush.xpose.msra.mxu0 0.0
      %1541 = vmatpush.xpose.msra.mxu0 0.0
      %1542 = vmatpush.xpose.msra.mxu0 0.0
      %1543 = vmatpush.xpose.msra.mxu0 0.0
      %1544 = vmatpush.xpose.msra.mxu0 0.0
      %1545 = vmatpush.xpose.msra.mxu0 0.0
      %1546 = vmatpush.xpose.msra.mxu0 0.0
      %1547 = vmatpush.xpose.msra.mxu0 0.0
      %1548 = vmatpush.xpose.msra.mxu0 0.0
      %1549 = vmatpush.xpose.msra.mxu0 0.0
      %1550 = vmatpush.xpose.msra.mxu0 0.0
      %1551 = vmatpush.xpose.msra.mxu0 %v1538
      %1552 = vmatpush.xpose.msra.mxu0 %v1535
      %1553 = vmatpush.xpose.msra.mxu0 %v1532
      %1554 = vmatpush.xpose.msra.mxu0 %v1529
      %1555 = vmatpush.xpose.msra.mxu0 %v1526
      %1556 = vmatmul.f32.gmra.mxu0 %v1511
      %v1557 = vpop.f32.mrf.mxu0
      %v1558 = vadd.f32 0.0, %v1557
      %1559 = vmatmul.f32.gmra.mxu0 %v1514
      %v1560 = vpop.f32.mrf.mxu0
      %v1561 = vadd.f32 0.0, %v1560
      %1562 = vmatmul.f32.gmra.mxu0 %v1517
      %v1563 = vpop.f32.mrf.mxu0
      %v1564 = vadd.f32 0.0, %v1563
      %1565 = vmatmul.f32.gmra.mxu0 %v1520
      %v1566 = vpop.f32.mrf.mxu0
      %v1567 = vadd.f32 0.0, %v1566
      %1568 = vmatmul.f32.gmra.mxu0 %v1523
      %v1569 = vpop.f32.mrf.mxu0
      %v1570 = vadd.f32 0.0, %v1569
      %1571 = vdwg.mxu0
      %v1573 = vsel %vm470, %v714, 0
      %v1576 = vsel %vm470, %v717, 0
      %v1579 = vsel %vm470, %v720, 0
      %v1582 = vsel %vm470, %v723, 0
      %v1585 = vsel %vm470, %v726, 0
      %v1588 = vsel %vm470, %v979, 0
      %v1591 = vsel %vm470, %v982, 0
      %v1594 = vsel %vm470, %v985, 0
      %v1597 = vsel %vm470, %v988, 0
      %v1600 = vsel %vm470, %v991, 0
      %1602 = vmatpush.xpose.msra.mxu0 0.0
      %1603 = vmatpush.xpose.msra.mxu0 0.0
      %1604 = vmatpush.xpose.msra.mxu0 0.0
      %1605 = vmatpush.xpose.msra.mxu0 0.0
      %1606 = vmatpush.xpose.msra.mxu0 0.0
      %1607 = vmatpush.xpose.msra.mxu0 0.0
      %1608 = vmatpush.xpose.msra.mxu0 0.0
      %1609 = vmatpush.xpose.msra.mxu0 0.0
      %1610 = vmatpush.xpose.msra.mxu0 0.0
      %1611 = vmatpush.xpose.msra.mxu0 0.0
      %1612 = vmatpush.xpose.msra.mxu0 0.0
      %1613 = vmatpush.xpose.msra.mxu0 %v1600
      %1614 = vmatpush.xpose.msra.mxu0 %v1597
      %1615 = vmatpush.xpose.msra.mxu0 %v1594
      %1616 = vmatpush.xpose.msra.mxu0 %v1591
      %1617 = vmatpush.xpose.msra.mxu0 %v1588
      %1618 = vmatmul.f32.gmra.mxu0 %v1573
      %v1619 = vpop.f32.mrf.mxu0
      %v1620 = vadd.f32 0.0, %v1619
      %1621 = vmatmul.f32.gmra.mxu0 %v1576
      %v1622 = vpop.f32.mrf.mxu0
      %v1623 = vadd.f32 0.0, %v1622
      %1624 = vmatmul.f32.gmra.mxu0 %v1579
      %v1625 = vpop.f32.mrf.mxu0
      %v1626 = vadd.f32 0.0, %v1625
      %1627 = vmatmul.f32.gmra.mxu0 %v1582
      %v1628 = vpop.f32.mrf.mxu0
      %v1629 = vadd.f32 0.0, %v1628
      %1630 = vmatmul.f32.gmra.mxu0 %v1585
      %v1631 = vpop.f32.mrf.mxu0
      %v1632 = vadd.f32 0.0, %v1631
      %1633 = vdwg.mxu0
      %v1634 = vmul.f32 %v1186, 0.125
      %v1635 = vmul.f32 %v1189, 0.125
      %v1636 = vmul.f32 %v1192, 0.125
      %v1637 = vmul.f32 %v1195, 0.125
      %v1638 = vmul.f32 %v1198, 0.125
      %v1639 = vmul.f32 %v1248, 0.125
      %v1640 = vmul.f32 %v1251, 0.125
      %v1641 = vmul.f32 %v1254, 0.125
      %v1642 = vmul.f32 %v1257, 0.125
      %v1643 = vmul.f32 %v1260, 0.125
      %v1644 = vmul.f32 %v1310, 0.125
      %v1645 = vmul.f32 %v1313, 0.125
      %v1646 = vmul.f32 %v1316, 0.125
      %v1647 = vmul.f32 %v1319, 0.125
      %v1648 = vmul.f32 %v1322, 0.125
      %v1649 = vmul.f32 %v1372, 0.125
      %v1650 = vmul.f32 %v1375, 0.125
      %v1651 = vmul.f32 %v1378, 0.125
      %v1652 = vmul.f32 %v1381, 0.125
      %v1653 = vmul.f32 %v1384, 0.125
      %v1654 = vmul.f32 %v1434, 0.125
      %v1655 = vmul.f32 %v1437, 0.125
      %v1656 = vmul.f32 %v1440, 0.125
      %v1657 = vmul.f32 %v1443, 0.125
      %v1658 = vmul.f32 %v1446, 0.125
      %v1659 = vmul.f32 %v1496, 0.125
      %v1660 = vmul.f32 %v1499, 0.125
      %v1661 = vmul.f32 %v1502, 0.125
      %v1662 = vmul.f32 %v1505, 0.125
      %v1663 = vmul.f32 %v1508, 0.125
      %v1664 = vmul.f32 %v1558, 0.125
      %v1665 = vmul.f32 %v1561, 0.125
      %v1666 = vmul.f32 %v1564, 0.125
      %v1667 = vmul.f32 %v1567, 0.125
      %v1668 = vmul.f32 %v1570, 0.125
      %v1669 = vmul.f32 %v1620, 0.125
      %v1670 = vmul.f32 %v1623, 0.125
      %v1671 = vmul.f32 %v1626, 0.125
      %v1672 = vmul.f32 %v1629, 0.125
      %v1673 = vmul.f32 %v1632, 0.125
      %v1674 = vlaneseq
      %v1675 = vand.u32 %v1674, 127
      %vm1676 = vcmp.lt.s32.totalorder %v1675, 34
      %v1677 = vsel %vm1676, 1, 0
      %vm1678 = vcmp.eq.s32.totalorder %v1677, 1
      %v1679 = vsel %vm1678, %v1634, -1e+09
      %v1680 = vsel %vm1678, %v1635, -1e+09
      %v1681 = vsel %vm1678, %v1636, -1e+09
      %v1682 = vsel %vm1678, %v1637, -1e+09
      %v1683 = vsel %vm1678, %v1638, -1e+09
      %v1684 = vsel %vm1678, %v1639, -1e+09
      %v1685 = vsel %vm1678, %v1640, -1e+09
      %v1686 = vsel %vm1678, %v1641, -1e+09
      %v1687 = vsel %vm1678, %v1642, -1e+09
      %v1688 = vsel %vm1678, %v1643, -1e+09
      %v1689 = vsel %vm1678, %v1644, -1e+09
      %v1690 = vsel %vm1678, %v1645, -1e+09
      %v1691 = vsel %vm1678, %v1646, -1e+09
      %v1692 = vsel %vm1678, %v1647, -1e+09
      %v1693 = vsel %vm1678, %v1648, -1e+09
      %v1694 = vsel %vm1678, %v1649, -1e+09
      %v1695 = vsel %vm1678, %v1650, -1e+09
      %v1696 = vsel %vm1678, %v1651, -1e+09
      %v1697 = vsel %vm1678, %v1652, -1e+09
      %v1698 = vsel %vm1678, %v1653, -1e+09
      %v1699 = vsel %vm1678, %v1654, -1e+09
      %v1700 = vsel %vm1678, %v1655, -1e+09
      %v1701 = vsel %vm1678, %v1656, -1e+09
      %v1702 = vsel %vm1678, %v1657, -1e+09
      %v1703 = vsel %vm1678, %v1658, -1e+09
      %v1704 = vsel %vm1678, %v1659, -1e+09
      %v1705 = vsel %vm1678, %v1660, -1e+09
      %v1706 = vsel %vm1678, %v1661, -1e+09
      %v1707 = vsel %vm1678, %v1662, -1e+09
      %v1708 = vsel %vm1678, %v1663, -1e+09
      %v1709 = vsel %vm1678, %v1664, -1e+09
      %v1710 = vsel %vm1678, %v1665, -1e+09
      %v1711 = vsel %vm1678, %v1666, -1e+09
      %v1712 = vsel %vm1678, %v1667, -1e+09
      %v1713 = vsel %vm1678, %v1668, -1e+09
      %v1714 = vsel %vm1678, %v1669, -1e+09
      %v1715 = vsel %vm1678, %v1670, -1e+09
      %v1716 = vsel %vm1678, %v1671, -1e+09
      %v1717 = vsel %vm1678, %v1672, -1e+09
      %v1718 = vsel %vm1678, %v1673, -1e+09
      %vm1719 = vcmask 326656
      %v1720 = vsel %vm1719, %v1679, -inf
      %1721 = vmax.xlane.f32.xlu0 %v1720
      %v1722 = vpop.xlane.xlu0 %1721
      %v1723 = vsel %vm1719, %v1680, -inf
      %1724 = vmax.xlane.f32.xlu0 %v1723
      %v1725 = vpop.xlane.xlu0 %1724
      %v1726 = vsel %vm1719, %v1681, -inf
      %1727 = vmax.xlane.f32.xlu0 %v1726
      %v1728 = vpop.xlane.xlu0 %1727
      %v1729 = vsel %vm1719, %v1682, -inf
      %1730 = vmax.xlane.f32.xlu0 %v1729
      %v1731 = vpop.xlane.xlu0 %1730
      %v1732 = vsel %vm1719, %v1683, -inf
      %1733 = vmax.xlane.f32.xlu0 %v1732
      %v1734 = vpop.xlane.xlu0 %1733
      %v1735 = vsel %vm1719, %v1684, -inf
      %1736 = vmax.xlane.f32.xlu0 %v1735
      %v1737 = vpop.xlane.xlu0 %1736
      %v1738 = vsel %vm1719, %v1685, -inf
      %1739 = vmax.xlane.f32.xlu0 %v1738
      %v1740 = vpop.xlane.xlu0 %1739
      %v1741 = vsel %vm1719, %v1686, -inf
      %1742 = vmax.xlane.f32.xlu0 %v1741
      %v1743 = vpop.xlane.xlu0 %1742
      %v1744 = vsel %vm1719, %v1687, -inf
      %1745 = vmax.xlane.f32.xlu0 %v1744
      %v1746 = vpop.xlane.xlu0 %1745
      %v1747 = vsel %vm1719, %v1688, -inf
      %1748 = vmax.xlane.f32.xlu0 %v1747
      %v1749 = vpop.xlane.xlu0 %1748
      %v1750 = vsel %vm1719, %v1689, -inf
      %1751 = vmax.xlane.f32.xlu0 %v1750
      %v1752 = vpop.xlane.xlu0 %1751
      %v1753 = vsel %vm1719, %v1690, -inf
      %1754 = vmax.xlane.f32.xlu0 %v1753
      %v1755 = vpop.xlane.xlu0 %1754
      %v1756 = vsel %vm1719, %v1691, -inf
      %1757 = vmax.xlane.f32.xlu0 %v1756
      %v1758 = vpop.xlane.xlu0 %1757
      %v1759 = vsel %vm1719, %v1692, -inf
      %1760 = vmax.xlane.f32.xlu0 %v1759
      %v1761 = vpop.xlane.xlu0 %1760
      %v1762 = vsel %vm1719, %v1693, -inf
      %1763 = vmax.xlane.f32.xlu0 %v1762
      %v1764 = vpop.xlane.xlu0 %1763
      %v1765 = vsel %vm1719, %v1694, -inf
      %1766 = vmax.xlane.f32.xlu0 %v1765
      %v1767 = vpop.xlane.xlu0 %1766
      %v1768 = vsel %vm1719, %v1695, -inf
      %1769 = vmax.xlane.f32.xlu0 %v1768
      %v1770 = vpop.xlane.xlu0 %1769
      %v1771 = vsel %vm1719, %v1696, -inf
      %1772 = vmax.xlane.f32.xlu0 %v1771
      %v1773 = vpop.xlane.xlu0 %1772
      %v1774 = vsel %vm1719, %v1697, -inf
      %1775 = vmax.xlane.f32.xlu0 %v1774
      %v1776 = vpop.xlane.xlu0 %1775
      %v1777 = vsel %vm1719, %v1698, -inf
      %1778 = vmax.xlane.f32.xlu0 %v1777
      %v1779 = vpop.xlane.xlu0 %1778
      %v1780 = vsel %vm1719, %v1699, -inf
      %1781 = vmax.xlane.f32.xlu0 %v1780
      %v1782 = vpop.xlane.xlu0 %1781
      %v1783 = vsel %vm1719, %v1700, -inf
      %1784 = vmax.xlane.f32.xlu0 %v1783
      %v1785 = vpop.xlane.xlu0 %1784
      %v1786 = vsel %vm1719, %v1701, -inf
      %1787 = vmax.xlane.f32.xlu0 %v1786
      %v1788 = vpop.xlane.xlu0 %1787
      %v1789 = vsel %vm1719, %v1702, -inf
      %1790 = vmax.xlane.f32.xlu0 %v1789
      %v1791 = vpop.xlane.xlu0 %1790
      %v1792 = vsel %vm1719, %v1703, -inf
      %1793 = vmax.xlane.f32.xlu0 %v1792
      %v1794 = vpop.xlane.xlu0 %1793
      %v1795 = vsel %vm1719, %v1704, -inf
      %1796 = vmax.xlane.f32.xlu0 %v1795
      %v1797 = vpop.xlane.xlu0 %1796
      %v1798 = vsel %vm1719, %v1705, -inf
      %1799 = vmax.xlane.f32.xlu0 %v1798
      %v1800 = vpop.xlane.xlu0 %1799
      %v1801 = vsel %vm1719, %v1706, -inf
      %1802 = vmax.xlane.f32.xlu0 %v1801
      %v1803 = vpop.xlane.xlu0 %1802
      %v1804 = vsel %vm1719, %v1707, -inf
      %1805 = vmax.xlane.f32.xlu0 %v1804
      %v1806 = vpop.xlane.xlu0 %1805
      %v1807 = vsel %vm1719, %v1708, -inf
      %1808 = vmax.xlane.f32.xlu0 %v1807
      %v1809 = vpop.xlane.xlu0 %1808
      %v1810 = vsel %vm1719, %v1709, -inf
      %1811 = vmax.xlane.f32.xlu0 %v1810
      %v1812 = vpop.xlane.xlu0 %1811
      %v1813 = vsel %vm1719, %v1710, -inf
      %1814 = vmax.xlane.f32.xlu0 %v1813
      %v1815 = vpop.xlane.xlu0 %1814
      %v1816 = vsel %vm1719, %v1711, -inf
      %1817 = vmax.xlane.f32.xlu0 %v1816
      %v1818 = vpop.xlane.xlu0 %1817
      %v1819 = vsel %vm1719, %v1712, -inf
      %1820 = vmax.xlane.f32.xlu0 %v1819
      %v1821 = vpop.xlane.xlu0 %1820
      %v1822 = vsel %vm1719, %v1713, -inf
      %1823 = vmax.xlane.f32.xlu0 %v1822
      %v1824 = vpop.xlane.xlu0 %1823
      %v1825 = vsel %vm1719, %v1714, -inf
      %1826 = vmax.xlane.f32.xlu0 %v1825
      %v1827 = vpop.xlane.xlu0 %1826
      %v1828 = vsel %vm1719, %v1715, -inf
      %1829 = vmax.xlane.f32.xlu0 %v1828
      %v1830 = vpop.xlane.xlu0 %1829
      %v1831 = vsel %vm1719, %v1716, -inf
      %1832 = vmax.xlane.f32.xlu0 %v1831
      %v1833 = vpop.xlane.xlu0 %1832
      %v1834 = vsel %vm1719, %v1717, -inf
      %1835 = vmax.xlane.f32.xlu0 %v1834
      %v1836 = vpop.xlane.xlu0 %1835
      %v1837 = vsel %vm1719, %v1718, -inf
      %1838 = vmax.xlane.f32.xlu0 %v1837
      %v1839 = vpop.xlane.xlu0 %1838
      %v1840 = vsub.f32 %v1679, %v1722
      %v1841 = vsub.f32 %v1680, %v1725
      %v1842 = vsub.f32 %v1681, %v1728
      %v1843 = vsub.f32 %v1682, %v1731
      %v1844 = vsub.f32 %v1683, %v1734
      %v1845 = vsub.f32 %v1684, %v1737
      %v1846 = vsub.f32 %v1685, %v1740
      %v1847 = vsub.f32 %v1686, %v1743
      %v1848 = vsub.f32 %v1687, %v1746
      %v1849 = vsub.f32 %v1688, %v1749
      %v1850 = vsub.f32 %v1689, %v1752
      %v1851 = vsub.f32 %v1690, %v1755
      %v1852 = vsub.f32 %v1691, %v1758
      %v1853 = vsub.f32 %v1692, %v1761
      %v1854 = vsub.f32 %v1693, %v1764
      %v1855 = vsub.f32 %v1694, %v1767
      %v1856 = vsub.f32 %v1695, %v1770
      %v1857 = vsub.f32 %v1696, %v1773
      %v1858 = vsub.f32 %v1697, %v1776
      %v1859 = vsub.f32 %v1698, %v1779
      %v1860 = vsub.f32 %v1699, %v1782
      %v1861 = vsub.f32 %v1700, %v1785
      %v1862 = vsub.f32 %v1701, %v1788
      %v1863 = vsub.f32 %v1702, %v1791
      %v1864 = vsub.f32 %v1703, %v1794
      %v1865 = vsub.f32 %v1704, %v1797
      %v1866 = vsub.f32 %v1705, %v1800
      %v1867 = vsub.f32 %v1706, %v1803
      %v1868 = vsub.f32 %v1707, %v1806
      %v1869 = vsub.f32 %v1708, %v1809
      %v1870 = vsub.f32 %v1709, %v1812
      %v1871 = vsub.f32 %v1710, %v1815
      %v1872 = vsub.f32 %v1711, %v1818
      %v1873 = vsub.f32 %v1712, %v1821
      %v1874 = vsub.f32 %v1713, %v1824
      %v1875 = vsub.f32 %v1714, %v1827
      %v1876 = vsub.f32 %v1715, %v1830
      %v1877 = vsub.f32 %v1716, %v1833
      %v1878 = vsub.f32 %v1717, %v1836
      %v1879 = vsub.f32 %v1718, %v1839
      %v1880 = vmul.f32 %v1840, 1.442695
      %v1881 = vpow.pop %v1880
      %v1882 = vmul.f32 %v1841, 1.442695
      %v1883 = vpow.pop %v1882
      %v1884 = vmul.f32 %v1842, 1.442695
      %v1885 = vpow.pop %v1884
      %v1886 = vmul.f32 %v1843, 1.442695
      %v1887 = vpow.pop %v1886
      %v1888 = vmul.f32 %v1844, 1.442695
      %v1889 = vpow.pop %v1888
      %v1890 = vmul.f32 %v1845, 1.442695
      %v1891 = vpow.pop %v1890
      %v1892 = vmul.f32 %v1846, 1.442695
      %v1893 = vpow.pop %v1892
      %v1894 = vmul.f32 %v1847, 1.442695
      %v1895 = vpow.pop %v1894
      %v1896 = vmul.f32 %v1848, 1.442695
      %v1897 = vpow.pop %v1896
      %v1898 = vmul.f32 %v1849, 1.442695
      %v1899 = vpow.pop %v1898
      %v1900 = vmul.f32 %v1850, 1.442695
      %v1901 = vpow.pop %v1900
      %v1902 = vmul.f32 %v1851, 1.442695
      %v1903 = vpow.pop %v1902
      %v1904 = vmul.f32 %v1852, 1.442695
      %v1905 = vpow.pop %v1904
      %v1906 = vmul.f32 %v1853, 1.442695
      %v1907 = vpow.pop %v1906
      %v1908 = vmul.f32 %v1854, 1.442695
      %v1909 = vpow.pop %v1908
      %v1910 = vmul.f32 %v1855, 1.442695
      %v1911 = vpow.pop %v1910
      %v1912 = vmul.f32 %v1856, 1.442695
      %v1913 = vpow.pop %v1912
      %v1914 = vmul.f32 %v1857, 1.442695
      %v1915 = vpow.pop %v1914
      %v1916 = vmul.f32 %v1858, 1.442695
      %v1917 = vpow.pop %v1916
      %v1918 = vmul.f32 %v1859, 1.442695
      %v1919 = vpow.pop %v1918
      %v1920 = vmul.f32 %v1860, 1.442695
      %v1921 = vpow.pop %v1920
      %v1922 = vmul.f32 %v1861, 1.442695
      %v1923 = vpow.pop %v1922
      %v1924 = vmul.f32 %v1862, 1.442695
      %v1925 = vpow.pop %v1924
      %v1926 = vmul.f32 %v1863, 1.442695
      %v1927 = vpow.pop %v1926
      %v1928 = vmul.f32 %v1864, 1.442695
      %v1929 = vpow.pop %v1928
      %v1930 = vmul.f32 %v1865, 1.442695
      %v1931 = vpow.pop %v1930
      %v1932 = vmul.f32 %v1866, 1.442695
      %v1933 = vpow.pop %v1932
      %v1934 = vmul.f32 %v1867, 1.442695
      %v1935 = vpow.pop %v1934
      %v1936 = vmul.f32 %v1868, 1.442695
      %v1937 = vpow.pop %v1936
      %v1938 = vmul.f32 %v1869, 1.442695
      %v1939 = vpow.pop %v1938
      %v1940 = vmul.f32 %v1870, 1.442695
      %v1941 = vpow.pop %v1940
      %v1942 = vmul.f32 %v1871, 1.442695
      %v1943 = vpow.pop %v1942
      %v1944 = vmul.f32 %v1872, 1.442695
      %v1945 = vpow.pop %v1944
      %v1946 = vmul.f32 %v1873, 1.442695
      %v1947 = vpow.pop %v1946
      %v1948 = vmul.f32 %v1874, 1.442695
      %v1949 = vpow.pop %v1948
      %v1950 = vmul.f32 %v1875, 1.442695
      %v1951 = vpow.pop %v1950
      %v1952 = vmul.f32 %v1876, 1.442695
      %v1953 = vpow.pop %v1952
      %v1954 = vmul.f32 %v1877, 1.442695
      %v1955 = vpow.pop %v1954
      %v1956 = vmul.f32 %v1878, 1.442695
      %v1957 = vpow.pop %v1956
      %v1958 = vmul.f32 %v1879, 1.442695
      %v1959 = vpow.pop %v1958
      %v1960 = vsel %vm1719, %v1881, 0.0
      %1961 = vadd.xlane.f32.xlu0 %v1960
      %v1962 = vpop.xlane.xlu0 %1961
      %v1963 = vsel %vm1719, %v1883, 0.0
      %1964 = vadd.xlane.f32.xlu0 %v1963
      %v1965 = vpop.xlane.xlu0 %1964
      %v1966 = vsel %vm1719, %v1885, 0.0
      %1967 = vadd.xlane.f32.xlu0 %v1966
      %v1968 = vpop.xlane.xlu0 %1967
      %v1969 = vsel %vm1719, %v1887, 0.0
      %1970 = vadd.xlane.f32.xlu0 %v1969
      %v1971 = vpop.xlane.xlu0 %1970
      %v1972 = vsel %vm1719, %v1889, 0.0
      %1973 = vadd.xlane.f32.xlu0 %v1972
      %v1974 = vpop.xlane.xlu0 %1973
      %v1975 = vsel %vm1719, %v1891, 0.0
      %1976 = vadd.xlane.f32.xlu0 %v1975
      %v1977 = vpop.xlane.xlu0 %1976
      %v1978 = vsel %vm1719, %v1893, 0.0
      %1979 = vadd.xlane.f32.xlu0 %v1978
      %v1980 = vpop.xlane.xlu0 %1979
      %v1981 = vsel %vm1719, %v1895, 0.0
      %1982 = vadd.xlane.f32.xlu0 %v1981
      %v1983 = vpop.xlane.xlu0 %1982
      %v1984 = vsel %vm1719, %v1897, 0.0
      %1985 = vadd.xlane.f32.xlu0 %v1984
      %v1986 = vpop.xlane.xlu0 %1985
      %v1987 = vsel %vm1719, %v1899, 0.0
      %1988 = vadd.xlane.f32.xlu0 %v1987
      %v1989 = vpop.xlane.xlu0 %1988
      %v1990 = vsel %vm1719, %v1901, 0.0
      %1991 = vadd.xlane.f32.xlu0 %v1990
      %v1992 = vpop.xlane.xlu0 %1991
      %v1993 = vsel %vm1719, %v1903, 0.0
      %1994 = vadd.xlane.f32.xlu0 %v1993
      %v1995 = vpop.xlane.xlu0 %1994
      %v1996 = vsel %vm1719, %v1905, 0.0
      %1997 = vadd.xlane.f32.xlu0 %v1996
      %v1998 = vpop.xlane.xlu0 %1997
      %v1999 = vsel %vm1719, %v1907, 0.0
      %2000 = vadd.xlane.f32.xlu0 %v1999
      %v2001 = vpop.xlane.xlu0 %2000
      %v2002 = vsel %vm1719, %v1909, 0.0
      %2003 = vadd.xlane.f32.xlu0 %v2002
      %v2004 = vpop.xlane.xlu0 %2003
      %v2005 = vsel %vm1719, %v1911, 0.0
      %2006 = vadd.xlane.f32.xlu0 %v2005
      %v2007 = vpop.xlane.xlu0 %2006
      %v2008 = vsel %vm1719, %v1913, 0.0
      %2009 = vadd.xlane.f32.xlu0 %v2008
      %v2010 = vpop.xlane.xlu0 %2009
      %v2011 = vsel %vm1719, %v1915, 0.0
      %2012 = vadd.xlane.f32.xlu0 %v2011
      %v2013 = vpop.xlane.xlu0 %2012
      %v2014 = vsel %vm1719, %v1917, 0.0
      %2015 = vadd.xlane.f32.xlu0 %v2014
      %v2016 = vpop.xlane.xlu0 %2015
      %v2017 = vsel %vm1719, %v1919, 0.0
      %2018 = vadd.xlane.f32.xlu0 %v2017
      %v2019 = vpop.xlane.xlu0 %2018
      %v2020 = vsel %vm1719, %v1921, 0.0
      %2021 = vadd.xlane.f32.xlu0 %v2020
      %v2022 = vpop.xlane.xlu0 %2021
      %v2023 = vsel %vm1719, %v1923, 0.0
      %2024 = vadd.xlane.f32.xlu0 %v2023
      %v2025 = vpop.xlane.xlu0 %2024
      %v2026 = vsel %vm1719, %v1925, 0.0
      %2027 = vadd.xlane.f32.xlu0 %v2026
      %v2028 = vpop.xlane.xlu0 %2027
      %v2029 = vsel %vm1719, %v1927, 0.0
      %2030 = vadd.xlane.f32.xlu0 %v2029
      %v2031 = vpop.xlane.xlu0 %2030
      %v2032 = vsel %vm1719, %v1929, 0.0
      %2033 = vadd.xlane.f32.xlu0 %v2032
      %v2034 = vpop.xlane.xlu0 %2033
      %v2035 = vsel %vm1719, %v1931, 0.0
      %2036 = vadd.xlane.f32.xlu0 %v2035
      %v2037 = vpop.xlane.xlu0 %2036
      %v2038 = vsel %vm1719, %v1933, 0.0
      %2039 = vadd.xlane.f32.xlu0 %v2038
      %v2040 = vpop.xlane.xlu0 %2039
      %v2041 = vsel %vm1719, %v1935, 0.0
      %2042 = vadd.xlane.f32.xlu0 %v2041
      %v2043 = vpop.xlane.xlu0 %2042
      %v2044 = vsel %vm1719, %v1937, 0.0
      %2045 = vadd.xlane.f32.xlu0 %v2044
      %v2046 = vpop.xlane.xlu0 %2045
      %v2047 = vsel %vm1719, %v1939, 0.0
      %2048 = vadd.xlane.f32.xlu0 %v2047
      %v2049 = vpop.xlane.xlu0 %2048
      %v2050 = vsel %vm1719, %v1941, 0.0
      %2051 = vadd.xlane.f32.xlu0 %v2050
      %v2052 = vpop.xlane.xlu0 %2051
      %v2053 = vsel %vm1719, %v1943, 0.0
      %2054 = vadd.xlane.f32.xlu0 %v2053
      %v2055 = vpop.xlane.xlu0 %2054
      %v2056 = vsel %vm1719, %v1945, 0.0
      %2057 = vadd.xlane.f32.xlu0 %v2056
      %v2058 = vpop.xlane.xlu0 %2057
      %v2059 = vsel %vm1719, %v1947, 0.0
      %2060 = vadd.xlane.f32.xlu0 %v2059
      %v2061 = vpop.xlane.xlu0 %2060
      %v2062 = vsel %vm1719, %v1949, 0.0
      %2063 = vadd.xlane.f32.xlu0 %v2062
      %v2064 = vpop.xlane.xlu0 %2063
      %v2065 = vsel %vm1719, %v1951, 0.0
      %2066 = vadd.xlane.f32.xlu0 %v2065
      %v2067 = vpop.xlane.xlu0 %2066
      %v2068 = vsel %vm1719, %v1953, 0.0
      %2069 = vadd.xlane.f32.xlu0 %v2068
      %v2070 = vpop.xlane.xlu0 %2069
      %v2071 = vsel %vm1719, %v1955, 0.0
      %2072 = vadd.xlane.f32.xlu0 %v2071
      %v2073 = vpop.xlane.xlu0 %2072
      %v2074 = vsel %vm1719, %v1957, 0.0
      %2075 = vadd.xlane.f32.xlu0 %v2074
      %v2076 = vpop.xlane.xlu0 %2075
      %v2077 = vsel %vm1719, %v1959, 0.0
      %2078 = vadd.xlane.f32.xlu0 %v2077
      %v2079 = vpop.xlane.xlu0 %2078
      %v2080 = vrcp.pop %v1962
      %v2081 = vrcp.pop %v1965
      %v2082 = vrcp.pop %v1968
      %v2083 = vrcp.pop %v1971
      %v2084 = vrcp.pop %v1974
      %v2085 = vrcp.pop %v1977
      %v2086 = vrcp.pop %v1980
      %v2087 = vrcp.pop %v1983
      %v2088 = vrcp.pop %v1986
      %v2089 = vrcp.pop %v1989
      %v2090 = vrcp.pop %v1992
      %v2091 = vrcp.pop %v1995
      %v2092 = vrcp.pop %v1998
      %v2093 = vrcp.pop %v2001
      %v2094 = vrcp.pop %v2004
      %v2095 = vrcp.pop %v2007
      %v2096 = vrcp.pop %v2010
      %v2097 = vrcp.pop %v2013
      %v2098 = vrcp.pop %v2016
      %v2099 = vrcp.pop %v2019
      %v2100 = vrcp.pop %v2022
      %v2101 = vrcp.pop %v2025
      %v2102 = vrcp.pop %v2028
      %v2103 = vrcp.pop %v2031
      %v2104 = vrcp.pop %v2034
      %v2105 = vrcp.pop %v2037
      %v2106 = vrcp.pop %v2040
      %v2107 = vrcp.pop %v2043
      %v2108 = vrcp.pop %v2046
      %v2109 = vrcp.pop %v2049
      %v2110 = vrcp.pop %v2052
      %v2111 = vrcp.pop %v2055
      %v2112 = vrcp.pop %v2058
      %v2113 = vrcp.pop %v2061
      %v2114 = vrcp.pop %v2064
      %v2115 = vrcp.pop %v2067
      %v2116 = vrcp.pop %v2070
      %v2117 = vrcp.pop %v2073
      %v2118 = vrcp.pop %v2076
      %v2119 = vrcp.pop %v2079
      %v2120 = vmul.f32 %v1962, %v2080
      %v2121 = vmul.f32 %v1965, %v2081
      %v2122 = vmul.f32 %v1968, %v2082
      %v2123 = vmul.f32 %v1971, %v2083
      %v2124 = vmul.f32 %v1974, %v2084
      %v2125 = vmul.f32 %v1977, %v2085
      %v2126 = vmul.f32 %v1980, %v2086
      %v2127 = vmul.f32 %v1983, %v2087
      %v2128 = vmul.f32 %v1986, %v2088
      %v2129 = vmul.f32 %v1989, %v2089
      %v2130 = vmul.f32 %v1992, %v2090
      %v2131 = vmul.f32 %v1995, %v2091
      %v2132 = vmul.f32 %v1998, %v2092
      %v2133 = vmul.f32 %v2001, %v2093
      %v2134 = vmul.f32 %v2004, %v2094
      %v2135 = vmul.f32 %v2007, %v2095
      %v2136 = vmul.f32 %v2010, %v2096
      %v2137 = vmul.f32 %v2013, %v2097
      %v2138 = vmul.f32 %v2016, %v2098
      %v2139 = vmul.f32 %v2019, %v2099
      %v2140 = vmul.f32 %v2022, %v2100
      %v2141 = vmul.f32 %v2025, %v2101
      %v2142 = vmul.f32 %v2028, %v2102
      %v2143 = vmul.f32 %v2031, %v2103
      %v2144 = vmul.f32 %v2034, %v2104
      %v2145 = vmul.f32 %v2037, %v2105
      %v2146 = vmul.f32 %v2040, %v2106
      %v2147 = vmul.f32 %v2043, %v2107
      %v2148 = vmul.f32 %v2046, %v2108
      %v2149 = vmul.f32 %v2049, %v2109
      %v2150 = vmul.f32 %v2052, %v2110
      %v2151 = vmul.f32 %v2055, %v2111
      %v2152 = vmul.f32 %v2058, %v2112
      %v2153 = vmul.f32 %v2061, %v2113
      %v2154 = vmul.f32 %v2064, %v2114
      %v2155 = vmul.f32 %v2067, %v2115
      %v2156 = vmul.f32 %v2070, %v2116
      %v2157 = vmul.f32 %v2073, %v2117
      %v2158 = vmul.f32 %v2076, %v2118
      %v2159 = vmul.f32 %v2079, %v2119
      %v2160 = vsub.f32 2.0, %v2120
      %v2161 = vsub.f32 2.0, %v2121
      %v2162 = vsub.f32 2.0, %v2122
      %v2163 = vsub.f32 2.0, %v2123
      %v2164 = vsub.f32 2.0, %v2124
      %v2165 = vsub.f32 2.0, %v2125
      %v2166 = vsub.f32 2.0, %v2126
      %v2167 = vsub.f32 2.0, %v2127
      %v2168 = vsub.f32 2.0, %v2128
      %v2169 = vsub.f32 2.0, %v2129
      %v2170 = vsub.f32 2.0, %v2130
      %v2171 = vsub.f32 2.0, %v2131
      %v2172 = vsub.f32 2.0, %v2132
      %v2173 = vsub.f32 2.0, %v2133
      %v2174 = vsub.f32 2.0, %v2134
      %v2175 = vsub.f32 2.0, %v2135
      %v2176 = vsub.f32 2.0, %v2136
      %v2177 = vsub.f32 2.0, %v2137
      %v2178 = vsub.f32 2.0, %v2138
      %v2179 = vsub.f32 2.0, %v2139
      %v2180 = vsub.f32 2.0, %v2140
      %v2181 = vsub.f32 2.0, %v2141
      %v2182 = vsub.f32 2.0, %v2142
      %v2183 = vsub.f32 2.0, %v2143
      %v2184 = vsub.f32 2.0, %v2144
      %v2185 = vsub.f32 2.0, %v2145
      %v2186 = vsub.f32 2.0, %v2146
      %v2187 = vsub.f32 2.0, %v2147
      %v2188 = vsub.f32 2.0, %v2148
      %v2189 = vsub.f32 2.0, %v2149
      %v2190 = vsub.f32 2.0, %v2150
      %v2191 = vsub.f32 2.0, %v2151
      %v2192 = vsub.f32 2.0, %v2152
      %v2193 = vsub.f32 2.0, %v2153
      %v2194 = vsub.f32 2.0, %v2154
      %v2195 = vsub.f32 2.0, %v2155
      %v2196 = vsub.f32 2.0, %v2156
      %v2197 = vsub.f32 2.0, %v2157
      %v2198 = vsub.f32 2.0, %v2158
      %v2199 = vsub.f32 2.0, %v2159
      %v2200 = vmul.f32 %v2080, %v2160
      %v2201 = vmul.f32 %v2081, %v2161
      %v2202 = vmul.f32 %v2082, %v2162
      %v2203 = vmul.f32 %v2083, %v2163
      %v2204 = vmul.f32 %v2084, %v2164
      %v2205 = vmul.f32 %v2085, %v2165
      %v2206 = vmul.f32 %v2086, %v2166
      %v2207 = vmul.f32 %v2087, %v2167
      %v2208 = vmul.f32 %v2088, %v2168
      %v2209 = vmul.f32 %v2089, %v2169
      %v2210 = vmul.f32 %v2090, %v2170
      %v2211 = vmul.f32 %v2091, %v2171
      %v2212 = vmul.f32 %v2092, %v2172
      %v2213 = vmul.f32 %v2093, %v2173
      %v2214 = vmul.f32 %v2094, %v2174
      %v2215 = vmul.f32 %v2095, %v2175
      %v2216 = vmul.f32 %v2096, %v2176
      %v2217 = vmul.f32 %v2097, %v2177
      %v2218 = vmul.f32 %v2098, %v2178
      %v2219 = vmul.f32 %v2099, %v2179
      %v2220 = vmul.f32 %v2100, %v2180
      %v2221 = vmul.f32 %v2101, %v2181
      %v2222 = vmul.f32 %v2102, %v2182
      %v2223 = vmul.f32 %v2103, %v2183
      %v2224 = vmul.f32 %v2104, %v2184
      %v2225 = vmul.f32 %v2105, %v2185
      %v2226 = vmul.f32 %v2106, %v2186
      %v2227 = vmul.f32 %v2107, %v2187
      %v2228 = vmul.f32 %v2108, %v2188
      %v2229 = vmul.f32 %v2109, %v2189
      %v2230 = vmul.f32 %v2110, %v2190
      %v2231 = vmul.f32 %v2111, %v2191
      %v2232 = vmul.f32 %v2112, %v2192
      %v2233 = vmul.f32 %v2113, %v2193
      %v2234 = vmul.f32 %v2114, %v2194
      %v2235 = vmul.f32 %v2115, %v2195
      %v2236 = vmul.f32 %v2116, %v2196
      %v2237 = vmul.f32 %v2117, %v2197
      %v2238 = vmul.f32 %v2118, %v2198
      %v2239 = vmul.f32 %v2119, %v2199
      %v2240 = vmul.f32 %v1881, %v2200
      %v2241 = vmul.f32 %v1883, %v2201
      %v2242 = vmul.f32 %v1885, %v2202
      %v2243 = vmul.f32 %v1887, %v2203
      %v2244 = vmul.f32 %v1889, %v2204
      %v2245 = vmul.f32 %v1891, %v2205
      %v2246 = vmul.f32 %v1893, %v2206
      %v2247 = vmul.f32 %v1895, %v2207
      %v2248 = vmul.f32 %v1897, %v2208
      %v2249 = vmul.f32 %v1899, %v2209
      %v2250 = vmul.f32 %v1901, %v2210
      %v2251 = vmul.f32 %v1903, %v2211
      %v2252 = vmul.f32 %v1905, %v2212
      %v2253 = vmul.f32 %v1907, %v2213
      %v2254 = vmul.f32 %v1909, %v2214
      %v2255 = vmul.f32 %v1911, %v2215
      %v2256 = vmul.f32 %v1913, %v2216
      %v2257 = vmul.f32 %v1915, %v2217
      %v2258 = vmul.f32 %v1917, %v2218
      %v2259 = vmul.f32 %v1919, %v2219
      %v2260 = vmul.f32 %v1921, %v2220
      %v2261 = vmul.f32 %v1923, %v2221
      %v2262 = vmul.f32 %v1925, %v2222
      %v2263 = vmul.f32 %v1927, %v2223
      %v2264 = vmul.f32 %v1929, %v2224
      %v2265 = vmul.f32 %v1931, %v2225
      %v2266 = vmul.f32 %v1933, %v2226
      %v2267 = vmul.f32 %v1935, %v2227
      %v2268 = vmul.f32 %v1937, %v2228
      %v2269 = vmul.f32 %v1939, %v2229
      %v2270 = vmul.f32 %v1941, %v2230
      %v2271 = vmul.f32 %v1943, %v2231
      %v2272 = vmul.f32 %v1945, %v2232
      %v2273 = vmul.f32 %v1947, %v2233
      %v2274 = vmul.f32 %v1949, %v2234
      %v2275 = vmul.f32 %v1951, %v2235
      %v2276 = vmul.f32 %v1953, %v2236
      %v2277 = vmul.f32 %v1955, %v2237
      %v2278 = vmul.f32 %v1957, %v2238
      %v2279 = vmul.f32 %v1959, %v2239
      %v2281 = vsel %vm1719, %v2240, 0
      %v2284 = vsel %vm1719, %v2241, 0
      %v2287 = vsel %vm1719, %v2242, 0
      %v2290 = vsel %vm1719, %v2243, 0
      %v2293 = vsel %vm1719, %v2244, 0
      %2295 = vmatpush.msra.mxu0 0.0
      %2296 = vmatpush.msra.mxu0 0.0
      %2297 = vmatpush.msra.mxu0 0.0
      %2298 = vmatpush.msra.mxu0 0.0
      %2299 = vmatpush.msra.mxu0 0.0
      %2300 = vmatpush.msra.mxu0 0.0
      %2301 = vmatpush.msra.mxu0 0.0
      %2302 = vmatpush.msra.mxu0 0.0
      %2303 = vmatpush.msra.mxu0 0.0
      %2304 = vmatpush.msra.mxu0 0.0
      %2305 = vmatpush.msra.mxu0 0.0
      %2306 = vmatpush.msra.mxu0 %v1031
      %2307 = vmatpush.msra.mxu0 %v1028
      %2308 = vmatpush.msra.mxu0 %v1025
      %2309 = vmatpush.msra.mxu0 %v1022
      %2310 = vmatpush.msra.mxu0 %v1019
      %2311 = vmatmul.f32.gmra.mxu0 %v2281
      %v2312 = vpop.f32.mrf.mxu0
      %v2313 = vadd.f32 0.0, %v2312
      %2314 = vmatmul.f32.gmra.mxu0 %v2284
      %v2315 = vpop.f32.mrf.mxu0
      %v2316 = vadd.f32 0.0, %v2315
      %2317 = vmatmul.f32.gmra.mxu0 %v2287
      %v2318 = vpop.f32.mrf.mxu0
      %v2319 = vadd.f32 0.0, %v2318
      %2320 = vmatmul.f32.gmra.mxu0 %v2290
      %v2321 = vpop.f32.mrf.mxu0
      %v2322 = vadd.f32 0.0, %v2321
      %2323 = vmatmul.f32.gmra.mxu0 %v2293
      %v2324 = vpop.f32.mrf.mxu0
      %v2325 = vadd.f32 0.0, %v2324
      %2326 = vdwg.mxu0
      %v2328 = vsel %vm1719, %v2245, 0
      %v2331 = vsel %vm1719, %v2246, 0
      %v2334 = vsel %vm1719, %v2247, 0
      %v2337 = vsel %vm1719, %v2248, 0
      %v2340 = vsel %vm1719, %v2249, 0
      %2342 = vmatpush.msra.mxu0 0.0
      %2343 = vmatpush.msra.mxu0 0.0
      %2344 = vmatpush.msra.mxu0 0.0
      %2345 = vmatpush.msra.mxu0 0.0
      %2346 = vmatpush.msra.mxu0 0.0
      %2347 = vmatpush.msra.mxu0 0.0
      %2348 = vmatpush.msra.mxu0 0.0
      %2349 = vmatpush.msra.mxu0 0.0
      %2350 = vmatpush.msra.mxu0 0.0
      %2351 = vmatpush.msra.mxu0 0.0
      %2352 = vmatpush.msra.mxu0 0.0
      %2353 = vmatpush.msra.mxu0 %v1046
      %2354 = vmatpush.msra.mxu0 %v1043
      %2355 = vmatpush.msra.mxu0 %v1040
      %2356 = vmatpush.msra.mxu0 %v1037
      %2357 = vmatpush.msra.mxu0 %v1034
      %2358 = vmatmul.f32.gmra.mxu0 %v2328
      %v2359 = vpop.f32.mrf.mxu0
      %v2360 = vadd.f32 0.0, %v2359
      %2361 = vmatmul.f32.gmra.mxu0 %v2331
      %v2362 = vpop.f32.mrf.mxu0
      %v2363 = vadd.f32 0.0, %v2362
      %2364 = vmatmul.f32.gmra.mxu0 %v2334
      %v2365 = vpop.f32.mrf.mxu0
      %v2366 = vadd.f32 0.0, %v2365
      %2367 = vmatmul.f32.gmra.mxu0 %v2337
      %v2368 = vpop.f32.mrf.mxu0
      %v2369 = vadd.f32 0.0, %v2368
      %2370 = vmatmul.f32.gmra.mxu0 %v2340
      %v2371 = vpop.f32.mrf.mxu0
      %v2372 = vadd.f32 0.0, %v2371
      %2373 = vdwg.mxu0
      %v2375 = vsel %vm1719, %v2250, 0
      %v2378 = vsel %vm1719, %v2251, 0
      %v2381 = vsel %vm1719, %v2252, 0
      %v2384 = vsel %vm1719, %v2253, 0
      %v2387 = vsel %vm1719, %v2254, 0
      %2389 = vmatpush.msra.mxu0 0.0
      %2390 = vmatpush.msra.mxu0 0.0
      %2391 = vmatpush.msra.mxu0 0.0
      %2392 = vmatpush.msra.mxu0 0.0
      %2393 = vmatpush.msra.mxu0 0.0
      %2394 = vmatpush.msra.mxu0 0.0
      %2395 = vmatpush.msra.mxu0 0.0
      %2396 = vmatpush.msra.mxu0 0.0
      %2397 = vmatpush.msra.mxu0 0.0
      %2398 = vmatpush.msra.mxu0 0.0
      %2399 = vmatpush.msra.mxu0 0.0
      %2400 = vmatpush.msra.mxu0 %v1061
      %2401 = vmatpush.msra.mxu0 %v1058
      %2402 = vmatpush.msra.mxu0 %v1055
      %2403 = vmatpush.msra.mxu0 %v1052
      %2404 = vmatpush.msra.mxu0 %v1049
      %2405 = vmatmul.f32.gmra.mxu0 %v2375
      %v2406 = vpop.f32.mrf.mxu0
      %v2407 = vadd.f32 0.0, %v2406
      %2408 = vmatmul.f32.gmra.mxu0 %v2378
      %v2409 = vpop.f32.mrf.mxu0
      %v2410 = vadd.f32 0.0, %v2409
      %2411 = vmatmul.f32.gmra.mxu0 %v2381
      %v2412 = vpop.f32.mrf.mxu0
      %v2413 = vadd.f32 0.0, %v2412
      %2414 = vmatmul.f32.gmra.mxu0 %v2384
      %v2415 = vpop.f32.mrf.mxu0
      %v2416 = vadd.f32 0.0, %v2415
      %2417 = vmatmul.f32.gmra.mxu0 %v2387
      %v2418 = vpop.f32.mrf.mxu0
      %v2419 = vadd.f32 0.0, %v2418
      %2420 = vdwg.mxu0
      %v2422 = vsel %vm1719, %v2255, 0
      %v2425 = vsel %vm1719, %v2256, 0
      %v2428 = vsel %vm1719, %v2257, 0
      %v2431 = vsel %vm1719, %v2258, 0
      %v2434 = vsel %vm1719, %v2259, 0
      %2436 = vmatpush.msra.mxu0 0.0
      %2437 = vmatpush.msra.mxu0 0.0
      %2438 = vmatpush.msra.mxu0 0.0
      %2439 = vmatpush.msra.mxu0 0.0
      %2440 = vmatpush.msra.mxu0 0.0
      %2441 = vmatpush.msra.mxu0 0.0
      %2442 = vmatpush.msra.mxu0 0.0
      %2443 = vmatpush.msra.mxu0 0.0
      %2444 = vmatpush.msra.mxu0 0.0
      %2445 = vmatpush.msra.mxu0 0.0
      %2446 = vmatpush.msra.mxu0 0.0
      %2447 = vmatpush.msra.mxu0 %v1076
      %2448 = vmatpush.msra.mxu0 %v1073
      %2449 = vmatpush.msra.mxu0 %v1070
      %2450 = vmatpush.msra.mxu0 %v1067
      %2451 = vmatpush.msra.mxu0 %v1064
      %2452 = vmatmul.f32.gmra.mxu0 %v2422
      %v2453 = vpop.f32.mrf.mxu0
      %v2454 = vadd.f32 0.0, %v2453
      %2455 = vmatmul.f32.gmra.mxu0 %v2425
      %v2456 = vpop.f32.mrf.mxu0
      %v2457 = vadd.f32 0.0, %v2456
      %2458 = vmatmul.f32.gmra.mxu0 %v2428
      %v2459 = vpop.f32.mrf.mxu0
      %v2460 = vadd.f32 0.0, %v2459
      %2461 = vmatmul.f32.gmra.mxu0 %v2431
      %v2462 = vpop.f32.mrf.mxu0
      %v2463 = vadd.f32 0.0, %v2462
      %2464 = vmatmul.f32.gmra.mxu0 %v2434
      %v2465 = vpop.f32.mrf.mxu0
      %v2466 = vadd.f32 0.0, %v2465
      %2467 = vdwg.mxu0
      %v2469 = vsel %vm1719, %v2260, 0
      %v2472 = vsel %vm1719, %v2261, 0
      %v2475 = vsel %vm1719, %v2262, 0
      %v2478 = vsel %vm1719, %v2263, 0
      %v2481 = vsel %vm1719, %v2264, 0
      %2483 = vmatpush.msra.mxu0 0.0
      %2484 = vmatpush.msra.mxu0 0.0
      %2485 = vmatpush.msra.mxu0 0.0
      %2486 = vmatpush.msra.mxu0 0.0
      %2487 = vmatpush.msra.mxu0 0.0
      %2488 = vmatpush.msra.mxu0 0.0
      %2489 = vmatpush.msra.mxu0 0.0
      %2490 = vmatpush.msra.mxu0 0.0
      %2491 = vmatpush.msra.mxu0 0.0
      %2492 = vmatpush.msra.mxu0 0.0
      %2493 = vmatpush.msra.mxu0 0.0
      %2494 = vmatpush.msra.mxu0 %v1091
      %2495 = vmatpush.msra.mxu0 %v1088
      %2496 = vmatpush.msra.mxu0 %v1085
      %2497 = vmatpush.msra.mxu0 %v1082
      %2498 = vmatpush.msra.mxu0 %v1079
      %2499 = vmatmul.f32.gmra.mxu0 %v2469
      %v2500 = vpop.f32.mrf.mxu0
      %v2501 = vadd.f32 0.0, %v2500
      %2502 = vmatmul.f32.gmra.mxu0 %v2472
      %v2503 = vpop.f32.mrf.mxu0
      %v2504 = vadd.f32 0.0, %v2503
      %2505 = vmatmul.f32.gmra.mxu0 %v2475
      %v2506 = vpop.f32.mrf.mxu0
      %v2507 = vadd.f32 0.0, %v2506
      %2508 = vmatmul.f32.gmra.mxu0 %v2478
      %v2509 = vpop.f32.mrf.mxu0
      %v2510 = vadd.f32 0.0, %v2509
      %2511 = vmatmul.f32.gmra.mxu0 %v2481
      %v2512 = vpop.f32.mrf.mxu0
      %v2513 = vadd.f32 0.0, %v2512
      %2514 = vdwg.mxu0
      %v2516 = vsel %vm1719, %v2265, 0
      %v2519 = vsel %vm1719, %v2266, 0
      %v2522 = vsel %vm1719, %v2267, 0
      %v2525 = vsel %vm1719, %v2268, 0
      %v2528 = vsel %vm1719, %v2269, 0
      %2530 = vmatpush.msra.mxu0 0.0
      %2531 = vmatpush.msra.mxu0 0.0
      %2532 = vmatpush.msra.mxu0 0.0
      %2533 = vmatpush.msra.mxu0 0.0
      %2534 = vmatpush.msra.mxu0 0.0
      %2535 = vmatpush.msra.mxu0 0.0
      %2536 = vmatpush.msra.mxu0 0.0
      %2537 = vmatpush.msra.mxu0 0.0
      %2538 = vmatpush.msra.mxu0 0.0
      %2539 = vmatpush.msra.mxu0 0.0
      %2540 = vmatpush.msra.mxu0 0.0
      %2541 = vmatpush.msra.mxu0 %v1106
      %2542 = vmatpush.msra.mxu0 %v1103
      %2543 = vmatpush.msra.mxu0 %v1100
      %2544 = vmatpush.msra.mxu0 %v1097
      %2545 = vmatpush.msra.mxu0 %v1094
      %2546 = vmatmul.f32.gmra.mxu0 %v2516
      %v2547 = vpop.f32.mrf.mxu0
      %v2548 = vadd.f32 0.0, %v2547
      %2549 = vmatmul.f32.gmra.mxu0 %v2519
      %v2550 = vpop.f32.mrf.mxu0
      %v2551 = vadd.f32 0.0, %v2550
      %2552 = vmatmul.f32.gmra.mxu0 %v2522
      %v2553 = vpop.f32.mrf.mxu0
      %v2554 = vadd.f32 0.0, %v2553
      %2555 = vmatmul.f32.gmra.mxu0 %v2525
      %v2556 = vpop.f32.mrf.mxu0
      %v2557 = vadd.f32 0.0, %v2556
      %2558 = vmatmul.f32.gmra.mxu0 %v2528
      %v2559 = vpop.f32.mrf.mxu0
      %v2560 = vadd.f32 0.0, %v2559
      %2561 = vdwg.mxu0
      %v2563 = vsel %vm1719, %v2270, 0
      %v2566 = vsel %vm1719, %v2271, 0
      %v2569 = vsel %vm1719, %v2272, 0
      %v2572 = vsel %vm1719, %v2273, 0
      %v2575 = vsel %vm1719, %v2274, 0
      %2577 = vmatpush.msra.mxu0 0.0
      %2578 = vmatpush.msra.mxu0 0.0
      %2579 = vmatpush.msra.mxu0 0.0
      %2580 = vmatpush.msra.mxu0 0.0
      %2581 = vmatpush.msra.mxu0 0.0
      %2582 = vmatpush.msra.mxu0 0.0
      %2583 = vmatpush.msra.mxu0 0.0
      %2584 = vmatpush.msra.mxu0 0.0
      %2585 = vmatpush.msra.mxu0 0.0
      %2586 = vmatpush.msra.mxu0 0.0
      %2587 = vmatpush.msra.mxu0 0.0
      %2588 = vmatpush.msra.mxu0 %v1121
      %2589 = vmatpush.msra.mxu0 %v1118
      %2590 = vmatpush.msra.mxu0 %v1115
      %2591 = vmatpush.msra.mxu0 %v1112
      %2592 = vmatpush.msra.mxu0 %v1109
      %2593 = vmatmul.f32.gmra.mxu0 %v2563
      %v2594 = vpop.f32.mrf.mxu0
      %v2595 = vadd.f32 0.0, %v2594
      %2596 = vmatmul.f32.gmra.mxu0 %v2566
      %v2597 = vpop.f32.mrf.mxu0
      %v2598 = vadd.f32 0.0, %v2597
      %2599 = vmatmul.f32.gmra.mxu0 %v2569
      %v2600 = vpop.f32.mrf.mxu0
      %v2601 = vadd.f32 0.0, %v2600
      %2602 = vmatmul.f32.gmra.mxu0 %v2572
      %v2603 = vpop.f32.mrf.mxu0
      %v2604 = vadd.f32 0.0, %v2603
      %2605 = vmatmul.f32.gmra.mxu0 %v2575
      %v2606 = vpop.f32.mrf.mxu0
      %v2607 = vadd.f32 0.0, %v2606
      %2608 = vdwg.mxu0
      %v2610 = vsel %vm1719, %v2275, 0
      %v2613 = vsel %vm1719, %v2276, 0
      %v2616 = vsel %vm1719, %v2277, 0
      %v2619 = vsel %vm1719, %v2278, 0
      %v2622 = vsel %vm1719, %v2279, 0
      %2624 = vmatpush.msra.mxu0 0.0
      %2625 = vmatpush.msra.mxu0 0.0
      %2626 = vmatpush.msra.mxu0 0.0
      %2627 = vmatpush.msra.mxu0 0.0
      %2628 = vmatpush.msra.mxu0 0.0
      %2629 = vmatpush.msra.mxu0 0.0
      %2630 = vmatpush.msra.mxu0 0.0
      %2631 = vmatpush.msra.mxu0 0.0
      %2632 = vmatpush.msra.mxu0 0.0
      %2633 = vmatpush.msra.mxu0 0.0
      %2634 = vmatpush.msra.mxu0 0.0
      %2635 = vmatpush.msra.mxu0 %v1136
      %2636 = vmatpush.msra.mxu0 %v1133
      %2637 = vmatpush.msra.mxu0 %v1130
      %2638 = vmatpush.msra.mxu0 %v1127
      %2639 = vmatpush.msra.mxu0 %v1124
      %2640 = vmatmul.f32.gmra.mxu0 %v2610
      %v2641 = vpop.f32.mrf.mxu0
      %v2642 = vadd.f32 0.0, %v2641
      %2643 = vmatmul.f32.gmra.mxu0 %v2613
      %v2644 = vpop.f32.mrf.mxu0
      %v2645 = vadd.f32 0.0, %v2644
      %2646 = vmatmul.f32.gmra.mxu0 %v2616
      %v2647 = vpop.f32.mrf.mxu0
      %v2648 = vadd.f32 0.0, %v2647
      %2649 = vmatmul.f32.gmra.mxu0 %v2619
      %v2650 = vpop.f32.mrf.mxu0
      %v2651 = vadd.f32 0.0, %v2650
      %2652 = vmatmul.f32.gmra.mxu0 %v2622
      %v2653 = vpop.f32.mrf.mxu0
      %v2654 = vadd.f32 0.0, %v2653
      %2655 = vdwg.mxu0
      %v2656 = vld [vmem:[%s5] sm:$0xff]
      %v2657 = vld [vmem:[%s5 + $0x8] sm:$0xff]
      %v2658 = vld [vmem:[%s5 + $0x10] sm:$0xff]
      %v2659 = vld [vmem:[%s5 + $0x18] sm:$0xff]
      %v2660 = vld [vmem:[%s5 + $0x20] sm:$0xff]
      %v2661 = vld [vmem:[%s5 + $0x28] sm:$0xff]
      %v2662 = vld [vmem:[%s5 + $0x30] sm:$0xff]
      %v2663 = vld [vmem:[%s5 + $0x38] sm:$0xff]
      %v2665 = vsel %vm470, %v2313, 0
      %v2668 = vsel %vm470, %v2316, 0
      %v2671 = vsel %vm470, %v2319, 0
      %v2674 = vsel %vm470, %v2322, 0
      %v2677 = vsel %vm470, %v2325, 0
      %v2680 = vsel %vm470, %v2360, 0
      %v2683 = vsel %vm470, %v2363, 0
      %v2686 = vsel %vm470, %v2366, 0
      %v2689 = vsel %vm470, %v2369, 0
      %v2692 = vsel %vm470, %v2372, 0
      %v2695 = vsel %vm470, %v2407, 0
      %v2698 = vsel %vm470, %v2410, 0
      %v2701 = vsel %vm470, %v2413, 0
      %v2704 = vsel %vm470, %v2416, 0
      %v2707 = vsel %vm470, %v2419, 0
      %v2710 = vsel %vm470, %v2454, 0
      %v2713 = vsel %vm470, %v2457, 0
      %v2716 = vsel %vm470, %v2460, 0
      %v2719 = vsel %vm470, %v2463, 0
      %v2722 = vsel %vm470, %v2466, 0
      %v2725 = vsel %vm470, %v2501, 0
      %v2728 = vsel %vm470, %v2504, 0
      %v2731 = vsel %vm470, %v2507, 0
      %v2734 = vsel %vm470, %v2510, 0
      %v2737 = vsel %vm470, %v2513, 0
      %v2740 = vsel %vm470, %v2548, 0
      %v2743 = vsel %vm470, %v2551, 0
      %v2746 = vsel %vm470, %v2554, 0
      %v2749 = vsel %vm470, %v2557, 0
      %v2752 = vsel %vm470, %v2560, 0
      %v2755 = vsel %vm470, %v2595, 0
      %v2758 = vsel %vm470, %v2598, 0
      %v2761 = vsel %vm470, %v2601, 0
      %v2764 = vsel %vm470, %v2604, 0
      %v2767 = vsel %vm470, %v2607, 0
      %v2770 = vsel %vm470, %v2642, 0
      %v2773 = vsel %vm470, %v2645, 0
      %v2776 = vsel %vm470, %v2648, 0
      %v2779 = vsel %vm470, %v2651, 0
      %v2782 = vsel %vm470, %v2654, 0
      %2784 = vmatpush.msra.mxu0 0.0
      %2785 = vmatpush.msra.mxu0 0.0
      %2786 = vmatpush.msra.mxu0 0.0
      %2787 = vmatpush.msra.mxu0 0.0
      %2788 = vmatpush.msra.mxu0 0.0
      %2789 = vmatpush.msra.mxu0 0.0
      %2790 = vmatpush.msra.mxu0 0.0
      %2791 = vmatpush.msra.mxu0 0.0
      %2792 = vmatpush.msra.mxu0 %v2663
      %2793 = vmatpush.msra.mxu0 %v2662
      %2794 = vmatpush.msra.mxu0 %v2661
      %2795 = vmatpush.msra.mxu0 %v2660
      %2796 = vmatpush.msra.mxu0 %v2659
      %2797 = vmatpush.msra.mxu0 %v2658
      %2798 = vmatpush.msra.mxu0 %v2657
      %2799 = vmatpush.msra.mxu0 %v2656
      %2800 = vmatmul.f32.gmra.mxu0 %v2665
      %v2801 = vpop.f32.mrf.mxu0
      %v2802 = vadd.f32 %v382, %v2801
      %2803 = vmatmul.f32.gmra.mxu0 %v2668
      %v2804 = vpop.f32.mrf.mxu0
      %v2805 = vadd.f32 %v383, %v2804
      %2806 = vmatmul.f32.gmra.mxu0 %v2671
      %v2807 = vpop.f32.mrf.mxu0
      %v2808 = vadd.f32 %v384, %v2807
      %2809 = vmatmul.f32.gmra.mxu0 %v2674
      %v2810 = vpop.f32.mrf.mxu0
      %v2811 = vadd.f32 %v385, %v2810
      %2812 = vmatmul.f32.gmra.mxu0 %v2677
      %v2813 = vpop.f32.mrf.mxu0
      %v2814 = vadd.f32 %v386, %v2813
      %2815 = vmatmul.f32.gmra.mxu0 %v2680
      %v2816 = vpop.f32.mrf.mxu0
      %v2817 = vadd.f32 %v387, %v2816
      %2818 = vmatmul.f32.gmra.mxu0 %v2683
      %v2819 = vpop.f32.mrf.mxu0
      %v2820 = vadd.f32 %v388, %v2819
      %2821 = vmatmul.f32.gmra.mxu0 %v2686
      %v2822 = vpop.f32.mrf.mxu0
      %v2823 = vadd.f32 %v389, %v2822
      %2824 = vmatmul.f32.gmra.mxu0 %v2689
      %v2825 = vpop.f32.mrf.mxu0
      %v2826 = vadd.f32 %v390, %v2825
      %2827 = vmatmul.f32.gmra.mxu0 %v2692
      %v2828 = vpop.f32.mrf.mxu0
      %v2829 = vadd.f32 %v391, %v2828
      %2830 = vmatmul.f32.gmra.mxu0 %v2695
      %v2831 = vpop.f32.mrf.mxu0
      %v2832 = vadd.f32 %v392, %v2831
      %2833 = vmatmul.f32.gmra.mxu0 %v2698
      %v2834 = vpop.f32.mrf.mxu0
      %v2835 = vadd.f32 %v393, %v2834
      %2836 = vmatmul.f32.gmra.mxu0 %v2701
      %v2837 = vpop.f32.mrf.mxu0
      %v2838 = vadd.f32 %v394, %v2837
      %2839 = vmatmul.f32.gmra.mxu0 %v2704
      %v2840 = vpop.f32.mrf.mxu0
      %v2841 = vadd.f32 %v395, %v2840
      %2842 = vmatmul.f32.gmra.mxu0 %v2707
      %v2843 = vpop.f32.mrf.mxu0
      %v2844 = vadd.f32 %v396, %v2843
      %2845 = vmatmul.f32.gmra.mxu0 %v2710
      %v2846 = vpop.f32.mrf.mxu0
      %v2847 = vadd.f32 %v397, %v2846
      %2848 = vmatmul.f32.gmra.mxu0 %v2713
      %v2849 = vpop.f32.mrf.mxu0
      %v2850 = vadd.f32 %v398, %v2849
      %2851 = vmatmul.f32.gmra.mxu0 %v2716
      %v2852 = vpop.f32.mrf.mxu0
      %v2853 = vadd.f32 %v399, %v2852
      %2854 = vmatmul.f32.gmra.mxu0 %v2719
      %v2855 = vpop.f32.mrf.mxu0
      %v2856 = vadd.f32 %v400, %v2855
      %2857 = vmatmul.f32.gmra.mxu0 %v2722
      %v2858 = vpop.f32.mrf.mxu0
      %v2859 = vadd.f32 %v401, %v2858
      %2860 = vmatmul.f32.gmra.mxu0 %v2725
      %v2861 = vpop.f32.mrf.mxu0
      %v2862 = vadd.f32 %v402, %v2861
      %2863 = vmatmul.f32.gmra.mxu0 %v2728
      %v2864 = vpop.f32.mrf.mxu0
      %v2865 = vadd.f32 %v403, %v2864
      %2866 = vmatmul.f32.gmra.mxu0 %v2731
      %v2867 = vpop.f32.mrf.mxu0
      %v2868 = vadd.f32 %v404, %v2867
      %2869 = vmatmul.f32.gmra.mxu0 %v2734
      %v2870 = vpop.f32.mrf.mxu0
      %v2871 = vadd.f32 %v405, %v2870
      %2872 = vmatmul.f32.gmra.mxu0 %v2737
      %v2873 = vpop.f32.mrf.mxu0
      %v2874 = vadd.f32 %v406, %v2873
      %2875 = vmatmul.f32.gmra.mxu0 %v2740
      %v2876 = vpop.f32.mrf.mxu0
      %v2877 = vadd.f32 %v407, %v2876
      %2878 = vmatmul.f32.gmra.mxu0 %v2743
      %v2879 = vpop.f32.mrf.mxu0
      %v2880 = vadd.f32 %v408, %v2879
      %2881 = vmatmul.f32.gmra.mxu0 %v2746
      %v2882 = vpop.f32.mrf.mxu0
      %v2883 = vadd.f32 %v409, %v2882
      %2884 = vmatmul.f32.gmra.mxu0 %v2749
      %v2885 = vpop.f32.mrf.mxu0
      %v2886 = vadd.f32 %v410, %v2885
      %2887 = vmatmul.f32.gmra.mxu0 %v2752
      %v2888 = vpop.f32.mrf.mxu0
      %v2889 = vadd.f32 %v411, %v2888
      %2890 = vmatmul.f32.gmra.mxu0 %v2755
      %v2891 = vpop.f32.mrf.mxu0
      %v2892 = vadd.f32 %v412, %v2891
      %2893 = vmatmul.f32.gmra.mxu0 %v2758
      %v2894 = vpop.f32.mrf.mxu0
      %v2895 = vadd.f32 %v413, %v2894
      %2896 = vmatmul.f32.gmra.mxu0 %v2761
      %v2897 = vpop.f32.mrf.mxu0
      %v2898 = vadd.f32 %v414, %v2897
      %2899 = vmatmul.f32.gmra.mxu0 %v2764
      %v2900 = vpop.f32.mrf.mxu0
      %v2901 = vadd.f32 %v415, %v2900
      %2902 = vmatmul.f32.gmra.mxu0 %v2767
      %v2903 = vpop.f32.mrf.mxu0
      %v2904 = vadd.f32 %v416, %v2903
      %2905 = vmatmul.f32.gmra.mxu0 %v2770
      %v2906 = vpop.f32.mrf.mxu0
      %v2907 = vadd.f32 %v417, %v2906
      %2908 = vmatmul.f32.gmra.mxu0 %v2773
      %v2909 = vpop.f32.mrf.mxu0
      %v2910 = vadd.f32 %v418, %v2909
      %2911 = vmatmul.f32.gmra.mxu0 %v2776
      %v2912 = vpop.f32.mrf.mxu0
      %v2913 = vadd.f32 %v419, %v2912
      %2914 = vmatmul.f32.gmra.mxu0 %v2779
      %v2915 = vpop.f32.mrf.mxu0
      %v2916 = vadd.f32 %v420, %v2915
      %2917 = vmatmul.f32.gmra.mxu0 %v2782
      %v2918 = vpop.f32.mrf.mxu0
      %v2919 = vadd.f32 %v421, %v2918
      %2920 = vdwg.mxu0
      %v2921 = vsel %vm470, %v2802, 0.0
      %2922 = vadd.xlane.f32.xlu0 %v2921
      %v2923 = vpop.xlane.xlu0 %2922
      %v2924 = vsel %vm470, %v2805, 0.0
      %2925 = vadd.xlane.f32.xlu0 %v2924
      %v2926 = vpop.xlane.xlu0 %2925
      %v2927 = vsel %vm470, %v2808, 0.0
      %2928 = vadd.xlane.f32.xlu0 %v2927
      %v2929 = vpop.xlane.xlu0 %2928
      %v2930 = vsel %vm470, %v2811, 0.0
      %2931 = vadd.xlane.f32.xlu0 %v2930
      %v2932 = vpop.xlane.xlu0 %2931
      %v2933 = vsel %vm470, %v2814, 0.0
      %2934 = vadd.xlane.f32.xlu0 %v2933
      %v2935 = vpop.xlane.xlu0 %2934
      %v2936 = vsel %vm470, %v2817, 0.0
      %2937 = vadd.xlane.f32.xlu0 %v2936
      %v2938 = vpop.xlane.xlu0 %2937
      %v2939 = vsel %vm470, %v2820, 0.0
      %2940 = vadd.xlane.f32.xlu0 %v2939
      %v2941 = vpop.xlane.xlu0 %2940
      %v2942 = vsel %vm470, %v2823, 0.0
      %2943 = vadd.xlane.f32.xlu0 %v2942
      %v2944 = vpop.xlane.xlu0 %2943
      %v2945 = vsel %vm470, %v2826, 0.0
      %2946 = vadd.xlane.f32.xlu0 %v2945
      %v2947 = vpop.xlane.xlu0 %2946
      %v2948 = vsel %vm470, %v2829, 0.0
      %2949 = vadd.xlane.f32.xlu0 %v2948
      %v2950 = vpop.xlane.xlu0 %2949
      %v2951 = vsel %vm470, %v2832, 0.0
      %2952 = vadd.xlane.f32.xlu0 %v2951
      %v2953 = vpop.xlane.xlu0 %2952
      %v2954 = vsel %vm470, %v2835, 0.0
      %2955 = vadd.xlane.f32.xlu0 %v2954
      %v2956 = vpop.xlane.xlu0 %2955
      %v2957 = vsel %vm470, %v2838, 0.0
      %2958 = vadd.xlane.f32.xlu0 %v2957
      %v2959 = vpop.xlane.xlu0 %2958
      %v2960 = vsel %vm470, %v2841, 0.0
      %2961 = vadd.xlane.f32.xlu0 %v2960
      %v2962 = vpop.xlane.xlu0 %2961
      %v2963 = vsel %vm470, %v2844, 0.0
      %2964 = vadd.xlane.f32.xlu0 %v2963
      %v2965 = vpop.xlane.xlu0 %2964
      %v2966 = vsel %vm470, %v2847, 0.0
      %2967 = vadd.xlane.f32.xlu0 %v2966
      %v2968 = vpop.xlane.xlu0 %2967
      %v2969 = vsel %vm470, %v2850, 0.0
      %2970 = vadd.xlane.f32.xlu0 %v2969
      %v2971 = vpop.xlane.xlu0 %2970
      %v2972 = vsel %vm470, %v2853, 0.0
      %2973 = vadd.xlane.f32.xlu0 %v2972
      %v2974 = vpop.xlane.xlu0 %2973
      %v2975 = vsel %vm470, %v2856, 0.0
      %2976 = vadd.xlane.f32.xlu0 %v2975
      %v2977 = vpop.xlane.xlu0 %2976
      %v2978 = vsel %vm470, %v2859, 0.0
      %2979 = vadd.xlane.f32.xlu0 %v2978
      %v2980 = vpop.xlane.xlu0 %2979
      %v2981 = vsel %vm470, %v2862, 0.0
      %2982 = vadd.xlane.f32.xlu0 %v2981
      %v2983 = vpop.xlane.xlu0 %2982
      %v2984 = vsel %vm470, %v2865, 0.0
      %2985 = vadd.xlane.f32.xlu0 %v2984
      %v2986 = vpop.xlane.xlu0 %2985
      %v2987 = vsel %vm470, %v2868, 0.0
      %2988 = vadd.xlane.f32.xlu0 %v2987
      %v2989 = vpop.xlane.xlu0 %2988
      %v2990 = vsel %vm470, %v2871, 0.0
      %2991 = vadd.xlane.f32.xlu0 %v2990
      %v2992 = vpop.xlane.xlu0 %2991
      %v2993 = vsel %vm470, %v2874, 0.0
      %2994 = vadd.xlane.f32.xlu0 %v2993
      %v2995 = vpop.xlane.xlu0 %2994
      %v2996 = vsel %vm470, %v2877, 0.0
      %2997 = vadd.xlane.f32.xlu0 %v2996
      %v2998 = vpop.xlane.xlu0 %2997
      %v2999 = vsel %vm470, %v2880, 0.0
      %3000 = vadd.xlane.f32.xlu0 %v2999
      %v3001 = vpop.xlane.xlu0 %3000
      %v3002 = vsel %vm470, %v2883, 0.0
      %3003 = vadd.xlane.f32.xlu0 %v3002
      %v3004 = vpop.xlane.xlu0 %3003
      %v3005 = vsel %vm470, %v2886, 0.0
      %3006 = vadd.xlane.f32.xlu0 %v3005
      %v3007 = vpop.xlane.xlu0 %3006
      %v3008 = vsel %vm470, %v2889, 0.0
      %3009 = vadd.xlane.f32.xlu0 %v3008
      %v3010 = vpop.xlane.xlu0 %3009
      %v3011 = vsel %vm470, %v2892, 0.0
      %3012 = vadd.xlane.f32.xlu0 %v3011
      %v3013 = vpop.xlane.xlu0 %3012
      %v3014 = vsel %vm470, %v2895, 0.0
      %3015 = vadd.xlane.f32.xlu0 %v3014
      %v3016 = vpop.xlane.xlu0 %3015
      %v3017 = vsel %vm470, %v2898, 0.0
      %3018 = vadd.xlane.f32.xlu0 %v3017
      %v3019 = vpop.xlane.xlu0 %3018
      %v3020 = vsel %vm470, %v2901, 0.0
      %3021 = vadd.xlane.f32.xlu0 %v3020
      %v3022 = vpop.xlane.xlu0 %3021
      %v3023 = vsel %vm470, %v2904, 0.0
      %3024 = vadd.xlane.f32.xlu0 %v3023
      %v3025 = vpop.xlane.xlu0 %3024
      %v3026 = vsel %vm470, %v2907, 0.0
      %3027 = vadd.xlane.f32.xlu0 %v3026
      %v3028 = vpop.xlane.xlu0 %3027
      %v3029 = vsel %vm470, %v2910, 0.0
      %3030 = vadd.xlane.f32.xlu0 %v3029
      %v3031 = vpop.xlane.xlu0 %3030
      %v3032 = vsel %vm470, %v2913, 0.0
      %3033 = vadd.xlane.f32.xlu0 %v3032
      %v3034 = vpop.xlane.xlu0 %3033
      %v3035 = vsel %vm470, %v2916, 0.0
      %3036 = vadd.xlane.f32.xlu0 %v3035
      %v3037 = vpop.xlane.xlu0 %3036
      %v3038 = vsel %vm470, %v2919, 0.0
      %3039 = vadd.xlane.f32.xlu0 %v3038
      %v3040 = vpop.xlane.xlu0 %3039
      %v3041 = vrcp.pop 64.0
      %v3042 = vmul.f32 64.0, %v3041
      %v3043 = vsub.f32 1.0, %v3042
      %v3044 = vmul.f32 %v3041, %v3043
      %v3045 = vadd.f32 %v3041, %v3044
      %vm3046 = vweird.f32 %v3041
      %v3047 = vsel %vm3046, %v3041, %v3045
      %v3048 = vmul.f32 %v2923, %v3047
      %v3049 = vmul.f32 %v2926, %v3047
      %v3050 = vmul.f32 %v2929, %v3047
      %v3051 = vmul.f32 %v2932, %v3047
      %v3052 = vmul.f32 %v2935, %v3047
      %v3053 = vmul.f32 %v2938, %v3047
      %v3054 = vmul.f32 %v2941, %v3047
      %v3055 = vmul.f32 %v2944, %v3047
      %v3056 = vmul.f32 %v2947, %v3047
      %v3057 = vmul.f32 %v2950, %v3047
      %v3058 = vmul.f32 %v2953, %v3047
      %v3059 = vmul.f32 %v2956, %v3047
      %v3060 = vmul.f32 %v2959, %v3047
      %v3061 = vmul.f32 %v2962, %v3047
      %v3062 = vmul.f32 %v2965, %v3047
      %v3063 = vmul.f32 %v2968, %v3047
      %v3064 = vmul.f32 %v2971, %v3047
      %v3065 = vmul.f32 %v2974, %v3047
      %v3066 = vmul.f32 %v2977, %v3047
      %v3067 = vmul.f32 %v2980, %v3047
      %v3068 = vmul.f32 %v2983, %v3047
      %v3069 = vmul.f32 %v2986, %v3047
      %v3070 = vmul.f32 %v2989, %v3047
      %v3071 = vmul.f32 %v2992, %v3047
      %v3072 = vmul.f32 %v2995, %v3047
      %v3073 = vmul.f32 %v2998, %v3047
      %v3074 = vmul.f32 %v3001, %v3047
      %v3075 = vmul.f32 %v3004, %v3047
      %v3076 = vmul.f32 %v3007, %v3047
      %v3077 = vmul.f32 %v3010, %v3047
      %v3078 = vmul.f32 %v3013, %v3047
      %v3079 = vmul.f32 %v3016, %v3047
      %v3080 = vmul.f32 %v3019, %v3047
      %v3081 = vmul.f32 %v3022, %v3047
      %v3082 = vmul.f32 %v3025, %v3047
      %v3083 = vmul.f32 %v3028, %v3047
      %v3084 = vmul.f32 %v3031, %v3047
      %v3085 = vmul.f32 %v3034, %v3047
      %v3086 = vmul.f32 %v3037, %v3047
      %v3087 = vmul.f32 %v3040, %v3047
      %v3088 = vsub.f32 %v2802, %v3048
      %v3089 = vsub.f32 %v2805, %v3049
      %v3090 = vsub.f32 %v2808, %v3050
      %v3091 = vsub.f32 %v2811, %v3051
      %v3092 = vsub.f32 %v2814, %v3052
      %v3093 = vsub.f32 %v2817, %v3053
      %v3094 = vsub.f32 %v2820, %v3054
      %v3095 = vsub.f32 %v2823, %v3055
      %v3096 = vsub.f32 %v2826, %v3056
      %v3097 = vsub.f32 %v2829, %v3057
      %v3098 = vsub.f32 %v2832, %v3058
      %v3099 = vsub.f32 %v2835, %v3059
      %v3100 = vsub.f32 %v2838, %v3060
      %v3101 = vsub.f32 %v2841, %v3061
      %v3102 = vsub.f32 %v2844, %v3062
      %v3103 = vsub.f32 %v2847, %v3063
      %v3104 = vsub.f32 %v2850, %v3064
      %v3105 = vsub.f32 %v2853, %v3065
      %v3106 = vsub.f32 %v2856, %v3066
      %v3107 = vsub.f32 %v2859, %v3067
      %v3108 = vsub.f32 %v2862, %v3068
      %v3109 = vsub.f32 %v2865, %v3069
      %v3110 = vsub.f32 %v2868, %v3070
      %v3111 = vsub.f32 %v2871, %v3071
      %v3112 = vsub.f32 %v2874, %v3072
      %v3113 = vsub.f32 %v2877, %v3073
      %v3114 = vsub.f32 %v2880, %v3074
      %v3115 = vsub.f32 %v2883, %v3075
      %v3116 = vsub.f32 %v2886, %v3076
      %v3117 = vsub.f32 %v2889, %v3077
      %v3118 = vsub.f32 %v2892, %v3078
      %v3119 = vsub.f32 %v2895, %v3079
      %v3120 = vsub.f32 %v2898, %v3080
      %v3121 = vsub.f32 %v2901, %v3081
      %v3122 = vsub.f32 %v2904, %v3082
      %v3123 = vsub.f32 %v2907, %v3083
      %v3124 = vsub.f32 %v2910, %v3084
      %v3125 = vsub.f32 %v2913, %v3085
      %v3126 = vsub.f32 %v2916, %v3086
      %v3127 = vsub.f32 %v2919, %v3087
      %v3128 = vmul.f32 %v3088, %v3088
      %v3129 = vmul.f32 %v3089, %v3089
      %v3130 = vmul.f32 %v3090, %v3090
      %v3131 = vmul.f32 %v3091, %v3091
      %v3132 = vmul.f32 %v3092, %v3092
      %v3133 = vmul.f32 %v3093, %v3093
      %v3134 = vmul.f32 %v3094, %v3094
      %v3135 = vmul.f32 %v3095, %v3095
      %v3136 = vmul.f32 %v3096, %v3096
      %v3137 = vmul.f32 %v3097, %v3097
      %v3138 = vmul.f32 %v3098, %v3098
      %v3139 = vmul.f32 %v3099, %v3099
      %v3140 = vmul.f32 %v3100, %v3100
      %v3141 = vmul.f32 %v3101, %v3101
      %v3142 = vmul.f32 %v3102, %v3102
      %v3143 = vmul.f32 %v3103, %v3103
      %v3144 = vmul.f32 %v3104, %v3104
      %v3145 = vmul.f32 %v3105, %v3105
      %v3146 = vmul.f32 %v3106, %v3106
      %v3147 = vmul.f32 %v3107, %v3107
      %v3148 = vmul.f32 %v3108, %v3108
      %v3149 = vmul.f32 %v3109, %v3109
      %v3150 = vmul.f32 %v3110, %v3110
      %v3151 = vmul.f32 %v3111, %v3111
      %v3152 = vmul.f32 %v3112, %v3112
      %v3153 = vmul.f32 %v3113, %v3113
      %v3154 = vmul.f32 %v3114, %v3114
      %v3155 = vmul.f32 %v3115, %v3115
      %v3156 = vmul.f32 %v3116, %v3116
      %v3157 = vmul.f32 %v3117, %v3117
      %v3158 = vmul.f32 %v3118, %v3118
      %v3159 = vmul.f32 %v3119, %v3119
      %v3160 = vmul.f32 %v3120, %v3120
      %v3161 = vmul.f32 %v3121, %v3121
      %v3162 = vmul.f32 %v3122, %v3122
      %v3163 = vmul.f32 %v3123, %v3123
      %v3164 = vmul.f32 %v3124, %v3124
      %v3165 = vmul.f32 %v3125, %v3125
      %v3166 = vmul.f32 %v3126, %v3126
      %v3167 = vmul.f32 %v3127, %v3127
      %v3168 = vsel %vm470, %v3128, 0.0
      %3169 = vadd.xlane.f32.xlu0 %v3168
      %v3170 = vpop.xlane.xlu0 %3169
      %v3171 = vsel %vm470, %v3129, 0.0
      %3172 = vadd.xlane.f32.xlu0 %v3171
      %v3173 = vpop.xlane.xlu0 %3172
      %v3174 = vsel %vm470, %v3130, 0.0
      %3175 = vadd.xlane.f32.xlu0 %v3174
      %v3176 = vpop.xlane.xlu0 %3175
      %v3177 = vsel %vm470, %v3131, 0.0
      %3178 = vadd.xlane.f32.xlu0 %v3177
      %v3179 = vpop.xlane.xlu0 %3178
      %v3180 = vsel %vm470, %v3132, 0.0
      %3181 = vadd.xlane.f32.xlu0 %v3180
      %v3182 = vpop.xlane.xlu0 %3181
      %v3183 = vsel %vm470, %v3133, 0.0
      %3184 = vadd.xlane.f32.xlu0 %v3183
      %v3185 = vpop.xlane.xlu0 %3184
      %v3186 = vsel %vm470, %v3134, 0.0
      %3187 = vadd.xlane.f32.xlu0 %v3186
      %v3188 = vpop.xlane.xlu0 %3187
      %v3189 = vsel %vm470, %v3135, 0.0
      %3190 = vadd.xlane.f32.xlu0 %v3189
      %v3191 = vpop.xlane.xlu0 %3190
      %v3192 = vsel %vm470, %v3136, 0.0
      %3193 = vadd.xlane.f32.xlu0 %v3192
      %v3194 = vpop.xlane.xlu0 %3193
      %v3195 = vsel %vm470, %v3137, 0.0
      %3196 = vadd.xlane.f32.xlu0 %v3195
      %v3197 = vpop.xlane.xlu0 %3196
      %v3198 = vsel %vm470, %v3138, 0.0
      %3199 = vadd.xlane.f32.xlu0 %v3198
      %v3200 = vpop.xlane.xlu0 %3199
      %v3201 = vsel %vm470, %v3139, 0.0
      %3202 = vadd.xlane.f32.xlu0 %v3201
      %v3203 = vpop.xlane.xlu0 %3202
      %v3204 = vsel %vm470, %v3140, 0.0
      %3205 = vadd.xlane.f32.xlu0 %v3204
      %v3206 = vpop.xlane.xlu0 %3205
      %v3207 = vsel %vm470, %v3141, 0.0
      %3208 = vadd.xlane.f32.xlu0 %v3207
      %v3209 = vpop.xlane.xlu0 %3208
      %v3210 = vsel %vm470, %v3142, 0.0
      %3211 = vadd.xlane.f32.xlu0 %v3210
      %v3212 = vpop.xlane.xlu0 %3211
      %v3213 = vsel %vm470, %v3143, 0.0
      %3214 = vadd.xlane.f32.xlu0 %v3213
      %v3215 = vpop.xlane.xlu0 %3214
      %v3216 = vsel %vm470, %v3144, 0.0
      %3217 = vadd.xlane.f32.xlu0 %v3216
      %v3218 = vpop.xlane.xlu0 %3217
      %v3219 = vsel %vm470, %v3145, 0.0
      %3220 = vadd.xlane.f32.xlu0 %v3219
      %v3221 = vpop.xlane.xlu0 %3220
      %v3222 = vsel %vm470, %v3146, 0.0
      %3223 = vadd.xlane.f32.xlu0 %v3222
      %v3224 = vpop.xlane.xlu0 %3223
      %v3225 = vsel %vm470, %v3147, 0.0
      %3226 = vadd.xlane.f32.xlu0 %v3225
      %v3227 = vpop.xlane.xlu0 %3226
      %v3228 = vsel %vm470, %v3148, 0.0
      %3229 = vadd.xlane.f32.xlu0 %v3228
      %v3230 = vpop.xlane.xlu0 %3229
      %v3231 = vsel %vm470, %v3149, 0.0
      %3232 = vadd.xlane.f32.xlu0 %v3231
      %v3233 = vpop.xlane.xlu0 %3232
      %v3234 = vsel %vm470, %v3150, 0.0
      %3235 = vadd.xlane.f32.xlu0 %v3234
      %v3236 = vpop.xlane.xlu0 %3235
      %v3237 = vsel %vm470, %v3151, 0.0
      %3238 = vadd.xlane.f32.xlu0 %v3237
      %v3239 = vpop.xlane.xlu0 %3238
      %v3240 = vsel %vm470, %v3152, 0.0
      %3241 = vadd.xlane.f32.xlu0 %v3240
      %v3242 = vpop.xlane.xlu0 %3241
      %v3243 = vsel %vm470, %v3153, 0.0
      %3244 = vadd.xlane.f32.xlu0 %v3243
      %v3245 = vpop.xlane.xlu0 %3244
      %v3246 = vsel %vm470, %v3154, 0.0
      %3247 = vadd.xlane.f32.xlu0 %v3246
      %v3248 = vpop.xlane.xlu0 %3247
      %v3249 = vsel %vm470, %v3155, 0.0
      %3250 = vadd.xlane.f32.xlu0 %v3249
      %v3251 = vpop.xlane.xlu0 %3250
      %v3252 = vsel %vm470, %v3156, 0.0
      %3253 = vadd.xlane.f32.xlu0 %v3252
      %v3254 = vpop.xlane.xlu0 %3253
      %v3255 = vsel %vm470, %v3157, 0.0
      %3256 = vadd.xlane.f32.xlu0 %v3255
      %v3257 = vpop.xlane.xlu0 %3256
      %v3258 = vsel %vm470, %v3158, 0.0
      %3259 = vadd.xlane.f32.xlu0 %v3258
      %v3260 = vpop.xlane.xlu0 %3259
      %v3261 = vsel %vm470, %v3159, 0.0
      %3262 = vadd.xlane.f32.xlu0 %v3261
      %v3263 = vpop.xlane.xlu0 %3262
      %v3264 = vsel %vm470, %v3160, 0.0
      %3265 = vadd.xlane.f32.xlu0 %v3264
      %v3266 = vpop.xlane.xlu0 %3265
      %v3267 = vsel %vm470, %v3161, 0.0
      %3268 = vadd.xlane.f32.xlu0 %v3267
      %v3269 = vpop.xlane.xlu0 %3268
      %v3270 = vsel %vm470, %v3162, 0.0
      %3271 = vadd.xlane.f32.xlu0 %v3270
      %v3272 = vpop.xlane.xlu0 %3271
      %v3273 = vsel %vm470, %v3163, 0.0
      %3274 = vadd.xlane.f32.xlu0 %v3273
      %v3275 = vpop.xlane.xlu0 %3274
      %v3276 = vsel %vm470, %v3164, 0.0
      %3277 = vadd.xlane.f32.xlu0 %v3276
      %v3278 = vpop.xlane.xlu0 %3277
      %v3279 = vsel %vm470, %v3165, 0.0
      %3280 = vadd.xlane.f32.xlu0 %v3279
      %v3281 = vpop.xlane.xlu0 %3280
      %v3282 = vsel %vm470, %v3166, 0.0
      %3283 = vadd.xlane.f32.xlu0 %v3282
      %v3284 = vpop.xlane.xlu0 %3283
      %v3285 = vsel %vm470, %v3167, 0.0
      %3286 = vadd.xlane.f32.xlu0 %v3285
      %v3287 = vpop.xlane.xlu0 %3286
      %v3288 = vmul.f32 %v3170, %v3047
      %v3289 = vmul.f32 %v3173, %v3047
      %v3290 = vmul.f32 %v3176, %v3047
      %v3291 = vmul.f32 %v3179, %v3047
      %v3292 = vmul.f32 %v3182, %v3047
      %v3293 = vmul.f32 %v3185, %v3047
      %v3294 = vmul.f32 %v3188, %v3047
      %v3295 = vmul.f32 %v3191, %v3047
      %v3296 = vmul.f32 %v3194, %v3047
      %v3297 = vmul.f32 %v3197, %v3047
      %v3298 = vmul.f32 %v3200, %v3047
      %v3299 = vmul.f32 %v3203, %v3047
      %v3300 = vmul.f32 %v3206, %v3047
      %v3301 = vmul.f32 %v3209, %v3047
      %v3302 = vmul.f32 %v3212, %v3047
      %v3303 = vmul.f32 %v3215, %v3047
      %v3304 = vmul.f32 %v3218, %v3047
      %v3305 = vmul.f32 %v3221, %v3047
      %v3306 = vmul.f32 %v3224, %v3047
      %v3307 = vmul.f32 %v3227, %v3047
      %v3308 = vmul.f32 %v3230, %v3047
      %v3309 = vmul.f32 %v3233, %v3047
      %v3310 = vmul.f32 %v3236, %v3047
      %v3311 = vmul.f32 %v3239, %v3047
      %v3312 = vmul.f32 %v3242, %v3047
      %v3313 = vmul.f32 %v3245, %v3047
      %v3314 = vmul.f32 %v3248, %v3047
      %v3315 = vmul.f32 %v3251, %v3047
      %v3316 = vmul.f32 %v3254, %v3047
      %v3317 = vmul.f32 %v3257, %v3047
      %v3318 = vmul.f32 %v3260, %v3047
      %v3319 = vmul.f32 %v3263, %v3047
      %v3320 = vmul.f32 %v3266, %v3047
      %v3321 = vmul.f32 %v3269, %v3047
      %v3322 = vmul.f32 %v3272, %v3047
      %v3323 = vmul.f32 %v3275, %v3047
      %v3324 = vmul.f32 %v3278, %v3047
      %v3325 = vmul.f32 %v3281, %v3047
      %v3326 = vmul.f32 %v3284, %v3047
      %v3327 = vmul.f32 %v3287, %v3047
      %v3328 = vadd.f32 %v3288, 1e-05
      %v3329 = vadd.f32 %v3289, 1e-05
      %v3330 = vadd.f32 %v3290, 1e-05
      %v3331 = vadd.f32 %v3291, 1e-05
      %v3332 = vadd.f32 %v3292, 1e-05
      %v3333 = vadd.f32 %v3293, 1e-05
      %v3334 = vadd.f32 %v3294, 1e-05
      %v3335 = vadd.f32 %v3295, 1e-05
      %v3336 = vadd.f32 %v3296, 1e-05
      %v3337 = vadd.f32 %v3297, 1e-05
      %v3338 = vadd.f32 %v3298, 1e-05
      %v3339 = vadd.f32 %v3299, 1e-05
      %v3340 = vadd.f32 %v3300, 1e-05
      %v3341 = vadd.f32 %v3301, 1e-05
      %v3342 = vadd.f32 %v3302, 1e-05
      %v3343 = vadd.f32 %v3303, 1e-05
      %v3344 = vadd.f32 %v3304, 1e-05
      %v3345 = vadd.f32 %v3305, 1e-05
      %v3346 = vadd.f32 %v3306, 1e-05
      %v3347 = vadd.f32 %v3307, 1e-05
      %v3348 = vadd.f32 %v3308, 1e-05
      %v3349 = vadd.f32 %v3309, 1e-05
      %v3350 = vadd.f32 %v3310, 1e-05
      %v3351 = vadd.f32 %v3311, 1e-05
      %v3352 = vadd.f32 %v3312, 1e-05
      %v3353 = vadd.f32 %v3313, 1e-05
      %v3354 = vadd.f32 %v3314, 1e-05
      %v3355 = vadd.f32 %v3315, 1e-05
      %v3356 = vadd.f32 %v3316, 1e-05
      %v3357 = vadd.f32 %v3317, 1e-05
      %v3358 = vadd.f32 %v3318, 1e-05
      %v3359 = vadd.f32 %v3319, 1e-05
      %v3360 = vadd.f32 %v3320, 1e-05
      %v3361 = vadd.f32 %v3321, 1e-05
      %v3362 = vadd.f32 %v3322, 1e-05
      %v3363 = vadd.f32 %v3323, 1e-05
      %v3364 = vadd.f32 %v3324, 1e-05
      %v3365 = vadd.f32 %v3325, 1e-05
      %v3366 = vadd.f32 %v3326, 1e-05
      %v3367 = vadd.f32 %v3327, 1e-05
      %v3368 = vrsqrt.pop %v3328
      %v3369 = vmul.f32 %v3368, %v3328
      %v3370 = vmul.f32 %v3369, %v3368
      %v3371 = vmul.f32 0.5, %v3370
      %v3372 = vsub.f32 1.5, %v3371
      %v3373 = vmul.f32 %v3368, %v3372
      %vm3374 = vweird.f32 %v3328
      %vm3375 = vweird.f32 %v3368
      %vm3376 = vmor %vm3374, %vm3375
      %v3377 = vsel %vm3376, %v3368, %v3373
      %v3378 = vrsqrt.pop %v3329
      %v3379 = vmul.f32 %v3378, %v3329
      %v3380 = vmul.f32 %v3379, %v3378
      %v3381 = vmul.f32 0.5, %v3380
      %v3382 = vsub.f32 1.5, %v3381
      %v3383 = vmul.f32 %v3378, %v3382
      %vm3384 = vweird.f32 %v3329
      %vm3385 = vweird.f32 %v3378
      %vm3386 = vmor %vm3384, %vm3385
      %v3387 = vsel %vm3386, %v3378, %v3383
      %v3388 = vrsqrt.pop %v3330
      %v3389 = vmul.f32 %v3388, %v3330
      %v3390 = vmul.f32 %v3389, %v3388
      %v3391 = vmul.f32 0.5, %v3390
      %v3392 = vsub.f32 1.5, %v3391
      %v3393 = vmul.f32 %v3388, %v3392
      %vm3394 = vweird.f32 %v3330
      %vm3395 = vweird.f32 %v3388
      %vm3396 = vmor %vm3394, %vm3395
      %v3397 = vsel %vm3396, %v3388, %v3393
      %v3398 = vrsqrt.pop %v3331
      %v3399 = vmul.f32 %v3398, %v3331
      %v3400 = vmul.f32 %v3399, %v3398
      %v3401 = vmul.f32 0.5, %v3400
      %v3402 = vsub.f32 1.5, %v3401
      %v3403 = vmul.f32 %v3398, %v3402
      %vm3404 = vweird.f32 %v3331
      %vm3405 = vweird.f32 %v3398
      %vm3406 = vmor %vm3404, %vm3405
      %v3407 = vsel %vm3406, %v3398, %v3403
      %v3408 = vrsqrt.pop %v3332
      %v3409 = vmul.f32 %v3408, %v3332
      %v3410 = vmul.f32 %v3409, %v3408
      %v3411 = vmul.f32 0.5, %v3410
      %v3412 = vsub.f32 1.5, %v3411
      %v3413 = vmul.f32 %v3408, %v3412
      %vm3414 = vweird.f32 %v3332
      %vm3415 = vweird.f32 %v3408
      %vm3416 = vmor %vm3414, %vm3415
      %v3417 = vsel %vm3416, %v3408, %v3413
      %v3418 = vrsqrt.pop %v3333
      %v3419 = vmul.f32 %v3418, %v3333
      %v3420 = vmul.f32 %v3419, %v3418
      %v3421 = vmul.f32 0.5, %v3420
      %v3422 = vsub.f32 1.5, %v3421
      %v3423 = vmul.f32 %v3418, %v3422
      %vm3424 = vweird.f32 %v3333
      %vm3425 = vweird.f32 %v3418
      %vm3426 = vmor %vm3424, %vm3425
      %v3427 = vsel %vm3426, %v3418, %v3423
      %v3428 = vrsqrt.pop %v3334
      %v3429 = vmul.f32 %v3428, %v3334
      %v3430 = vmul.f32 %v3429, %v3428
      %v3431 = vmul.f32 0.5, %v3430
      %v3432 = vsub.f32 1.5, %v3431
      %v3433 = vmul.f32 %v3428, %v3432
      %vm3434 = vweird.f32 %v3334
      %vm3435 = vweird.f32 %v3428
      %vm3436 = vmor %vm3434, %vm3435
      %v3437 = vsel %vm3436, %v3428, %v3433
      %v3438 = vrsqrt.pop %v3335
      %v3439 = vmul.f32 %v3438, %v3335
      %v3440 = vmul.f32 %v3439, %v3438
      %v3441 = vmul.f32 0.5, %v3440
      %v3442 = vsub.f32 1.5, %v3441
      %v3443 = vmul.f32 %v3438, %v3442
      %vm3444 = vweird.f32 %v3335
      %vm3445 = vweird.f32 %v3438
      %vm3446 = vmor %vm3444, %vm3445
      %v3447 = vsel %vm3446, %v3438, %v3443
      %v3448 = vrsqrt.pop %v3336
      %v3449 = vmul.f32 %v3448, %v3336
      %v3450 = vmul.f32 %v3449, %v3448
      %v3451 = vmul.f32 0.5, %v3450
      %v3452 = vsub.f32 1.5, %v3451
      %v3453 = vmul.f32 %v3448, %v3452
      %vm3454 = vweird.f32 %v3336
      %vm3455 = vweird.f32 %v3448
      %vm3456 = vmor %vm3454, %vm3455
      %v3457 = vsel %vm3456, %v3448, %v3453
      %v3458 = vrsqrt.pop %v3337
      %v3459 = vmul.f32 %v3458, %v3337
      %v3460 = vmul.f32 %v3459, %v3458
      %v3461 = vmul.f32 0.5, %v3460
      %v3462 = vsub.f32 1.5, %v3461
      %v3463 = vmul.f32 %v3458, %v3462
      %vm3464 = vweird.f32 %v3337
      %vm3465 = vweird.f32 %v3458
      %vm3466 = vmor %vm3464, %vm3465
      %v3467 = vsel %vm3466, %v3458, %v3463
      %v3468 = vrsqrt.pop %v3338
      %v3469 = vmul.f32 %v3468, %v3338
      %v3470 = vmul.f32 %v3469, %v3468
      %v3471 = vmul.f32 0.5, %v3470
      %v3472 = vsub.f32 1.5, %v3471
      %v3473 = vmul.f32 %v3468, %v3472
      %vm3474 = vweird.f32 %v3338
      %vm3475 = vweird.f32 %v3468
      %vm3476 = vmor %vm3474, %vm3475
      %v3477 = vsel %vm3476, %v3468, %v3473
      %v3478 = vrsqrt.pop %v3339
      %v3479 = vmul.f32 %v3478, %v3339
      %v3480 = vmul.f32 %v3479, %v3478
      %v3481 = vmul.f32 0.5, %v3480
      %v3482 = vsub.f32 1.5, %v3481
      %v3483 = vmul.f32 %v3478, %v3482
      %vm3484 = vweird.f32 %v3339
      %vm3485 = vweird.f32 %v3478
      %vm3486 = vmor %vm3484, %vm3485
      %v3487 = vsel %vm3486, %v3478, %v3483
      %v3488 = vrsqrt.pop %v3340
      %v3489 = vmul.f32 %v3488, %v3340
      %v3490 = vmul.f32 %v3489, %v3488
      %v3491 = vmul.f32 0.5, %v3490
      %v3492 = vsub.f32 1.5, %v3491
      %v3493 = vmul.f32 %v3488, %v3492
      %vm3494 = vweird.f32 %v3340
      %vm3495 = vweird.f32 %v3488
      %vm3496 = vmor %vm3494, %vm3495
      %v3497 = vsel %vm3496, %v3488, %v3493
      %v3498 = vrsqrt.pop %v3341
      %v3499 = vmul.f32 %v3498, %v3341
      %v3500 = vmul.f32 %v3499, %v3498
      %v3501 = vmul.f32 0.5, %v3500
      %v3502 = vsub.f32 1.5, %v3501
      %v3503 = vmul.f32 %v3498, %v3502
      %vm3504 = vweird.f32 %v3341
      %vm3505 = vweird.f32 %v3498
      %vm3506 = vmor %vm3504, %vm3505
      %v3507 = vsel %vm3506, %v3498, %v3503
      %v3508 = vrsqrt.pop %v3342
      %v3509 = vmul.f32 %v3508, %v3342
      %v3510 = vmul.f32 %v3509, %v3508
      %v3511 = vmul.f32 0.5, %v3510
      %v3512 = vsub.f32 1.5, %v3511
      %v3513 = vmul.f32 %v3508, %v3512
      %vm3514 = vweird.f32 %v3342
      %vm3515 = vweird.f32 %v3508
      %vm3516 = vmor %vm3514, %vm3515
      %v3517 = vsel %vm3516, %v3508, %v3513
      %v3518 = vrsqrt.pop %v3343
      %v3519 = vmul.f32 %v3518, %v3343
      %v3520 = vmul.f32 %v3519, %v3518
      %v3521 = vmul.f32 0.5, %v3520
      %v3522 = vsub.f32 1.5, %v3521
      %v3523 = vmul.f32 %v3518, %v3522
      %vm3524 = vweird.f32 %v3343
      %vm3525 = vweird.f32 %v3518
      %vm3526 = vmor %vm3524, %vm3525
      %v3527 = vsel %vm3526, %v3518, %v3523
      %v3528 = vrsqrt.pop %v3344
      %v3529 = vmul.f32 %v3528, %v3344
      %v3530 = vmul.f32 %v3529, %v3528
      %v3531 = vmul.f32 0.5, %v3530
      %v3532 = vsub.f32 1.5, %v3531
      %v3533 = vmul.f32 %v3528, %v3532
      %vm3534 = vweird.f32 %v3344
      %vm3535 = vweird.f32 %v3528
      %vm3536 = vmor %vm3534, %vm3535
      %v3537 = vsel %vm3536, %v3528, %v3533
      %v3538 = vrsqrt.pop %v3345
      %v3539 = vmul.f32 %v3538, %v3345
      %v3540 = vmul.f32 %v3539, %v3538
      %v3541 = vmul.f32 0.5, %v3540
      %v3542 = vsub.f32 1.5, %v3541
      %v3543 = vmul.f32 %v3538, %v3542
      %vm3544 = vweird.f32 %v3345
      %vm3545 = vweird.f32 %v3538
      %vm3546 = vmor %vm3544, %vm3545
      %v3547 = vsel %vm3546, %v3538, %v3543
      %v3548 = vrsqrt.pop %v3346
      %v3549 = vmul.f32 %v3548, %v3346
      %v3550 = vmul.f32 %v3549, %v3548
      %v3551 = vmul.f32 0.5, %v3550
      %v3552 = vsub.f32 1.5, %v3551
      %v3553 = vmul.f32 %v3548, %v3552
      %vm3554 = vweird.f32 %v3346
      %vm3555 = vweird.f32 %v3548
      %vm3556 = vmor %vm3554, %vm3555
      %v3557 = vsel %vm3556, %v3548, %v3553
      %v3558 = vrsqrt.pop %v3347
      %v3559 = vmul.f32 %v3558, %v3347
      %v3560 = vmul.f32 %v3559, %v3558
      %v3561 = vmul.f32 0.5, %v3560
      %v3562 = vsub.f32 1.5, %v3561
      %v3563 = vmul.f32 %v3558, %v3562
      %vm3564 = vweird.f32 %v3347
      %vm3565 = vweird.f32 %v3558
      %vm3566 = vmor %vm3564, %vm3565
      %v3567 = vsel %vm3566, %v3558, %v3563
      %v3568 = vrsqrt.pop %v3348
      %v3569 = vmul.f32 %v3568, %v3348
      %v3570 = vmul.f32 %v3569, %v3568
      %v3571 = vmul.f32 0.5, %v3570
      %v3572 = vsub.f32 1.5, %v3571
      %v3573 = vmul.f32 %v3568, %v3572
      %vm3574 = vweird.f32 %v3348
      %vm3575 = vweird.f32 %v3568
      %vm3576 = vmor %vm3574, %vm3575
      %v3577 = vsel %vm3576, %v3568, %v3573
      %v3578 = vrsqrt.pop %v3349
      %v3579 = vmul.f32 %v3578, %v3349
      %v3580 = vmul.f32 %v3579, %v3578
      %v3581 = vmul.f32 0.5, %v3580
      %v3582 = vsub.f32 1.5, %v3581
      %v3583 = vmul.f32 %v3578, %v3582
      %vm3584 = vweird.f32 %v3349
      %vm3585 = vweird.f32 %v3578
      %vm3586 = vmor %vm3584, %vm3585
      %v3587 = vsel %vm3586, %v3578, %v3583
      %v3588 = vrsqrt.pop %v3350
      %v3589 = vmul.f32 %v3588, %v3350
      %v3590 = vmul.f32 %v3589, %v3588
      %v3591 = vmul.f32 0.5, %v3590
      %v3592 = vsub.f32 1.5, %v3591
      %v3593 = vmul.f32 %v3588, %v3592
      %vm3594 = vweird.f32 %v3350
      %vm3595 = vweird.f32 %v3588
      %vm3596 = vmor %vm3594, %vm3595
      %v3597 = vsel %vm3596, %v3588, %v3593
      %v3598 = vrsqrt.pop %v3351
      %v3599 = vmul.f32 %v3598, %v3351
      %v3600 = vmul.f32 %v3599, %v3598
      %v3601 = vmul.f32 0.5, %v3600
      %v3602 = vsub.f32 1.5, %v3601
      %v3603 = vmul.f32 %v3598, %v3602
      %vm3604 = vweird.f32 %v3351
      %vm3605 = vweird.f32 %v3598
      %vm3606 = vmor %vm3604, %vm3605
      %v3607 = vsel %vm3606, %v3598, %v3603
      %v3608 = vrsqrt.pop %v3352
      %v3609 = vmul.f32 %v3608, %v3352
      %v3610 = vmul.f32 %v3609, %v3608
      %v3611 = vmul.f32 0.5, %v3610
      %v3612 = vsub.f32 1.5, %v3611
      %v3613 = vmul.f32 %v3608, %v3612
      %vm3614 = vweird.f32 %v3352
      %vm3615 = vweird.f32 %v3608
      %vm3616 = vmor %vm3614, %vm3615
      %v3617 = vsel %vm3616, %v3608, %v3613
      %v3618 = vrsqrt.pop %v3353
      %v3619 = vmul.f32 %v3618, %v3353
      %v3620 = vmul.f32 %v3619, %v3618
      %v3621 = vmul.f32 0.5, %v3620
      %v3622 = vsub.f32 1.5, %v3621
      %v3623 = vmul.f32 %v3618, %v3622
      %vm3624 = vweird.f32 %v3353
      %vm3625 = vweird.f32 %v3618
      %vm3626 = vmor %vm3624, %vm3625
      %v3627 = vsel %vm3626, %v3618, %v3623
      %v3628 = vrsqrt.pop %v3354
      %v3629 = vmul.f32 %v3628, %v3354
      %v3630 = vmul.f32 %v3629, %v3628
      %v3631 = vmul.f32 0.5, %v3630
      %v3632 = vsub.f32 1.5, %v3631
      %v3633 = vmul.f32 %v3628, %v3632
      %vm3634 = vweird.f32 %v3354
      %vm3635 = vweird.f32 %v3628
      %vm3636 = vmor %vm3634, %vm3635
      %v3637 = vsel %vm3636, %v3628, %v3633
      %v3638 = vrsqrt.pop %v3355
      %v3639 = vmul.f32 %v3638, %v3355
      %v3640 = vmul.f32 %v3639, %v3638
      %v3641 = vmul.f32 0.5, %v3640
      %v3642 = vsub.f32 1.5, %v3641
      %v3643 = vmul.f32 %v3638, %v3642
      %vm3644 = vweird.f32 %v3355
      %vm3645 = vweird.f32 %v3638
      %vm3646 = vmor %vm3644, %vm3645
      %v3647 = vsel %vm3646, %v3638, %v3643
      %v3648 = vrsqrt.pop %v3356
      %v3649 = vmul.f32 %v3648, %v3356
      %v3650 = vmul.f32 %v3649, %v3648
      %v3651 = vmul.f32 0.5, %v3650
      %v3652 = vsub.f32 1.5, %v3651
      %v3653 = vmul.f32 %v3648, %v3652
      %vm3654 = vweird.f32 %v3356
      %vm3655 = vweird.f32 %v3648
      %vm3656 = vmor %vm3654, %vm3655
      %v3657 = vsel %vm3656, %v3648, %v3653
      %v3658 = vrsqrt.pop %v3357
      %v3659 = vmul.f32 %v3658, %v3357
      %v3660 = vmul.f32 %v3659, %v3658
      %v3661 = vmul.f32 0.5, %v3660
      %v3662 = vsub.f32 1.5, %v3661
      %v3663 = vmul.f32 %v3658, %v3662
      %vm3664 = vweird.f32 %v3357
      %vm3665 = vweird.f32 %v3658
      %vm3666 = vmor %vm3664, %vm3665
      %v3667 = vsel %vm3666, %v3658, %v3663
      %v3668 = vrsqrt.pop %v3358
      %v3669 = vmul.f32 %v3668, %v3358
      %v3670 = vmul.f32 %v3669, %v3668
      %v3671 = vmul.f32 0.5, %v3670
      %v3672 = vsub.f32 1.5, %v3671
      %v3673 = vmul.f32 %v3668, %v3672
      %vm3674 = vweird.f32 %v3358
      %vm3675 = vweird.f32 %v3668
      %vm3676 = vmor %vm3674, %vm3675
      %v3677 = vsel %vm3676, %v3668, %v3673
      %v3678 = vrsqrt.pop %v3359
      %v3679 = vmul.f32 %v3678, %v3359
      %v3680 = vmul.f32 %v3679, %v3678
      %v3681 = vmul.f32 0.5, %v3680
      %v3682 = vsub.f32 1.5, %v3681
      %v3683 = vmul.f32 %v3678, %v3682
      %vm3684 = vweird.f32 %v3359
      %vm3685 = vweird.f32 %v3678
      %vm3686 = vmor %vm3684, %vm3685
      %v3687 = vsel %vm3686, %v3678, %v3683
      %v3688 = vrsqrt.pop %v3360
      %v3689 = vmul.f32 %v3688, %v3360
      %v3690 = vmul.f32 %v3689, %v3688
      %v3691 = vmul.f32 0.5, %v3690
      %v3692 = vsub.f32 1.5, %v3691
      %v3693 = vmul.f32 %v3688, %v3692
      %vm3694 = vweird.f32 %v3360
      %vm3695 = vweird.f32 %v3688
      %vm3696 = vmor %vm3694, %vm3695
      %v3697 = vsel %vm3696, %v3688, %v3693
      %v3698 = vrsqrt.pop %v3361
      %v3699 = vmul.f32 %v3698, %v3361
      %v3700 = vmul.f32 %v3699, %v3698
      %v3701 = vmul.f32 0.5, %v3700
      %v3702 = vsub.f32 1.5, %v3701
      %v3703 = vmul.f32 %v3698, %v3702
      %vm3704 = vweird.f32 %v3361
      %vm3705 = vweird.f32 %v3698
      %vm3706 = vmor %vm3704, %vm3705
      %v3707 = vsel %vm3706, %v3698, %v3703
      %v3708 = vrsqrt.pop %v3362
      %v3709 = vmul.f32 %v3708, %v3362
      %v3710 = vmul.f32 %v3709, %v3708
      %v3711 = vmul.f32 0.5, %v3710
      %v3712 = vsub.f32 1.5, %v3711
      %v3713 = vmul.f32 %v3708, %v3712
      %vm3714 = vweird.f32 %v3362
      %vm3715 = vweird.f32 %v3708
      %vm3716 = vmor %vm3714, %vm3715
      %v3717 = vsel %vm3716, %v3708, %v3713
      %v3718 = vrsqrt.pop %v3363
      %v3719 = vmul.f32 %v3718, %v3363
      %v3720 = vmul.f32 %v3719, %v3718
      %v3721 = vmul.f32 0.5, %v3720
      %v3722 = vsub.f32 1.5, %v3721
      %v3723 = vmul.f32 %v3718, %v3722
      %vm3724 = vweird.f32 %v3363
      %vm3725 = vweird.f32 %v3718
      %vm3726 = vmor %vm3724, %vm3725
      %v3727 = vsel %vm3726, %v3718, %v3723
      %v3728 = vrsqrt.pop %v3364
      %v3729 = vmul.f32 %v3728, %v3364
      %v3730 = vmul.f32 %v3729, %v3728
      %v3731 = vmul.f32 0.5, %v3730
      %v3732 = vsub.f32 1.5, %v3731
      %v3733 = vmul.f32 %v3728, %v3732
      %vm3734 = vweird.f32 %v3364
      %vm3735 = vweird.f32 %v3728
      %vm3736 = vmor %vm3734, %vm3735
      %v3737 = vsel %vm3736, %v3728, %v3733
      %v3738 = vrsqrt.pop %v3365
      %v3739 = vmul.f32 %v3738, %v3365
      %v3740 = vmul.f32 %v3739, %v3738
      %v3741 = vmul.f32 0.5, %v3740
      %v3742 = vsub.f32 1.5, %v3741
      %v3743 = vmul.f32 %v3738, %v3742
      %vm3744 = vweird.f32 %v3365
      %vm3745 = vweird.f32 %v3738
      %vm3746 = vmor %vm3744, %vm3745
      %v3747 = vsel %vm3746, %v3738, %v3743
      %v3748 = vrsqrt.pop %v3366
      %v3749 = vmul.f32 %v3748, %v3366
      %v3750 = vmul.f32 %v3749, %v3748
      %v3751 = vmul.f32 0.5, %v3750
      %v3752 = vsub.f32 1.5, %v3751
      %v3753 = vmul.f32 %v3748, %v3752
      %vm3754 = vweird.f32 %v3366
      %vm3755 = vweird.f32 %v3748
      %vm3756 = vmor %vm3754, %vm3755
      %v3757 = vsel %vm3756, %v3748, %v3753
      %v3758 = vrsqrt.pop %v3367
      %v3759 = vmul.f32 %v3758, %v3367
      %v3760 = vmul.f32 %v3759, %v3758
      %v3761 = vmul.f32 0.5, %v3760
      %v3762 = vsub.f32 1.5, %v3761
      %v3763 = vmul.f32 %v3758, %v3762
      %vm3764 = vweird.f32 %v3367
      %vm3765 = vweird.f32 %v3758
      %vm3766 = vmor %vm3764, %vm3765
      %v3767 = vsel %vm3766, %v3758, %v3763
      %v3768 = vmul.f32 %v3088, %v3377
      %v3769 = vmul.f32 %v3089, %v3387
      %v3770 = vmul.f32 %v3090, %v3397
      %v3771 = vmul.f32 %v3091, %v3407
      %v3772 = vmul.f32 %v3092, %v3417
      %v3773 = vmul.f32 %v3093, %v3427
      %v3774 = vmul.f32 %v3094, %v3437
      %v3775 = vmul.f32 %v3095, %v3447
      %v3776 = vmul.f32 %v3096, %v3457
      %v3777 = vmul.f32 %v3097, %v3467
      %v3778 = vmul.f32 %v3098, %v3477
      %v3779 = vmul.f32 %v3099, %v3487
      %v3780 = vmul.f32 %v3100, %v3497
      %v3781 = vmul.f32 %v3101, %v3507
      %v3782 = vmul.f32 %v3102, %v3517
      %v3783 = vmul.f32 %v3103, %v3527
      %v3784 = vmul.f32 %v3104, %v3537
      %v3785 = vmul.f32 %v3105, %v3547
      %v3786 = vmul.f32 %v3106, %v3557
      %v3787 = vmul.f32 %v3107, %v3567
      %v3788 = vmul.f32 %v3108, %v3577
      %v3789 = vmul.f32 %v3109, %v3587
      %v3790 = vmul.f32 %v3110, %v3597
      %v3791 = vmul.f32 %v3111, %v3607
      %v3792 = vmul.f32 %v3112, %v3617
      %v3793 = vmul.f32 %v3113, %v3627
      %v3794 = vmul.f32 %v3114, %v3637
      %v3795 = vmul.f32 %v3115, %v3647
      %v3796 = vmul.f32 %v3116, %v3657
      %v3797 = vmul.f32 %v3117, %v3667
      %v3798 = vmul.f32 %v3118, %v3677
      %v3799 = vmul.f32 %v3119, %v3687
      %v3800 = vmul.f32 %v3120, %v3697
      %v3801 = vmul.f32 %v3121, %v3707
      %v3802 = vmul.f32 %v3122, %v3717
      %v3803 = vmul.f32 %v3123, %v3727
      %v3804 = vmul.f32 %v3124, %v3737
      %v3805 = vmul.f32 %v3125, %v3747
      %v3806 = vmul.f32 %v3126, %v3757
      %v3807 = vmul.f32 %v3127, %v3767
      %v3808 = vld [vmem:[%s6] sm:$0xff]
      %v3809 = vld [vmem:[%s6 + $0x8] sm:$0xff]
      %v3810 = vld [vmem:[%s6 + $0x10] sm:$0xff]
      %v3811 = vld [vmem:[%s6 + $0x18] sm:$0xff]
      %v3812 = vld [vmem:[%s6 + $0x20] sm:$0xff]
      %v3813 = vld [vmem:[%s6 + $0x28] sm:$0xff]
      %v3814 = vld [vmem:[%s6 + $0x30] sm:$0xff]
      %v3815 = vld [vmem:[%s6 + $0x38] sm:$0xff]
      %v3816 = vld [vmem:[%s6 + $0x40] sm:$0xff]
      %v3817 = vld [vmem:[%s6 + $0x48] sm:$0xff]
      %v3818 = vld [vmem:[%s6 + $0x50] sm:$0xff]
      %v3819 = vld [vmem:[%s6 + $0x58] sm:$0xff]
      %v3820 = vld [vmem:[%s6 + $0x60] sm:$0xff]
      %v3821 = vld [vmem:[%s6 + $0x68] sm:$0xff]
      %v3822 = vld [vmem:[%s6 + $0x70] sm:$0xff]
      %v3823 = vld [vmem:[%s6 + $0x78] sm:$0xff]
      %v3824 = vld [vmem:[%s6 + $0x80] sm:$0xff]
      %v3825 = vld [vmem:[%s6 + $0x88] sm:$0xff]
      %v3826 = vld [vmem:[%s6 + $0x90] sm:$0xff]
      %v3827 = vld [vmem:[%s6 + $0x98] sm:$0xff]
      %v3828 = vld [vmem:[%s6 + $0xa0] sm:$0xff]
      %v3829 = vld [vmem:[%s6 + $0xa8] sm:$0xff]
      %v3830 = vld [vmem:[%s6 + $0xb0] sm:$0xff]
      %v3831 = vld [vmem:[%s6 + $0xb8] sm:$0xff]
      %v3832 = vld [vmem:[%s6 + $0xc0] sm:$0xff]
      %v3833 = vld [vmem:[%s6 + $0xc8] sm:$0xff]
      %v3834 = vld [vmem:[%s6 + $0xd0] sm:$0xff]
      %v3835 = vld [vmem:[%s6 + $0xd8] sm:$0xff]
      %v3836 = vld [vmem:[%s6 + $0xe0] sm:$0xff]
      %v3837 = vld [vmem:[%s6 + $0xe8] sm:$0xff]
      %v3838 = vld [vmem:[%s6 + $0xf0] sm:$0xff]
      %v3839 = vld [vmem:[%s6 + $0xf8] sm:$0xff]
      %v3841 = vsel %vm470, %v3768, 0
      %v3844 = vsel %vm470, %v3769, 0
      %v3847 = vsel %vm470, %v3770, 0
      %v3850 = vsel %vm470, %v3771, 0
      %v3853 = vsel %vm470, %v3772, 0
      %v3856 = vsel %vm470, %v3773, 0
      %v3859 = vsel %vm470, %v3774, 0
      %v3862 = vsel %vm470, %v3775, 0
      %v3865 = vsel %vm470, %v3776, 0
      %v3868 = vsel %vm470, %v3777, 0
      %v3871 = vsel %vm470, %v3778, 0
      %v3874 = vsel %vm470, %v3779, 0
      %v3877 = vsel %vm470, %v3780, 0
      %v3880 = vsel %vm470, %v3781, 0
      %v3883 = vsel %vm470, %v3782, 0
      %v3886 = vsel %vm470, %v3783, 0
      %v3889 = vsel %vm470, %v3784, 0
      %v3892 = vsel %vm470, %v3785, 0
      %v3895 = vsel %vm470, %v3786, 0
      %v3898 = vsel %vm470, %v3787, 0
      %v3901 = vsel %vm470, %v3788, 0
      %v3904 = vsel %vm470, %v3789, 0
      %v3907 = vsel %vm470, %v3790, 0
      %v3910 = vsel %vm470, %v3791, 0
      %v3913 = vsel %vm470, %v3792, 0
      %v3916 = vsel %vm470, %v3793, 0
      %v3919 = vsel %vm470, %v3794, 0
      %v3922 = vsel %vm470, %v3795, 0
      %v3925 = vsel %vm470, %v3796, 0
      %v3928 = vsel %vm470, %v3797, 0
      %v3931 = vsel %vm470, %v3798, 0
      %v3934 = vsel %vm470, %v3799, 0
      %v3937 = vsel %vm470, %v3800, 0
      %v3940 = vsel %vm470, %v3801, 0
      %v3943 = vsel %vm470, %v3802, 0
      %v3946 = vsel %vm470, %v3803, 0
      %v3949 = vsel %vm470, %v3804, 0
      %v3952 = vsel %vm470, %v3805, 0
      %v3955 = vsel %vm470, %v3806, 0
      %v3958 = vsel %vm470, %v3807, 0
      %3960 = vmatpush.msra.mxu0 0.0
      %3961 = vmatpush.msra.mxu0 0.0
      %3962 = vmatpush.msra.mxu0 0.0
      %3963 = vmatpush.msra.mxu0 0.0
      %3964 = vmatpush.msra.mxu0 0.0
      %3965 = vmatpush.msra.mxu0 0.0
      %3966 = vmatpush.msra.mxu0 0.0
      %3967 = vmatpush.msra.mxu0 0.0
      %3968 = vmatpush.msra.mxu0 %v3836
      %3969 = vmatpush.msra.mxu0 %v3832
      %3970 = vmatpush.msra.mxu0 %v3828
      %3971 = vmatpush.msra.mxu0 %v3824
      %3972 = vmatpush.msra.mxu0 %v3820
      %3973 = vmatpush.msra.mxu0 %v3816
      %3974 = vmatpush.msra.mxu0 %v3812
      %3975 = vmatpush.msra.mxu0 %v3808
      %3976 = vmatmul.f32.gmra.mxu0 %v3841
      %v3977 = vpop.f32.mrf.mxu0
      %v3978 = vadd.f32 0.0, %v3977
      %3979 = vmatmul.f32.gmra.mxu0 %v3844
      %v3980 = vpop.f32.mrf.mxu0
      %v3981 = vadd.f32 0.0, %v3980
      %3982 = vmatmul.f32.gmra.mxu0 %v3847
      %v3983 = vpop.f32.mrf.mxu0
      %v3984 = vadd.f32 0.0, %v3983
      %3985 = vmatmul.f32.gmra.mxu0 %v3850
      %v3986 = vpop.f32.mrf.mxu0
      %v3987 = vadd.f32 0.0, %v3986
      %3988 = vmatmul.f32.gmra.mxu0 %v3853
      %v3989 = vpop.f32.mrf.mxu0
      %v3990 = vadd.f32 0.0, %v3989
      %3991 = vmatmul.f32.gmra.mxu0 %v3856
      %v3992 = vpop.f32.mrf.mxu0
      %v3993 = vadd.f32 0.0, %v3992
      %3994 = vmatmul.f32.gmra.mxu0 %v3859
      %v3995 = vpop.f32.mrf.mxu0
      %v3996 = vadd.f32 0.0, %v3995
      %3997 = vmatmul.f32.gmra.mxu0 %v3862
      %v3998 = vpop.f32.mrf.mxu0
      %v3999 = vadd.f32 0.0, %v3998
      %4000 = vmatmul.f32.gmra.mxu0 %v3865
      %v4001 = vpop.f32.mrf.mxu0
      %v4002 = vadd.f32 0.0, %v4001
      %4003 = vmatmul.f32.gmra.mxu0 %v3868
      %v4004 = vpop.f32.mrf.mxu0
      %v4005 = vadd.f32 0.0, %v4004
      %4006 = vmatmul.f32.gmra.mxu0 %v3871
      %v4007 = vpop.f32.mrf.mxu0
      %v4008 = vadd.f32 0.0, %v4007
      %4009 = vmatmul.f32.gmra.mxu0 %v3874
      %v4010 = vpop.f32.mrf.mxu0
      %v4011 = vadd.f32 0.0, %v4010
      %4012 = vmatmul.f32.gmra.mxu0 %v3877
      %v4013 = vpop.f32.mrf.mxu0
      %v4014 = vadd.f32 0.0, %v4013
      %4015 = vmatmul.f32.gmra.mxu0 %v3880
      %v4016 = vpop.f32.mrf.mxu0
      %v4017 = vadd.f32 0.0, %v4016
      %4018 = vmatmul.f32.gmra.mxu0 %v3883
      %v4019 = vpop.f32.mrf.mxu0
      %v4020 = vadd.f32 0.0, %v4019
      %4021 = vmatmul.f32.gmra.mxu0 %v3886
      %v4022 = vpop.f32.mrf.mxu0
      %v4023 = vadd.f32 0.0, %v4022
      %4024 = vmatmul.f32.gmra.mxu0 %v3889
      %v4025 = vpop.f32.mrf.mxu0
      %v4026 = vadd.f32 0.0, %v4025
      %4027 = vmatmul.f32.gmra.mxu0 %v3892
      %v4028 = vpop.f32.mrf.mxu0
      %v4029 = vadd.f32 0.0, %v4028
      %4030 = vmatmul.f32.gmra.mxu0 %v3895
      %v4031 = vpop.f32.mrf.mxu0
      %v4032 = vadd.f32 0.0, %v4031
      %4033 = vmatmul.f32.gmra.mxu0 %v3898
      %v4034 = vpop.f32.mrf.mxu0
      %v4035 = vadd.f32 0.0, %v4034
      %4036 = vmatmul.f32.gmra.mxu0 %v3901
      %v4037 = vpop.f32.mrf.mxu0
      %v4038 = vadd.f32 0.0, %v4037
      %4039 = vmatmul.f32.gmra.mxu0 %v3904
      %v4040 = vpop.f32.mrf.mxu0
      %v4041 = vadd.f32 0.0, %v4040
      %4042 = vmatmul.f32.gmra.mxu0 %v3907
      %v4043 = vpop.f32.mrf.mxu0
      %v4044 = vadd.f32 0.0, %v4043
      %4045 = vmatmul.f32.gmra.mxu0 %v3910
      %v4046 = vpop.f32.mrf.mxu0
      %v4047 = vadd.f32 0.0, %v4046
      %4048 = vmatmul.f32.gmra.mxu0 %v3913
      %v4049 = vpop.f32.mrf.mxu0
      %v4050 = vadd.f32 0.0, %v4049
      %4051 = vmatmul.f32.gmra.mxu0 %v3916
      %v4052 = vpop.f32.mrf.mxu0
      %v4053 = vadd.f32 0.0, %v4052
      %4054 = vmatmul.f32.gmra.mxu0 %v3919
      %v4055 = vpop.f32.mrf.mxu0
      %v4056 = vadd.f32 0.0, %v4055
      %4057 = vmatmul.f32.gmra.mxu0 %v3922
      %v4058 = vpop.f32.mrf.mxu0
      %v4059 = vadd.f32 0.0, %v4058
      %4060 = vmatmul.f32.gmra.mxu0 %v3925
      %v4061 = vpop.f32.mrf.mxu0
      %v4062 = vadd.f32 0.0, %v4061
      %4063 = vmatmul.f32.gmra.mxu0 %v3928
      %v4064 = vpop.f32.mrf.mxu0
      %v4065 = vadd.f32 0.0, %v4064
      %4066 = vmatmul.f32.gmra.mxu0 %v3931
      %v4067 = vpop.f32.mrf.mxu0
      %v4068 = vadd.f32 0.0, %v4067
      %4069 = vmatmul.f32.gmra.mxu0 %v3934
      %v4070 = vpop.f32.mrf.mxu0
      %v4071 = vadd.f32 0.0, %v4070
      %4072 = vmatmul.f32.gmra.mxu0 %v3937
      %v4073 = vpop.f32.mrf.mxu0
      %v4074 = vadd.f32 0.0, %v4073
      %4075 = vmatmul.f32.gmra.mxu0 %v3940
      %v4076 = vpop.f32.mrf.mxu0
      %v4077 = vadd.f32 0.0, %v4076
      %4078 = vmatmul.f32.gmra.mxu0 %v3943
      %v4079 = vpop.f32.mrf.mxu0
      %v4080 = vadd.f32 0.0, %v4079
      %4081 = vmatmul.f32.gmra.mxu0 %v3946
      %v4082 = vpop.f32.mrf.mxu0
      %v4083 = vadd.f32 0.0, %v4082
      %4084 = vmatmul.f32.gmra.mxu0 %v3949
      %v4085 = vpop.f32.mrf.mxu0
      %v4086 = vadd.f32 0.0, %v4085
      %4087 = vmatmul.f32.gmra.mxu0 %v3952
      %v4088 = vpop.f32.mrf.mxu0
      %v4089 = vadd.f32 0.0, %v4088
      %4090 = vmatmul.f32.gmra.mxu0 %v3955
      %v4091 = vpop.f32.mrf.mxu0
      %v4092 = vadd.f32 0.0, %v4091
      %4093 = vmatmul.f32.gmra.mxu0 %v3958
      %v4094 = vpop.f32.mrf.mxu0
      %v4095 = vadd.f32 0.0, %v4094
      %4096 = vdwg.mxu0
      %4097 = vmatpush.msra.mxu0 0.0
      %4098 = vmatpush.msra.mxu0 0.0
      %4099 = vmatpush.msra.mxu0 0.0
      %4100 = vmatpush.msra.mxu0 0.0
      %4101 = vmatpush.msra.mxu0 0.0
      %4102 = vmatpush.msra.mxu0 0.0
      %4103 = vmatpush.msra.mxu0 0.0
      %4104 = vmatpush.msra.mxu0 0.0
      %4105 = vmatpush.msra.mxu0 %v3837
      %4106 = vmatpush.msra.mxu0 %v3833
      %4107 = vmatpush.msra.mxu0 %v3829
      %4108 = vmatpush.msra.mxu0 %v3825
      %4109 = vmatpush.msra.mxu0 %v3821
      %4110 = vmatpush.msra.mxu0 %v3817
      %4111 = vmatpush.msra.mxu0 %v3813
      %4112 = vmatpush.msra.mxu0 %v3809
      %4113 = vmatmul.f32.gmra.mxu0 %v3841
      %v4114 = vpop.f32.mrf.mxu0
      %v4115 = vadd.f32 0.0, %v4114
      %4116 = vmatmul.f32.gmra.mxu0 %v3844
      %v4117 = vpop.f32.mrf.mxu0
      %v4118 = vadd.f32 0.0, %v4117
      %4119 = vmatmul.f32.gmra.mxu0 %v3847
      %v4120 = vpop.f32.mrf.mxu0
      %v4121 = vadd.f32 0.0, %v4120
      %4122 = vmatmul.f32.gmra.mxu0 %v3850
      %v4123 = vpop.f32.mrf.mxu0
      %v4124 = vadd.f32 0.0, %v4123
      %4125 = vmatmul.f32.gmra.mxu0 %v3853
      %v4126 = vpop.f32.mrf.mxu0
      %v4127 = vadd.f32 0.0, %v4126
      %4128 = vmatmul.f32.gmra.mxu0 %v3856
      %v4129 = vpop.f32.mrf.mxu0
      %v4130 = vadd.f32 0.0, %v4129
      %4131 = vmatmul.f32.gmra.mxu0 %v3859
      %v4132 = vpop.f32.mrf.mxu0
      %v4133 = vadd.f32 0.0, %v4132
      %4134 = vmatmul.f32.gmra.mxu0 %v3862
      %v4135 = vpop.f32.mrf.mxu0
      %v4136 = vadd.f32 0.0, %v4135
      %4137 = vmatmul.f32.gmra.mxu0 %v3865
      %v4138 = vpop.f32.mrf.mxu0
      %v4139 = vadd.f32 0.0, %v4138
      %4140 = vmatmul.f32.gmra.mxu0 %v3868
      %v4141 = vpop.f32.mrf.mxu0
      %v4142 = vadd.f32 0.0, %v4141
      %4143 = vmatmul.f32.gmra.mxu0 %v3871
      %v4144 = vpop.f32.mrf.mxu0
      %v4145 = vadd.f32 0.0, %v4144
      %4146 = vmatmul.f32.gmra.mxu0 %v3874
      %v4147 = vpop.f32.mrf.mxu0
      %v4148 = vadd.f32 0.0, %v4147
      %4149 = vmatmul.f32.gmra.mxu0 %v3877
      %v4150 = vpop.f32.mrf.mxu0
      %v4151 = vadd.f32 0.0, %v4150
      %4152 = vmatmul.f32.gmra.mxu0 %v3880
      %v4153 = vpop.f32.mrf.mxu0
      %v4154 = vadd.f32 0.0, %v4153
      %4155 = vmatmul.f32.gmra.mxu0 %v3883
      %v4156 = vpop.f32.mrf.mxu0
      %v4157 = vadd.f32 0.0, %v4156
      %4158 = vmatmul.f32.gmra.mxu0 %v3886
      %v4159 = vpop.f32.mrf.mxu0
      %v4160 = vadd.f32 0.0, %v4159
      %4161 = vmatmul.f32.gmra.mxu0 %v3889
      %v4162 = vpop.f32.mrf.mxu0
      %v4163 = vadd.f32 0.0, %v4162
      %4164 = vmatmul.f32.gmra.mxu0 %v3892
      %v4165 = vpop.f32.mrf.mxu0
      %v4166 = vadd.f32 0.0, %v4165
      %4167 = vmatmul.f32.gmra.mxu0 %v3895
      %v4168 = vpop.f32.mrf.mxu0
      %v4169 = vadd.f32 0.0, %v4168
      %4170 = vmatmul.f32.gmra.mxu0 %v3898
      %v4171 = vpop.f32.mrf.mxu0
      %v4172 = vadd.f32 0.0, %v4171
      %4173 = vmatmul.f32.gmra.mxu0 %v3901
      %v4174 = vpop.f32.mrf.mxu0
      %v4175 = vadd.f32 0.0, %v4174
      %4176 = vmatmul.f32.gmra.mxu0 %v3904
      %v4177 = vpop.f32.mrf.mxu0
      %v4178 = vadd.f32 0.0, %v4177
      %4179 = vmatmul.f32.gmra.mxu0 %v3907
      %v4180 = vpop.f32.mrf.mxu0
      %v4181 = vadd.f32 0.0, %v4180
      %4182 = vmatmul.f32.gmra.mxu0 %v3910
      %v4183 = vpop.f32.mrf.mxu0
      %v4184 = vadd.f32 0.0, %v4183
      %4185 = vmatmul.f32.gmra.mxu0 %v3913
      %v4186 = vpop.f32.mrf.mxu0
      %v4187 = vadd.f32 0.0, %v4186
      %4188 = vmatmul.f32.gmra.mxu0 %v3916
      %v4189 = vpop.f32.mrf.mxu0
      %v4190 = vadd.f32 0.0, %v4189
      %4191 = vmatmul.f32.gmra.mxu0 %v3919
      %v4192 = vpop.f32.mrf.mxu0
      %v4193 = vadd.f32 0.0, %v4192
      %4194 = vmatmul.f32.gmra.mxu0 %v3922
      %v4195 = vpop.f32.mrf.mxu0
      %v4196 = vadd.f32 0.0, %v4195
      %4197 = vmatmul.f32.gmra.mxu0 %v3925
      %v4198 = vpop.f32.mrf.mxu0
      %v4199 = vadd.f32 0.0, %v4198
      %4200 = vmatmul.f32.gmra.mxu0 %v3928
      %v4201 = vpop.f32.mrf.mxu0
      %v4202 = vadd.f32 0.0, %v4201
      %4203 = vmatmul.f32.gmra.mxu0 %v3931
      %v4204 = vpop.f32.mrf.mxu0
      %v4205 = vadd.f32 0.0, %v4204
      %4206 = vmatmul.f32.gmra.mxu0 %v3934
      %v4207 = vpop.f32.mrf.mxu0
      %v4208 = vadd.f32 0.0, %v4207
      %4209 = vmatmul.f32.gmra.mxu0 %v3937
      %v4210 = vpop.f32.mrf.mxu0
      %v4211 = vadd.f32 0.0, %v4210
      %4212 = vmatmul.f32.gmra.mxu0 %v3940
      %v4213 = vpop.f32.mrf.mxu0
      %v4214 = vadd.f32 0.0, %v4213
      %4215 = vmatmul.f32.gmra.mxu0 %v3943
      %v4216 = vpop.f32.mrf.mxu0
      %v4217 = vadd.f32 0.0, %v4216
      %4218 = vmatmul.f32.gmra.mxu0 %v3946
      %v4219 = vpop.f32.mrf.mxu0
      %v4220 = vadd.f32 0.0, %v4219
      %4221 = vmatmul.f32.gmra.mxu0 %v3949
      %v4222 = vpop.f32.mrf.mxu0
      %v4223 = vadd.f32 0.0, %v4222
      %4224 = vmatmul.f32.gmra.mxu0 %v3952
      %v4225 = vpop.f32.mrf.mxu0
      %v4226 = vadd.f32 0.0, %v4225
      %4227 = vmatmul.f32.gmra.mxu0 %v3955
      %v4228 = vpop.f32.mrf.mxu0
      %v4229 = vadd.f32 0.0, %v4228
      %4230 = vmatmul.f32.gmra.mxu0 %v3958
      %v4231 = vpop.f32.mrf.mxu0
      %v4232 = vadd.f32 0.0, %v4231
      %4233 = vdwg.mxu0
      %4234 = vmatpush.msra.mxu0 0.0
      %4235 = vmatpush.msra.mxu0 0.0
      %4236 = vmatpush.msra.mxu0 0.0
      %4237 = vmatpush.msra.mxu0 0.0
      %4238 = vmatpush.msra.mxu0 0.0
      %4239 = vmatpush.msra.mxu0 0.0
      %4240 = vmatpush.msra.mxu0 0.0
      %4241 = vmatpush.msra.mxu0 0.0
      %4242 = vmatpush.msra.mxu0 %v3838
      %4243 = vmatpush.msra.mxu0 %v3834
      %4244 = vmatpush.msra.mxu0 %v3830
      %4245 = vmatpush.msra.mxu0 %v3826
      %4246 = vmatpush.msra.mxu0 %v3822
      %4247 = vmatpush.msra.mxu0 %v3818
      %4248 = vmatpush.msra.mxu0 %v3814
      %4249 = vmatpush.msra.mxu0 %v3810
      %4250 = vmatmul.f32.gmra.mxu0 %v3841
      %v4251 = vpop.f32.mrf.mxu0
      %v4252 = vadd.f32 0.0, %v4251
      %4253 = vmatmul.f32.gmra.mxu0 %v3844
      %v4254 = vpop.f32.mrf.mxu0
      %v4255 = vadd.f32 0.0, %v4254
      %4256 = vmatmul.f32.gmra.mxu0 %v3847
      %v4257 = vpop.f32.mrf.mxu0
      %v4258 = vadd.f32 0.0, %v4257
      %4259 = vmatmul.f32.gmra.mxu0 %v3850
      %v4260 = vpop.f32.mrf.mxu0
      %v4261 = vadd.f32 0.0, %v4260
      %4262 = vmatmul.f32.gmra.mxu0 %v3853
      %v4263 = vpop.f32.mrf.mxu0
      %v4264 = vadd.f32 0.0, %v4263
      %4265 = vmatmul.f32.gmra.mxu0 %v3856
      %v4266 = vpop.f32.mrf.mxu0
      %v4267 = vadd.f32 0.0, %v4266
      %4268 = vmatmul.f32.gmra.mxu0 %v3859
      %v4269 = vpop.f32.mrf.mxu0
      %v4270 = vadd.f32 0.0, %v4269
      %4271 = vmatmul.f32.gmra.mxu0 %v3862
      %v4272 = vpop.f32.mrf.mxu0
      %v4273 = vadd.f32 0.0, %v4272
      %4274 = vmatmul.f32.gmra.mxu0 %v3865
      %v4275 = vpop.f32.mrf.mxu0
      %v4276 = vadd.f32 0.0, %v4275
      %4277 = vmatmul.f32.gmra.mxu0 %v3868
      %v4278 = vpop.f32.mrf.mxu0
      %v4279 = vadd.f32 0.0, %v4278
      %4280 = vmatmul.f32.gmra.mxu0 %v3871
      %v4281 = vpop.f32.mrf.mxu0
      %v4282 = vadd.f32 0.0, %v4281
      %4283 = vmatmul.f32.gmra.mxu0 %v3874
      %v4284 = vpop.f32.mrf.mxu0
      %v4285 = vadd.f32 0.0, %v4284
      %4286 = vmatmul.f32.gmra.mxu0 %v3877
      %v4287 = vpop.f32.mrf.mxu0
      %v4288 = vadd.f32 0.0, %v4287
      %4289 = vmatmul.f32.gmra.mxu0 %v3880
      %v4290 = vpop.f32.mrf.mxu0
      %v4291 = vadd.f32 0.0, %v4290
      %4292 = vmatmul.f32.gmra.mxu0 %v3883
      %v4293 = vpop.f32.mrf.mxu0
      %v4294 = vadd.f32 0.0, %v4293
      %4295 = vmatmul.f32.gmra.mxu0 %v3886
      %v4296 = vpop.f32.mrf.mxu0
      %v4297 = vadd.f32 0.0, %v4296
      %4298 = vmatmul.f32.gmra.mxu0 %v3889
      %v4299 = vpop.f32.mrf.mxu0
      %v4300 = vadd.f32 0.0, %v4299
      %4301 = vmatmul.f32.gmra.mxu0 %v3892
      %v4302 = vpop.f32.mrf.mxu0
      %v4303 = vadd.f32 0.0, %v4302
      %4304 = vmatmul.f32.gmra.mxu0 %v3895
      %v4305 = vpop.f32.mrf.mxu0
      %v4306 = vadd.f32 0.0, %v4305
      %4307 = vmatmul.f32.gmra.mxu0 %v3898
      %v4308 = vpop.f32.mrf.mxu0
      %v4309 = vadd.f32 0.0, %v4308
      %4310 = vmatmul.f32.gmra.mxu0 %v3901
      %v4311 = vpop.f32.mrf.mxu0
      %v4312 = vadd.f32 0.0, %v4311
      %4313 = vmatmul.f32.gmra.mxu0 %v3904
      %v4314 = vpop.f32.mrf.mxu0
      %v4315 = vadd.f32 0.0, %v4314
      %4316 = vmatmul.f32.gmra.mxu0 %v3907
      %v4317 = vpop.f32.mrf.mxu0
      %v4318 = vadd.f32 0.0, %v4317
      %4319 = vmatmul.f32.gmra.mxu0 %v3910
      %v4320 = vpop.f32.mrf.mxu0
      %v4321 = vadd.f32 0.0, %v4320
      %4322 = vmatmul.f32.gmra.mxu0 %v3913
      %v4323 = vpop.f32.mrf.mxu0
      %v4324 = vadd.f32 0.0, %v4323
      %4325 = vmatmul.f32.gmra.mxu0 %v3916
      %v4326 = vpop.f32.mrf.mxu0
      %v4327 = vadd.f32 0.0, %v4326
      %4328 = vmatmul.f32.gmra.mxu0 %v3919
      %v4329 = vpop.f32.mrf.mxu0
      %v4330 = vadd.f32 0.0, %v4329
      %4331 = vmatmul.f32.gmra.mxu0 %v3922
      %v4332 = vpop.f32.mrf.mxu0
      %v4333 = vadd.f32 0.0, %v4332
      %4334 = vmatmul.f32.gmra.mxu0 %v3925
      %v4335 = vpop.f32.mrf.mxu0
      %v4336 = vadd.f32 0.0, %v4335
      %4337 = vmatmul.f32.gmra.mxu0 %v3928
      %v4338 = vpop.f32.mrf.mxu0
      %v4339 = vadd.f32 0.0, %v4338
      %4340 = vmatmul.f32.gmra.mxu0 %v3931
      %v4341 = vpop.f32.mrf.mxu0
      %v4342 = vadd.f32 0.0, %v4341
      %4343 = vmatmul.f32.gmra.mxu0 %v3934
      %v4344 = vpop.f32.mrf.mxu0
      %v4345 = vadd.f32 0.0, %v4344
      %4346 = vmatmul.f32.gmra.mxu0 %v3937
      %v4347 = vpop.f32.mrf.mxu0
      %v4348 = vadd.f32 0.0, %v4347
      %4349 = vmatmul.f32.gmra.mxu0 %v3940
      %v4350 = vpop.f32.mrf.mxu0
      %v4351 = vadd.f32 0.0, %v4350
      %4352 = vmatmul.f32.gmra.mxu0 %v3943
      %v4353 = vpop.f32.mrf.mxu0
      %v4354 = vadd.f32 0.0, %v4353
      %4355 = vmatmul.f32.gmra.mxu0 %v3946
      %v4356 = vpop.f32.mrf.mxu0
      %v4357 = vadd.f32 0.0, %v4356
      %4358 = vmatmul.f32.gmra.mxu0 %v3949
      %v4359 = vpop.f32.mrf.mxu0
      %v4360 = vadd.f32 0.0, %v4359
      %4361 = vmatmul.f32.gmra.mxu0 %v3952
      %v4362 = vpop.f32.mrf.mxu0
      %v4363 = vadd.f32 0.0, %v4362
      %4364 = vmatmul.f32.gmra.mxu0 %v3955
      %v4365 = vpop.f32.mrf.mxu0
      %v4366 = vadd.f32 0.0, %v4365
      %4367 = vmatmul.f32.gmra.mxu0 %v3958
      %v4368 = vpop.f32.mrf.mxu0
      %v4369 = vadd.f32 0.0, %v4368
      %4370 = vdwg.mxu0
      %4371 = vmatpush.msra.mxu0 0.0
      %4372 = vmatpush.msra.mxu0 0.0
      %4373 = vmatpush.msra.mxu0 0.0
      %4374 = vmatpush.msra.mxu0 0.0
      %4375 = vmatpush.msra.mxu0 0.0
      %4376 = vmatpush.msra.mxu0 0.0
      %4377 = vmatpush.msra.mxu0 0.0
      %4378 = vmatpush.msra.mxu0 0.0
      %4379 = vmatpush.msra.mxu0 %v3839
      %4380 = vmatpush.msra.mxu0 %v3835
      %4381 = vmatpush.msra.mxu0 %v3831
      %4382 = vmatpush.msra.mxu0 %v3827
      %4383 = vmatpush.msra.mxu0 %v3823
      %4384 = vmatpush.msra.mxu0 %v3819
      %4385 = vmatpush.msra.mxu0 %v3815
      %4386 = vmatpush.msra.mxu0 %v3811
      %4387 = vmatmul.f32.gmra.mxu0 %v3841
      %v4388 = vpop.f32.mrf.mxu0
      %v4389 = vadd.f32 0.0, %v4388
      %4390 = vmatmul.f32.gmra.mxu0 %v3844
      %v4391 = vpop.f32.mrf.mxu0
      %v4392 = vadd.f32 0.0, %v4391
      %4393 = vmatmul.f32.gmra.mxu0 %v3847
      %v4394 = vpop.f32.mrf.mxu0
      %v4395 = vadd.f32 0.0, %v4394
      %4396 = vmatmul.f32.gmra.mxu0 %v3850
      %v4397 = vpop.f32.mrf.mxu0
      %v4398 = vadd.f32 0.0, %v4397
      %4399 = vmatmul.f32.gmra.mxu0 %v3853
      %v4400 = vpop.f32.mrf.mxu0
      %v4401 = vadd.f32 0.0, %v4400
      %4402 = vmatmul.f32.gmra.mxu0 %v3856
      %v4403 = vpop.f32.mrf.mxu0
      %v4404 = vadd.f32 0.0, %v4403
      %4405 = vmatmul.f32.gmra.mxu0 %v3859
      %v4406 = vpop.f32.mrf.mxu0
      %v4407 = vadd.f32 0.0, %v4406
      %4408 = vmatmul.f32.gmra.mxu0 %v3862
      %v4409 = vpop.f32.mrf.mxu0
      %v4410 = vadd.f32 0.0, %v4409
      %4411 = vmatmul.f32.gmra.mxu0 %v3865
      %v4412 = vpop.f32.mrf.mxu0
      %v4413 = vadd.f32 0.0, %v4412
      %4414 = vmatmul.f32.gmra.mxu0 %v3868
      %v4415 = vpop.f32.mrf.mxu0
      %v4416 = vadd.f32 0.0, %v4415
      %4417 = vmatmul.f32.gmra.mxu0 %v3871
      %v4418 = vpop.f32.mrf.mxu0
      %v4419 = vadd.f32 0.0, %v4418
      %4420 = vmatmul.f32.gmra.mxu0 %v3874
      %v4421 = vpop.f32.mrf.mxu0
      %v4422 = vadd.f32 0.0, %v4421
      %4423 = vmatmul.f32.gmra.mxu0 %v3877
      %v4424 = vpop.f32.mrf.mxu0
      %v4425 = vadd.f32 0.0, %v4424
      %4426 = vmatmul.f32.gmra.mxu0 %v3880
      %v4427 = vpop.f32.mrf.mxu0
      %v4428 = vadd.f32 0.0, %v4427
      %4429 = vmatmul.f32.gmra.mxu0 %v3883
      %v4430 = vpop.f32.mrf.mxu0
      %v4431 = vadd.f32 0.0, %v4430
      %4432 = vmatmul.f32.gmra.mxu0 %v3886
      %v4433 = vpop.f32.mrf.mxu0
      %v4434 = vadd.f32 0.0, %v4433
      %4435 = vmatmul.f32.gmra.mxu0 %v3889
      %v4436 = vpop.f32.mrf.mxu0
      %v4437 = vadd.f32 0.0, %v4436
      %4438 = vmatmul.f32.gmra.mxu0 %v3892
      %v4439 = vpop.f32.mrf.mxu0
      %v4440 = vadd.f32 0.0, %v4439
      %4441 = vmatmul.f32.gmra.mxu0 %v3895
      %v4442 = vpop.f32.mrf.mxu0
      %v4443 = vadd.f32 0.0, %v4442
      %4444 = vmatmul.f32.gmra.mxu0 %v3898
      %v4445 = vpop.f32.mrf.mxu0
      %v4446 = vadd.f32 0.0, %v4445
      %4447 = vmatmul.f32.gmra.mxu0 %v3901
      %v4448 = vpop.f32.mrf.mxu0
      %v4449 = vadd.f32 0.0, %v4448
      %4450 = vmatmul.f32.gmra.mxu0 %v3904
      %v4451 = vpop.f32.mrf.mxu0
      %v4452 = vadd.f32 0.0, %v4451
      %4453 = vmatmul.f32.gmra.mxu0 %v3907
      %v4454 = vpop.f32.mrf.mxu0
      %v4455 = vadd.f32 0.0, %v4454
      %4456 = vmatmul.f32.gmra.mxu0 %v3910
      %v4457 = vpop.f32.mrf.mxu0
      %v4458 = vadd.f32 0.0, %v4457
      %4459 = vmatmul.f32.gmra.mxu0 %v3913
      %v4460 = vpop.f32.mrf.mxu0
      %v4461 = vadd.f32 0.0, %v4460
      %4462 = vmatmul.f32.gmra.mxu0 %v3916
      %v4463 = vpop.f32.mrf.mxu0
      %v4464 = vadd.f32 0.0, %v4463
      %4465 = vmatmul.f32.gmra.mxu0 %v3919
      %v4466 = vpop.f32.mrf.mxu0
      %v4467 = vadd.f32 0.0, %v4466
      %4468 = vmatmul.f32.gmra.mxu0 %v3922
      %v4469 = vpop.f32.mrf.mxu0
      %v4470 = vadd.f32 0.0, %v4469
      %4471 = vmatmul.f32.gmra.mxu0 %v3925
      %v4472 = vpop.f32.mrf.mxu0
      %v4473 = vadd.f32 0.0, %v4472
      %4474 = vmatmul.f32.gmra.mxu0 %v3928
      %v4475 = vpop.f32.mrf.mxu0
      %v4476 = vadd.f32 0.0, %v4475
      %4477 = vmatmul.f32.gmra.mxu0 %v3931
      %v4478 = vpop.f32.mrf.mxu0
      %v4479 = vadd.f32 0.0, %v4478
      %4480 = vmatmul.f32.gmra.mxu0 %v3934
      %v4481 = vpop.f32.mrf.mxu0
      %v4482 = vadd.f32 0.0, %v4481
      %4483 = vmatmul.f32.gmra.mxu0 %v3937
      %v4484 = vpop.f32.mrf.mxu0
      %v4485 = vadd.f32 0.0, %v4484
      %4486 = vmatmul.f32.gmra.mxu0 %v3940
      %v4487 = vpop.f32.mrf.mxu0
      %v4488 = vadd.f32 0.0, %v4487
      %4489 = vmatmul.f32.gmra.mxu0 %v3943
      %v4490 = vpop.f32.mrf.mxu0
      %v4491 = vadd.f32 0.0, %v4490
      %4492 = vmatmul.f32.gmra.mxu0 %v3946
      %v4493 = vpop.f32.mrf.mxu0
      %v4494 = vadd.f32 0.0, %v4493
      %4495 = vmatmul.f32.gmra.mxu0 %v3949
      %v4496 = vpop.f32.mrf.mxu0
      %v4497 = vadd.f32 0.0, %v4496
      %4498 = vmatmul.f32.gmra.mxu0 %v3952
      %v4499 = vpop.f32.mrf.mxu0
      %v4500 = vadd.f32 0.0, %v4499
      %4501 = vmatmul.f32.gmra.mxu0 %v3955
      %v4502 = vpop.f32.mrf.mxu0
      %v4503 = vadd.f32 0.0, %v4502
      %4504 = vmatmul.f32.gmra.mxu0 %v3958
      %v4505 = vpop.f32.mrf.mxu0
      %v4506 = vadd.f32 0.0, %v4505
      %4507 = vdwg.mxu0
      %v4508 = vmax.f32 %v3978, 0.0
      %v4509 = vmax.f32 %v4115, 0.0
      %v4510 = vmax.f32 %v4252, 0.0
      %v4511 = vmax.f32 %v4389, 0.0
      %v4512 = vmax.f32 %v3981, 0.0
      %v4513 = vmax.f32 %v4118, 0.0
      %v4514 = vmax.f32 %v4255, 0.0
      %v4515 = vmax.f32 %v4392, 0.0
      %v4516 = vmax.f32 %v3984, 0.0
      %v4517 = vmax.f32 %v4121, 0.0
      %v4518 = vmax.f32 %v4258, 0.0
      %v4519 = vmax.f32 %v4395, 0.0
      %v4520 = vmax.f32 %v3987, 0.0
      %v4521 = vmax.f32 %v4124, 0.0
      %v4522 = vmax.f32 %v4261, 0.0
      %v4523 = vmax.f32 %v4398, 0.0
      %v4524 = vmax.f32 %v3990, 0.0
      %v4525 = vmax.f32 %v4127, 0.0
      %v4526 = vmax.f32 %v4264, 0.0
      %v4527 = vmax.f32 %v4401, 0.0
      %v4528 = vmax.f32 %v3993, 0.0
      %v4529 = vmax.f32 %v4130, 0.0
      %v4530 = vmax.f32 %v4267, 0.0
      %v4531 = vmax.f32 %v4404, 0.0
      %v4532 = vmax.f32 %v3996, 0.0
      %v4533 = vmax.f32 %v4133, 0.0
      %v4534 = vmax.f32 %v4270, 0.0
      %v4535 = vmax.f32 %v4407, 0.0
      %v4536 = vmax.f32 %v3999, 0.0
      %v4537 = vmax.f32 %v4136, 0.0
      %v4538 = vmax.f32 %v4273, 0.0
      %v4539 = vmax.f32 %v4410, 0.0
      %v4540 = vmax.f32 %v4002, 0.0
      %v4541 = vmax.f32 %v4139, 0.0
      %v4542 = vmax.f32 %v4276, 0.0
      %v4543 = vmax.f32 %v4413, 0.0
      %v4544 = vmax.f32 %v4005, 0.0
      %v4545 = vmax.f32 %v4142, 0.0
      %v4546 = vmax.f32 %v4279, 0.0
      %v4547 = vmax.f32 %v4416, 0.0
      %v4548 = vmax.f32 %v4008, 0.0
      %v4549 = vmax.f32 %v4145, 0.0
      %v4550 = vmax.f32 %v4282, 0.0
      %v4551 = vmax.f32 %v4419, 0.0
      %v4552 = vmax.f32 %v4011, 0.0
      %v4553 = vmax.f32 %v4148, 0.0
      %v4554 = vmax.f32 %v4285, 0.0
      %v4555 = vmax.f32 %v4422, 0.0
      %v4556 = vmax.f32 %v4014, 0.0
      %v4557 = vmax.f32 %v4151, 0.0
      %v4558 = vmax.f32 %v4288, 0.0
      %v4559 = vmax.f32 %v4425, 0.0
      %v4560 = vmax.f32 %v4017, 0.0
      %v4561 = vmax.f32 %v4154, 0.0
      %v4562 = vmax.f32 %v4291, 0.0
      %v4563 = vmax.f32 %v4428, 0.0
      %v4564 = vmax.f32 %v4020, 0.0
      %v4565 = vmax.f32 %v4157, 0.0
      %v4566 = vmax.f32 %v4294, 0.0
      %v4567 = vmax.f32 %v4431, 0.0
      %v4568 = vmax.f32 %v4023, 0.0
      %v4569 = vmax.f32 %v4160, 0.0
      %v4570 = vmax.f32 %v4297, 0.0
      %v4571 = vmax.f32 %v4434, 0.0
      %v4572 = vmax.f32 %v4026, 0.0
      %v4573 = vmax.f32 %v4163, 0.0
      %v4574 = vmax.f32 %v4300, 0.0
      %v4575 = vmax.f32 %v4437, 0.0
      %v4576 = vmax.f32 %v4029, 0.0
      %v4577 = vmax.f32 %v4166, 0.0
      %v4578 = vmax.f32 %v4303, 0.0
      %v4579 = vmax.f32 %v4440, 0.0
      %v4580 = vmax.f32 %v4032, 0.0
      %v4581 = vmax.f32 %v4169, 0.0
      %v4582 = vmax.f32 %v4306, 0.0
      %v4583 = vmax.f32 %v4443, 0.0
      %v4584 = vmax.f32 %v4035, 0.0
      %v4585 = vmax.f32 %v4172, 0.0
      %v4586 = vmax.f32 %v4309, 0.0
      %v4587 = vmax.f32 %v4446, 0.0
      %v4588 = vmax.f32 %v4038, 0.0
      %v4589 = vmax.f32 %v4175, 0.0
      %v4590 = vmax.f32 %v4312, 0.0
      %v4591 = vmax.f32 %v4449, 0.0
      %v4592 = vmax.f32 %v4041, 0.0
      %v4593 = vmax.f32 %v4178, 0.0
      %v4594 = vmax.f32 %v4315, 0.0
      %v4595 = vmax.f32 %v4452, 0.0
      %v4596 = vmax.f32 %v4044, 0.0
      %v4597 = vmax.f32 %v4181, 0.0
      %v4598 = vmax.f32 %v4318, 0.0
      %v4599 = vmax.f32 %v4455, 0.0
      %v4600 = vmax.f32 %v4047, 0.0
      %v4601 = vmax.f32 %v4184, 0.0
      %v4602 = vmax.f32 %v4321, 0.0
      %v4603 = vmax.f32 %v4458, 0.0
      %v4604 = vmax.f32 %v4050, 0.0
      %v4605 = vmax.f32 %v4187, 0.0
      %v4606 = vmax.f32 %v4324, 0.0
      %v4607 = vmax.f32 %v4461, 0.0
      %v4608 = vmax.f32 %v4053, 0.0
      %v4609 = vmax.f32 %v4190, 0.0
      %v4610 = vmax.f32 %v4327, 0.0
      %v4611 = vmax.f32 %v4464, 0.0
      %v4612 = vmax.f32 %v4056, 0.0
      %v4613 = vmax.f32 %v4193, 0.0
      %v4614 = vmax.f32 %v4330, 0.0
      %v4615 = vmax.f32 %v4467, 0.0
      %v4616 = vmax.f32 %v4059, 0.0
      %v4617 = vmax.f32 %v4196, 0.0
      %v4618 = vmax.f32 %v4333, 0.0
      %v4619 = vmax.f32 %v4470, 0.0
      %v4620 = vmax.f32 %v4062, 0.0
      %v4621 = vmax.f32 %v4199, 0.0
      %v4622 = vmax.f32 %v4336, 0.0
      %v4623 = vmax.f32 %v4473, 0.0
      %v4624 = vmax.f32 %v4065, 0.0
      %v4625 = vmax.f32 %v4202, 0.0
      %v4626 = vmax.f32 %v4339, 0.0
      %v4627 = vmax.f32 %v4476, 0.0
      %v4628 = vmax.f32 %v4068, 0.0
      %v4629 = vmax.f32 %v4205, 0.0
      %v4630 = vmax.f32 %v4342, 0.0
      %v4631 = vmax.f32 %v4479, 0.0
      %v4632 = vmax.f32 %v4071, 0.0
      %v4633 = vmax.f32 %v4208, 0.0
      %v4634 = vmax.f32 %v4345, 0.0
      %v4635 = vmax.f32 %v4482, 0.0
      %v4636 = vmax.f32 %v4074, 0.0
      %v4637 = vmax.f32 %v4211, 0.0
      %v4638 = vmax.f32 %v4348, 0.0
      %v4639 = vmax.f32 %v4485, 0.0
      %v4640 = vmax.f32 %v4077, 0.0
      %v4641 = vmax.f32 %v4214, 0.0
      %v4642 = vmax.f32 %v4351, 0.0
      %v4643 = vmax.f32 %v4488, 0.0
      %v4644 = vmax.f32 %v4080, 0.0
      %v4645 = vmax.f32 %v4217, 0.0
      %v4646 = vmax.f32 %v4354, 0.0
      %v4647 = vmax.f32 %v4491, 0.0
      %v4648 = vmax.f32 %v4083, 0.0
      %v4649 = vmax.f32 %v4220, 0.0
      %v4650 = vmax.f32 %v4357, 0.0
      %v4651 = vmax.f32 %v4494, 0.0
      %v4652 = vmax.f32 %v4086, 0.0
      %v4653 = vmax.f32 %v4223, 0.0
      %v4654 = vmax.f32 %v4360, 0.0
      %v4655 = vmax.f32 %v4497, 0.0
      %v4656 = vmax.f32 %v4089, 0.0
      %v4657 = vmax.f32 %v4226, 0.0
      %v4658 = vmax.f32 %v4363, 0.0
      %v4659 = vmax.f32 %v4500, 0.0
      %v4660 = vmax.f32 %v4092, 0.0
      %v4661 = vmax.f32 %v4229, 0.0
      %v4662 = vmax.f32 %v4366, 0.0
      %v4663 = vmax.f32 %v4503, 0.0
      %v4664 = vmax.f32 %v4095, 0.0
      %v4665 = vmax.f32 %v4232, 0.0
      %v4666 = vmax.f32 %v4369, 0.0
      %v4667 = vmax.f32 %v4506, 0.0
      %v4668 = vld [vmem:[%s7] sm:$0xff]
      %v4669 = vld [vmem:[%s7 + $0x8] sm:$0xff]
      %v4670 = vld [vmem:[%s7 + $0x10] sm:$0xff]
      %v4671 = vld [vmem:[%s7 + $0x18] sm:$0xff]
      %v4672 = vld [vmem:[%s7 + $0x20] sm:$0xff]
      %v4673 = vld [vmem:[%s7 + $0x28] sm:$0xff]
      %v4674 = vld [vmem:[%s7 + $0x30] sm:$0xff]
      %v4675 = vld [vmem:[%s7 + $0x38] sm:$0xff]
      %v4676 = vld [vmem:[%s7 + $0x40] sm:$0xff]
      %v4677 = vld [vmem:[%s7 + $0x48] sm:$0xff]
      %v4678 = vld [vmem:[%s7 + $0x50] sm:$0xff]
      %v4679 = vld [vmem:[%s7 + $0x58] sm:$0xff]
      %v4680 = vld [vmem:[%s7 + $0x60] sm:$0xff]
      %v4681 = vld [vmem:[%s7 + $0x68] sm:$0xff]
      %v4682 = vld [vmem:[%s7 + $0x70] sm:$0xff]
      %v4683 = vld [vmem:[%s7 + $0x78] sm:$0xff]
      %v4684 = vld [vmem:[%s7 + $0x80] sm:$0xff]
      %v4685 = vld [vmem:[%s7 + $0x88] sm:$0xff]
      %v4686 = vld [vmem:[%s7 + $0x90] sm:$0xff]
      %v4687 = vld [vmem:[%s7 + $0x98] sm:$0xff]
      %v4688 = vld [vmem:[%s7 + $0xa0] sm:$0xff]
      %v4689 = vld [vmem:[%s7 + $0xa8] sm:$0xff]
      %v4690 = vld [vmem:[%s7 + $0xb0] sm:$0xff]
      %v4691 = vld [vmem:[%s7 + $0xb8] sm:$0xff]
      %v4692 = vld [vmem:[%s7 + $0xc0] sm:$0xff]
      %v4693 = vld [vmem:[%s7 + $0xc8] sm:$0xff]
      %v4694 = vld [vmem:[%s7 + $0xd0] sm:$0xff]
      %v4695 = vld [vmem:[%s7 + $0xd8] sm:$0xff]
      %v4696 = vld [vmem:[%s7 + $0xe0] sm:$0xff]
      %v4697 = vld [vmem:[%s7 + $0xe8] sm:$0xff]
      %v4698 = vld [vmem:[%s7 + $0xf0] sm:$0xff]
      %v4699 = vld [vmem:[%s7 + $0xf8] sm:$0xff]
      %v4700 = vld [vmem:[%s7 + $0x100] sm:$0xff]
      %v4701 = vld [vmem:[%s7 + $0x108] sm:$0xff]
      %v4702 = vld [vmem:[%s7 + $0x110] sm:$0xff]
      %v4703 = vld [vmem:[%s7 + $0x118] sm:$0xff]
      %v4704 = vld [vmem:[%s7 + $0x120] sm:$0xff]
      %v4705 = vld [vmem:[%s7 + $0x128] sm:$0xff]
      %v4706 = vld [vmem:[%s7 + $0x130] sm:$0xff]
      %v4707 = vld [vmem:[%s7 + $0x138] sm:$0xff]
      %v4708 = vld [vmem:[%s7 + $0x140] sm:$0xff]
      %v4709 = vld [vmem:[%s7 + $0x148] sm:$0xff]
      %v4710 = vld [vmem:[%s7 + $0x150] sm:$0xff]
      %v4711 = vld [vmem:[%s7 + $0x158] sm:$0xff]
      %v4712 = vld [vmem:[%s7 + $0x160] sm:$0xff]
      %v4713 = vld [vmem:[%s7 + $0x168] sm:$0xff]
      %v4714 = vld [vmem:[%s7 + $0x170] sm:$0xff]
      %v4715 = vld [vmem:[%s7 + $0x178] sm:$0xff]
      %v4716 = vld [vmem:[%s7 + $0x180] sm:$0xff]
      %v4717 = vld [vmem:[%s7 + $0x188] sm:$0xff]
      %v4718 = vld [vmem:[%s7 + $0x190] sm:$0xff]
      %v4719 = vld [vmem:[%s7 + $0x198] sm:$0xff]
      %v4720 = vld [vmem:[%s7 + $0x1a0] sm:$0xff]
      %v4721 = vld [vmem:[%s7 + $0x1a8] sm:$0xff]
      %v4722 = vld [vmem:[%s7 + $0x1b0] sm:$0xff]
      %v4723 = vld [vmem:[%s7 + $0x1b8] sm:$0xff]
      %v4724 = vld [vmem:[%s7 + $0x1c0] sm:$0xff]
      %v4725 = vld [vmem:[%s7 + $0x1c8] sm:$0xff]
      %v4726 = vld [vmem:[%s7 + $0x1d0] sm:$0xff]
      %v4727 = vld [vmem:[%s7 + $0x1d8] sm:$0xff]
      %v4728 = vld [vmem:[%s7 + $0x1e0] sm:$0xff]
      %v4729 = vld [vmem:[%s7 + $0x1e8] sm:$0xff]
      %v4730 = vld [vmem:[%s7 + $0x1f0] sm:$0xff]
      %v4731 = vld [vmem:[%s7 + $0x1f8] sm:$0xff]
      %4732 = vmatpush.msra.mxu0 %v4683
      %4733 = vmatpush.msra.mxu0 %v4682
      %4734 = vmatpush.msra.mxu0 %v4681
      %4735 = vmatpush.msra.mxu0 %v4680
      %4736 = vmatpush.msra.mxu0 %v4679
      %4737 = vmatpush.msra.mxu0 %v4678
      %4738 = vmatpush.msra.mxu0 %v4677
      %4739 = vmatpush.msra.mxu0 %v4676
      %4740 = vmatpush.msra.mxu0 %v4675
      %4741 = vmatpush.msra.mxu0 %v4674
      %4742 = vmatpush.msra.mxu0 %v4673
      %4743 = vmatpush.msra.mxu0 %v4672
      %4744 = vmatpush.msra.mxu0 %v4671
      %4745 = vmatpush.msra.mxu0 %v4670
      %4746 = vmatpush.msra.mxu0 %v4669
      %4747 = vmatpush.msra.mxu0 %v4668
      %4748 = vmatmul.f32.gmra.mxu0 %v4508
      %v4749 = vpop.f32.mrf.mxu0
      %v4750 = vadd.f32 %v3768, %v4749
      %4751 = vmatmul.f32.gmra.mxu0 %v4512
      %v4752 = vpop.f32.mrf.mxu0
      %v4753 = vadd.f32 %v3769, %v4752
      %4754 = vmatmul.f32.gmra.mxu0 %v4516
      %v4755 = vpop.f32.mrf.mxu0
      %v4756 = vadd.f32 %v3770, %v4755
      %4757 = vmatmul.f32.gmra.mxu0 %v4520
      %v4758 = vpop.f32.mrf.mxu0
      %v4759 = vadd.f32 %v3771, %v4758
      %4760 = vmatmul.f32.gmra.mxu0 %v4524
      %v4761 = vpop.f32.mrf.mxu0
      %v4762 = vadd.f32 %v3772, %v4761
      %4763 = vmatmul.f32.gmra.mxu0 %v4528
      %v4764 = vpop.f32.mrf.mxu0
      %v4765 = vadd.f32 %v3773, %v4764
      %4766 = vmatmul.f32.gmra.mxu0 %v4532
      %v4767 = vpop.f32.mrf.mxu0
      %v4768 = vadd.f32 %v3774, %v4767
      %4769 = vmatmul.f32.gmra.mxu0 %v4536
      %v4770 = vpop.f32.mrf.mxu0
      %v4771 = vadd.f32 %v3775, %v4770
      %4772 = vmatmul.f32.gmra.mxu0 %v4540
      %v4773 = vpop.f32.mrf.mxu0
      %v4774 = vadd.f32 %v3776, %v4773
      %4775 = vmatmul.f32.gmra.mxu0 %v4544
      %v4776 = vpop.f32.mrf.mxu0
      %v4777 = vadd.f32 %v3777, %v4776
      %4778 = vmatmul.f32.gmra.mxu0 %v4548
      %v4779 = vpop.f32.mrf.mxu0
      %v4780 = vadd.f32 %v3778, %v4779
      %4781 = vmatmul.f32.gmra.mxu0 %v4552
      %v4782 = vpop.f32.mrf.mxu0
      %v4783 = vadd.f32 %v3779, %v4782
      %4784 = vmatmul.f32.gmra.mxu0 %v4556
      %v4785 = vpop.f32.mrf.mxu0
      %v4786 = vadd.f32 %v3780, %v4785
      %4787 = vmatmul.f32.gmra.mxu0 %v4560
      %v4788 = vpop.f32.mrf.mxu0
      %v4789 = vadd.f32 %v3781, %v4788
      %4790 = vmatmul.f32.gmra.mxu0 %v4564
      %v4791 = vpop.f32.mrf.mxu0
      %v4792 = vadd.f32 %v3782, %v4791
      %4793 = vmatmul.f32.gmra.mxu0 %v4568
      %v4794 = vpop.f32.mrf.mxu0
      %v4795 = vadd.f32 %v3783, %v4794
      %4796 = vmatmul.f32.gmra.mxu0 %v4572
      %v4797 = vpop.f32.mrf.mxu0
      %v4798 = vadd.f32 %v3784, %v4797
      %4799 = vmatmul.f32.gmra.mxu0 %v4576
      %v4800 = vpop.f32.mrf.mxu0
      %v4801 = vadd.f32 %v3785, %v4800
      %4802 = vmatmul.f32.gmra.mxu0 %v4580
      %v4803 = vpop.f32.mrf.mxu0
      %v4804 = vadd.f32 %v3786, %v4803
      %4805 = vmatmul.f32.gmra.mxu0 %v4584
      %v4806 = vpop.f32.mrf.mxu0
      %v4807 = vadd.f32 %v3787, %v4806
      %4808 = vmatmul.f32.gmra.mxu0 %v4588
      %v4809 = vpop.f32.mrf.mxu0
      %v4810 = vadd.f32 %v3788, %v4809
      %4811 = vmatmul.f32.gmra.mxu0 %v4592
      %v4812 = vpop.f32.mrf.mxu0
      %v4813 = vadd.f32 %v3789, %v4812
      %4814 = vmatmul.f32.gmra.mxu0 %v4596
      %v4815 = vpop.f32.mrf.mxu0
      %v4816 = vadd.f32 %v3790, %v4815
      %4817 = vmatmul.f32.gmra.mxu0 %v4600
      %v4818 = vpop.f32.mrf.mxu0
      %v4819 = vadd.f32 %v3791, %v4818
      %4820 = vmatmul.f32.gmra.mxu0 %v4604
      %v4821 = vpop.f32.mrf.mxu0
      %v4822 = vadd.f32 %v3792, %v4821
      %4823 = vmatmul.f32.gmra.mxu0 %v4608
      %v4824 = vpop.f32.mrf.mxu0
      %v4825 = vadd.f32 %v3793, %v4824
      %4826 = vmatmul.f32.gmra.mxu0 %v4612
      %v4827 = vpop.f32.mrf.mxu0
      %v4828 = vadd.f32 %v3794, %v4827
      %4829 = vmatmul.f32.gmra.mxu0 %v4616
      %v4830 = vpop.f32.mrf.mxu0
      %v4831 = vadd.f32 %v3795, %v4830
      %4832 = vmatmul.f32.gmra.mxu0 %v4620
      %v4833 = vpop.f32.mrf.mxu0
      %v4834 = vadd.f32 %v3796, %v4833
      %4835 = vmatmul.f32.gmra.mxu0 %v4624
      %v4836 = vpop.f32.mrf.mxu0
      %v4837 = vadd.f32 %v3797, %v4836
      %4838 = vmatmul.f32.gmra.mxu0 %v4628
      %v4839 = vpop.f32.mrf.mxu0
      %v4840 = vadd.f32 %v3798, %v4839
      %4841 = vmatmul.f32.gmra.mxu0 %v4632
      %v4842 = vpop.f32.mrf.mxu0
      %v4843 = vadd.f32 %v3799, %v4842
      %4844 = vmatmul.f32.gmra.mxu0 %v4636
      %v4845 = vpop.f32.mrf.mxu0
      %v4846 = vadd.f32 %v3800, %v4845
      %4847 = vmatmul.f32.gmra.mxu0 %v4640
      %v4848 = vpop.f32.mrf.mxu0
      %v4849 = vadd.f32 %v3801, %v4848
      %4850 = vmatmul.f32.gmra.mxu0 %v4644
      %v4851 = vpop.f32.mrf.mxu0
      %v4852 = vadd.f32 %v3802, %v4851
      %4853 = vmatmul.f32.gmra.mxu0 %v4648
      %v4854 = vpop.f32.mrf.mxu0
      %v4855 = vadd.f32 %v3803, %v4854
      %4856 = vmatmul.f32.gmra.mxu0 %v4652
      %v4857 = vpop.f32.mrf.mxu0
      %v4858 = vadd.f32 %v3804, %v4857
      %4859 = vmatmul.f32.gmra.mxu0 %v4656
      %v4860 = vpop.f32.mrf.mxu0
      %v4861 = vadd.f32 %v3805, %v4860
      %4862 = vmatmul.f32.gmra.mxu0 %v4660
      %v4863 = vpop.f32.mrf.mxu0
      %v4864 = vadd.f32 %v3806, %v4863
      %4865 = vmatmul.f32.gmra.mxu0 %v4664
      %v4866 = vpop.f32.mrf.mxu0
      %v4867 = vadd.f32 %v3807, %v4866
      %4868 = vdwg.mxu0
      %4869 = vmatpush.msra.mxu0 %v4699
      %4870 = vmatpush.msra.mxu0 %v4698
      %4871 = vmatpush.msra.mxu0 %v4697
      %4872 = vmatpush.msra.mxu0 %v4696
      %4873 = vmatpush.msra.mxu0 %v4695
      %4874 = vmatpush.msra.mxu0 %v4694
      %4875 = vmatpush.msra.mxu0 %v4693
      %4876 = vmatpush.msra.mxu0 %v4692
      %4877 = vmatpush.msra.mxu0 %v4691
      %4878 = vmatpush.msra.mxu0 %v4690
      %4879 = vmatpush.msra.mxu0 %v4689
      %4880 = vmatpush.msra.mxu0 %v4688
      %4881 = vmatpush.msra.mxu0 %v4687
      %4882 = vmatpush.msra.mxu0 %v4686
      %4883 = vmatpush.msra.mxu0 %v4685
      %4884 = vmatpush.msra.mxu0 %v4684
      %4885 = vmatmul.f32.gmra.mxu0 %v4509
      %v4886 = vpop.f32.mrf.mxu0
      %v4887 = vadd.f32 %v4750, %v4886
      %4888 = vmatmul.f32.gmra.mxu0 %v4513
      %v4889 = vpop.f32.mrf.mxu0
      %v4890 = vadd.f32 %v4753, %v4889
      %4891 = vmatmul.f32.gmra.mxu0 %v4517
      %v4892 = vpop.f32.mrf.mxu0
      %v4893 = vadd.f32 %v4756, %v4892
      %4894 = vmatmul.f32.gmra.mxu0 %v4521
      %v4895 = vpop.f32.mrf.mxu0
      %v4896 = vadd.f32 %v4759, %v4895
      %4897 = vmatmul.f32.gmra.mxu0 %v4525
      %v4898 = vpop.f32.mrf.mxu0
      %v4899 = vadd.f32 %v4762, %v4898
      %4900 = vmatmul.f32.gmra.mxu0 %v4529
      %v4901 = vpop.f32.mrf.mxu0
      %v4902 = vadd.f32 %v4765, %v4901
      %4903 = vmatmul.f32.gmra.mxu0 %v4533
      %v4904 = vpop.f32.mrf.mxu0
      %v4905 = vadd.f32 %v4768, %v4904
      %4906 = vmatmul.f32.gmra.mxu0 %v4537
      %v4907 = vpop.f32.mrf.mxu0
      %v4908 = vadd.f32 %v4771, %v4907
      %4909 = vmatmul.f32.gmra.mxu0 %v4541
      %v4910 = vpop.f32.mrf.mxu0
      %v4911 = vadd.f32 %v4774, %v4910
      %4912 = vmatmul.f32.gmra.mxu0 %v4545
      %v4913 = vpop.f32.mrf.mxu0
      %v4914 = vadd.f32 %v4777, %v4913
      %4915 = vmatmul.f32.gmra.mxu0 %v4549
      %v4916 = vpop.f32.mrf.mxu0
      %v4917 = vadd.f32 %v4780, %v4916
      %4918 = vmatmul.f32.gmra.mxu0 %v4553
      %v4919 = vpop.f32.mrf.mxu0
      %v4920 = vadd.f32 %v4783, %v4919
      %4921 = vmatmul.f32.gmra.mxu0 %v4557
      %v4922 = vpop.f32.mrf.mxu0
      %v4923 = vadd.f32 %v4786, %v4922
      %4924 = vmatmul.f32.gmra.mxu0 %v4561
      %v4925 = vpop.f32.mrf.mxu0
      %v4926 = vadd.f32 %v4789, %v4925
      %4927 = vmatmul.f32.gmra.mxu0 %v4565
      %v4928 = vpop.f32.mrf.mxu0
      %v4929 = vadd.f32 %v4792, %v4928
      %4930 = vmatmul.f32.gmra.mxu0 %v4569
      %v4931 = vpop.f32.mrf.mxu0
      %v4932 = vadd.f32 %v4795, %v4931
      %4933 = vmatmul.f32.gmra.mxu0 %v4573
      %v4934 = vpop.f32.mrf.mxu0
      %v4935 = vadd.f32 %v4798, %v4934
      %4936 = vmatmul.f32.gmra.mxu0 %v4577
      %v4937 = vpop.f32.mrf.mxu0
      %v4938 = vadd.f32 %v4801, %v4937
      %4939 = vmatmul.f32.gmra.mxu0 %v4581
      %v4940 = vpop.f32.mrf.mxu0
      %v4941 = vadd.f32 %v4804, %v4940
      %4942 = vmatmul.f32.gmra.mxu0 %v4585
      %v4943 = vpop.f32.mrf.mxu0
      %v4944 = vadd.f32 %v4807, %v4943
      %4945 = vmatmul.f32.gmra.mxu0 %v4589
      %v4946 = vpop.f32.mrf.mxu0
      %v4947 = vadd.f32 %v4810, %v4946
      %4948 = vmatmul.f32.gmra.mxu0 %v4593
      %v4949 = vpop.f32.mrf.mxu0
      %v4950 = vadd.f32 %v4813, %v4949
      %4951 = vmatmul.f32.gmra.mxu0 %v4597
      %v4952 = vpop.f32.mrf.mxu0
      %v4953 = vadd.f32 %v4816, %v4952
      %4954 = vmatmul.f32.gmra.mxu0 %v4601
      %v4955 = vpop.f32.mrf.mxu0
      %v4956 = vadd.f32 %v4819, %v4955
      %4957 = vmatmul.f32.gmra.mxu0 %v4605
      %v4958 = vpop.f32.mrf.mxu0
      %v4959 = vadd.f32 %v4822, %v4958
      %4960 = vmatmul.f32.gmra.mxu0 %v4609
      %v4961 = vpop.f32.mrf.mxu0
      %v4962 = vadd.f32 %v4825, %v4961
      %4963 = vmatmul.f32.gmra.mxu0 %v4613
      %v4964 = vpop.f32.mrf.mxu0
      %v4965 = vadd.f32 %v4828, %v4964
      %4966 = vmatmul.f32.gmra.mxu0 %v4617
      %v4967 = vpop.f32.mrf.mxu0
      %v4968 = vadd.f32 %v4831, %v4967
      %4969 = vmatmul.f32.gmra.mxu0 %v4621
      %v4970 = vpop.f32.mrf.mxu0
      %v4971 = vadd.f32 %v4834, %v4970
      %4972 = vmatmul.f32.gmra.mxu0 %v4625
      %v4973 = vpop.f32.mrf.mxu0
      %v4974 = vadd.f32 %v4837, %v4973
      %4975 = vmatmul.f32.gmra.mxu0 %v4629
      %v4976 = vpop.f32.mrf.mxu0
      %v4977 = vadd.f32 %v4840, %v4976
      %4978 = vmatmul.f32.gmra.mxu0 %v4633
      %v4979 = vpop.f32.mrf.mxu0
      %v4980 = vadd.f32 %v4843, %v4979
      %4981 = vmatmul.f32.gmra.mxu0 %v4637
      %v4982 = vpop.f32.mrf.mxu0
      %v4983 = vadd.f32 %v4846, %v4982
      %4984 = vmatmul.f32.gmra.mxu0 %v4641
      %v4985 = vpop.f32.mrf.mxu0
      %v4986 = vadd.f32 %v4849, %v4985
      %4987 = vmatmul.f32.gmra.mxu0 %v4645
      %v4988 = vpop.f32.mrf.mxu0
      %v4989 = vadd.f32 %v4852, %v4988
      %4990 = vmatmul.f32.gmra.mxu0 %v4649
      %v4991 = vpop.f32.mrf.mxu0
      %v4992 = vadd.f32 %v4855, %v4991
      %4993 = vmatmul.f32.gmra.mxu0 %v4653
      %v4994 = vpop.f32.mrf.mxu0
      %v4995 = vadd.f32 %v4858, %v4994
      %4996 = vmatmul.f32.gmra.mxu0 %v4657
      %v4997 = vpop.f32.mrf.mxu0
      %v4998 = vadd.f32 %v4861, %v4997
      %4999 = vmatmul.f32.gmra.mxu0 %v4661
      %v5000 = vpop.f32.mrf.mxu0
      %v5001 = vadd.f32 %v4864, %v5000
      %5002 = vmatmul.f32.gmra.mxu0 %v4665
      %v5003 = vpop.f32.mrf.mxu0
      %v5004 = vadd.f32 %v4867, %v5003
      %5005 = vdwg.mxu0
      %5006 = vmatpush.msra.mxu0 %v4715
      %5007 = vmatpush.msra.mxu0 %v4714
      %5008 = vmatpush.msra.mxu0 %v4713
      %5009 = vmatpush.msra.mxu0 %v4712
      %5010 = vmatpush.msra.mxu0 %v4711
      %5011 = vmatpush.msra.mxu0 %v4710
      %5012 = vmatpush.msra.mxu0 %v4709
      %5013 = vmatpush.msra.mxu0 %v4708
      %5014 = vmatpush.msra.mxu0 %v4707
      %5015 = vmatpush.msra.mxu0 %v4706
      %5016 = vmatpush.msra.mxu0 %v4705
      %5017 = vmatpush.msra.mxu0 %v4704
      %5018 = vmatpush.msra.mxu0 %v4703
      %5019 = vmatpush.msra.mxu0 %v4702
      %5020 = vmatpush.msra.mxu0 %v4701
      %5021 = vmatpush.msra.mxu0 %v4700
      %5022 = vmatmul.f32.gmra.mxu0 %v4510
      %v5023 = vpop.f32.mrf.mxu0
      %v5024 = vadd.f32 %v4887, %v5023
      %5025 = vmatmul.f32.gmra.mxu0 %v4514
      %v5026 = vpop.f32.mrf.mxu0
      %v5027 = vadd.f32 %v4890, %v5026
      %5028 = vmatmul.f32.gmra.mxu0 %v4518
      %v5029 = vpop.f32.mrf.mxu0
      %v5030 = vadd.f32 %v4893, %v5029
      %5031 = vmatmul.f32.gmra.mxu0 %v4522
      %v5032 = vpop.f32.mrf.mxu0
      %v5033 = vadd.f32 %v4896, %v5032
      %5034 = vmatmul.f32.gmra.mxu0 %v4526
      %v5035 = vpop.f32.mrf.mxu0
      %v5036 = vadd.f32 %v4899, %v5035
      %5037 = vmatmul.f32.gmra.mxu0 %v4530
      %v5038 = vpop.f32.mrf.mxu0
      %v5039 = vadd.f32 %v4902, %v5038
      %5040 = vmatmul.f32.gmra.mxu0 %v4534
      %v5041 = vpop.f32.mrf.mxu0
      %v5042 = vadd.f32 %v4905, %v5041
      %5043 = vmatmul.f32.gmra.mxu0 %v4538
      %v5044 = vpop.f32.mrf.mxu0
      %v5045 = vadd.f32 %v4908, %v5044
      %5046 = vmatmul.f32.gmra.mxu0 %v4542
      %v5047 = vpop.f32.mrf.mxu0
      %v5048 = vadd.f32 %v4911, %v5047
      %5049 = vmatmul.f32.gmra.mxu0 %v4546
      %v5050 = vpop.f32.mrf.mxu0
      %v5051 = vadd.f32 %v4914, %v5050
      %5052 = vmatmul.f32.gmra.mxu0 %v4550
      %v5053 = vpop.f32.mrf.mxu0
      %v5054 = vadd.f32 %v4917, %v5053
      %5055 = vmatmul.f32.gmra.mxu0 %v4554
      %v5056 = vpop.f32.mrf.mxu0
      %v5057 = vadd.f32 %v4920, %v5056
      %5058 = vmatmul.f32.gmra.mxu0 %v4558
      %v5059 = vpop.f32.mrf.mxu0
      %v5060 = vadd.f32 %v4923, %v5059
      %5061 = vmatmul.f32.gmra.mxu0 %v4562
      %v5062 = vpop.f32.mrf.mxu0
      %v5063 = vadd.f32 %v4926, %v5062
      %5064 = vmatmul.f32.gmra.mxu0 %v4566
      %v5065 = vpop.f32.mrf.mxu0
      %v5066 = vadd.f32 %v4929, %v5065
      %5067 = vmatmul.f32.gmra.mxu0 %v4570
      %v5068 = vpop.f32.mrf.mxu0
      %v5069 = vadd.f32 %v4932, %v5068
      %5070 = vmatmul.f32.gmra.mxu0 %v4574
      %v5071 = vpop.f32.mrf.mxu0
      %v5072 = vadd.f32 %v4935, %v5071
      %5073 = vmatmul.f32.gmra.mxu0 %v4578
      %v5074 = vpop.f32.mrf.mxu0
      %v5075 = vadd.f32 %v4938, %v5074
      %5076 = vmatmul.f32.gmra.mxu0 %v4582
      %v5077 = vpop.f32.mrf.mxu0
      %v5078 = vadd.f32 %v4941, %v5077
      %5079 = vmatmul.f32.gmra.mxu0 %v4586
      %v5080 = vpop.f32.mrf.mxu0
      %v5081 = vadd.f32 %v4944, %v5080
      %5082 = vmatmul.f32.gmra.mxu0 %v4590
      %v5083 = vpop.f32.mrf.mxu0
      %v5084 = vadd.f32 %v4947, %v5083
      %5085 = vmatmul.f32.gmra.mxu0 %v4594
      %v5086 = vpop.f32.mrf.mxu0
      %v5087 = vadd.f32 %v4950, %v5086
      %5088 = vmatmul.f32.gmra.mxu0 %v4598
      %v5089 = vpop.f32.mrf.mxu0
      %v5090 = vadd.f32 %v4953, %v5089
      %5091 = vmatmul.f32.gmra.mxu0 %v4602
      %v5092 = vpop.f32.mrf.mxu0
      %v5093 = vadd.f32 %v4956, %v5092
      %5094 = vmatmul.f32.gmra.mxu0 %v4606
      %v5095 = vpop.f32.mrf.mxu0
      %v5096 = vadd.f32 %v4959, %v5095
      %5097 = vmatmul.f32.gmra.mxu0 %v4610
      %v5098 = vpop.f32.mrf.mxu0
      %v5099 = vadd.f32 %v4962, %v5098
      %5100 = vmatmul.f32.gmra.mxu0 %v4614
      %v5101 = vpop.f32.mrf.mxu0
      %v5102 = vadd.f32 %v4965, %v5101
      %5103 = vmatmul.f32.gmra.mxu0 %v4618
      %v5104 = vpop.f32.mrf.mxu0
      %v5105 = vadd.f32 %v4968, %v5104
      %5106 = vmatmul.f32.gmra.mxu0 %v4622
      %v5107 = vpop.f32.mrf.mxu0
      %v5108 = vadd.f32 %v4971, %v5107
      %5109 = vmatmul.f32.gmra.mxu0 %v4626
      %v5110 = vpop.f32.mrf.mxu0
      %v5111 = vadd.f32 %v4974, %v5110
      %5112 = vmatmul.f32.gmra.mxu0 %v4630
      %v5113 = vpop.f32.mrf.mxu0
      %v5114 = vadd.f32 %v4977, %v5113
      %5115 = vmatmul.f32.gmra.mxu0 %v4634
      %v5116 = vpop.f32.mrf.mxu0
      %v5117 = vadd.f32 %v4980, %v5116
      %5118 = vmatmul.f32.gmra.mxu0 %v4638
      %v5119 = vpop.f32.mrf.mxu0
      %v5120 = vadd.f32 %v4983, %v5119
      %5121 = vmatmul.f32.gmra.mxu0 %v4642
      %v5122 = vpop.f32.mrf.mxu0
      %v5123 = vadd.f32 %v4986, %v5122
      %5124 = vmatmul.f32.gmra.mxu0 %v4646
      %v5125 = vpop.f32.mrf.mxu0
      %v5126 = vadd.f32 %v4989, %v5125
      %5127 = vmatmul.f32.gmra.mxu0 %v4650
      %v5128 = vpop.f32.mrf.mxu0
      %v5129 = vadd.f32 %v4992, %v5128
      %5130 = vmatmul.f32.gmra.mxu0 %v4654
      %v5131 = vpop.f32.mrf.mxu0
      %v5132 = vadd.f32 %v4995, %v5131
      %5133 = vmatmul.f32.gmra.mxu0 %v4658
      %v5134 = vpop.f32.mrf.mxu0
      %v5135 = vadd.f32 %v4998, %v5134
      %5136 = vmatmul.f32.gmra.mxu0 %v4662
      %v5137 = vpop.f32.mrf.mxu0
      %v5138 = vadd.f32 %v5001, %v5137
      %5139 = vmatmul.f32.gmra.mxu0 %v4666
      %v5140 = vpop.f32.mrf.mxu0
      %v5141 = vadd.f32 %v5004, %v5140
      %5142 = vdwg.mxu0
      %5143 = vmatpush.msra.mxu0 %v4731
      %5144 = vmatpush.msra.mxu0 %v4730
      %5145 = vmatpush.msra.mxu0 %v4729
      %5146 = vmatpush.msra.mxu0 %v4728
      %5147 = vmatpush.msra.mxu0 %v4727
      %5148 = vmatpush.msra.mxu0 %v4726
      %5149 = vmatpush.msra.mxu0 %v4725
      %5150 = vmatpush.msra.mxu0 %v4724
      %5151 = vmatpush.msra.mxu0 %v4723
      %5152 = vmatpush.msra.mxu0 %v4722
      %5153 = vmatpush.msra.mxu0 %v4721
      %5154 = vmatpush.msra.mxu0 %v4720
      %5155 = vmatpush.msra.mxu0 %v4719
      %5156 = vmatpush.msra.mxu0 %v4718
      %5157 = vmatpush.msra.mxu0 %v4717
      %5158 = vmatpush.msra.mxu0 %v4716
      %5159 = vmatmul.f32.gmra.mxu0 %v4511
      %v5160 = vpop.f32.mrf.mxu0
      %v5161 = vadd.f32 %v5024, %v5160
      %5162 = vmatmul.f32.gmra.mxu0 %v4515
      %v5163 = vpop.f32.mrf.mxu0
      %v5164 = vadd.f32 %v5027, %v5163
      %5165 = vmatmul.f32.gmra.mxu0 %v4519
      %v5166 = vpop.f32.mrf.mxu0
      %v5167 = vadd.f32 %v5030, %v5166
      %5168 = vmatmul.f32.gmra.mxu0 %v4523
      %v5169 = vpop.f32.mrf.mxu0
      %v5170 = vadd.f32 %v5033, %v5169
      %5171 = vmatmul.f32.gmra.mxu0 %v4527
      %v5172 = vpop.f32.mrf.mxu0
      %v5173 = vadd.f32 %v5036, %v5172
      %5174 = vmatmul.f32.gmra.mxu0 %v4531
      %v5175 = vpop.f32.mrf.mxu0
      %v5176 = vadd.f32 %v5039, %v5175
      %5177 = vmatmul.f32.gmra.mxu0 %v4535
      %v5178 = vpop.f32.mrf.mxu0
      %v5179 = vadd.f32 %v5042, %v5178
      %5180 = vmatmul.f32.gmra.mxu0 %v4539
      %v5181 = vpop.f32.mrf.mxu0
      %v5182 = vadd.f32 %v5045, %v5181
      %5183 = vmatmul.f32.gmra.mxu0 %v4543
      %v5184 = vpop.f32.mrf.mxu0
      %v5185 = vadd.f32 %v5048, %v5184
      %5186 = vmatmul.f32.gmra.mxu0 %v4547
      %v5187 = vpop.f32.mrf.mxu0
      %v5188 = vadd.f32 %v5051, %v5187
      %5189 = vmatmul.f32.gmra.mxu0 %v4551
      %v5190 = vpop.f32.mrf.mxu0
      %v5191 = vadd.f32 %v5054, %v5190
      %5192 = vmatmul.f32.gmra.mxu0 %v4555
      %v5193 = vpop.f32.mrf.mxu0
      %v5194 = vadd.f32 %v5057, %v5193
      %5195 = vmatmul.f32.gmra.mxu0 %v4559
      %v5196 = vpop.f32.mrf.mxu0
      %v5197 = vadd.f32 %v5060, %v5196
      %5198 = vmatmul.f32.gmra.mxu0 %v4563
      %v5199 = vpop.f32.mrf.mxu0
      %v5200 = vadd.f32 %v5063, %v5199
      %5201 = vmatmul.f32.gmra.mxu0 %v4567
      %v5202 = vpop.f32.mrf.mxu0
      %v5203 = vadd.f32 %v5066, %v5202
      %5204 = vmatmul.f32.gmra.mxu0 %v4571
      %v5205 = vpop.f32.mrf.mxu0
      %v5206 = vadd.f32 %v5069, %v5205
      %5207 = vmatmul.f32.gmra.mxu0 %v4575
      %v5208 = vpop.f32.mrf.mxu0
      %v5209 = vadd.f32 %v5072, %v5208
      %5210 = vmatmul.f32.gmra.mxu0 %v4579
      %v5211 = vpop.f32.mrf.mxu0
      %v5212 = vadd.f32 %v5075, %v5211
      %5213 = vmatmul.f32.gmra.mxu0 %v4583
      %v5214 = vpop.f32.mrf.mxu0
      %v5215 = vadd.f32 %v5078, %v5214
      %5216 = vmatmul.f32.gmra.mxu0 %v4587
      %v5217 = vpop.f32.mrf.mxu0
      %v5218 = vadd.f32 %v5081, %v5217
      %5219 = vmatmul.f32.gmra.mxu0 %v4591
      %v5220 = vpop.f32.mrf.mxu0
      %v5221 = vadd.f32 %v5084, %v5220
      %5222 = vmatmul.f32.gmra.mxu0 %v4595
      %v5223 = vpop.f32.mrf.mxu0
      %v5224 = vadd.f32 %v5087, %v5223
      %5225 = vmatmul.f32.gmra.mxu0 %v4599
      %v5226 = vpop.f32.mrf.mxu0
      %v5227 = vadd.f32 %v5090, %v5226
      %5228 = vmatmul.f32.gmra.mxu0 %v4603
      %v5229 = vpop.f32.mrf.mxu0
      %v5230 = vadd.f32 %v5093, %v5229
      %5231 = vmatmul.f32.gmra.mxu0 %v4607
      %v5232 = vpop.f32.mrf.mxu0
      %v5233 = vadd.f32 %v5096, %v5232
      %5234 = vmatmul.f32.gmra.mxu0 %v4611
      %v5235 = vpop.f32.mrf.mxu0
      %v5236 = vadd.f32 %v5099, %v5235
      %5237 = vmatmul.f32.gmra.mxu0 %v4615
      %v5238 = vpop.f32.mrf.mxu0
      %v5239 = vadd.f32 %v5102, %v5238
      %5240 = vmatmul.f32.gmra.mxu0 %v4619
      %v5241 = vpop.f32.mrf.mxu0
      %v5242 = vadd.f32 %v5105, %v5241
      %5243 = vmatmul.f32.gmra.mxu0 %v4623
      %v5244 = vpop.f32.mrf.mxu0
      %v5245 = vadd.f32 %v5108, %v5244
      %5246 = vmatmul.f32.gmra.mxu0 %v4627
      %v5247 = vpop.f32.mrf.mxu0
      %v5248 = vadd.f32 %v5111, %v5247
      %5249 = vmatmul.f32.gmra.mxu0 %v4631
      %v5250 = vpop.f32.mrf.mxu0
      %v5251 = vadd.f32 %v5114, %v5250
      %5252 = vmatmul.f32.gmra.mxu0 %v4635
      %v5253 = vpop.f32.mrf.mxu0
      %v5254 = vadd.f32 %v5117, %v5253
      %5255 = vmatmul.f32.gmra.mxu0 %v4639
      %v5256 = vpop.f32.mrf.mxu0
      %v5257 = vadd.f32 %v5120, %v5256
      %5258 = vmatmul.f32.gmra.mxu0 %v4643
      %v5259 = vpop.f32.mrf.mxu0
      %v5260 = vadd.f32 %v5123, %v5259
      %5261 = vmatmul.f32.gmra.mxu0 %v4647
      %v5262 = vpop.f32.mrf.mxu0
      %v5263 = vadd.f32 %v5126, %v5262
      %5264 = vmatmul.f32.gmra.mxu0 %v4651
      %v5265 = vpop.f32.mrf.mxu0
      %v5266 = vadd.f32 %v5129, %v5265
      %5267 = vmatmul.f32.gmra.mxu0 %v4655
      %v5268 = vpop.f32.mrf.mxu0
      %v5269 = vadd.f32 %v5132, %v5268
      %5270 = vmatmul.f32.gmra.mxu0 %v4659
      %v5271 = vpop.f32.mrf.mxu0
      %v5272 = vadd.f32 %v5135, %v5271
      %5273 = vmatmul.f32.gmra.mxu0 %v4663
      %v5274 = vpop.f32.mrf.mxu0
      %v5275 = vadd.f32 %v5138, %v5274
      %5276 = vmatmul.f32.gmra.mxu0 %v4667
      %v5277 = vpop.f32.mrf.mxu0
      %v5278 = vadd.f32 %v5141, %v5277
      %5279 = vdwg.mxu0
      %v5280 = vsel %vm470, %v5161, 0.0
      %5281 = vadd.xlane.f32.xlu0 %v5280
      %v5282 = vpop.xlane.xlu0 %5281
      %v5283 = vsel %vm470, %v5164, 0.0
      %5284 = vadd.xlane.f32.xlu0 %v5283
      %v5285 = vpop.xlane.xlu0 %5284
      %v5286 = vsel %vm470, %v5167, 0.0
      %5287 = vadd.xlane.f32.xlu0 %v5286
      %v5288 = vpop.xlane.xlu0 %5287
      %v5289 = vsel %vm470, %v5170, 0.0
      %5290 = vadd.xlane.f32.xlu0 %v5289
      %v5291 = vpop.xlane.xlu0 %5290
      %v5292 = vsel %vm470, %v5173, 0.0
      %5293 = vadd.xlane.f32.xlu0 %v5292
      %v5294 = vpop.xlane.xlu0 %5293
      %v5295 = vsel %vm470, %v5176, 0.0
      %5296 = vadd.xlane.f32.xlu0 %v5295
      %v5297 = vpop.xlane.xlu0 %5296
      %v5298 = vsel %vm470, %v5179, 0.0
      %5299 = vadd.xlane.f32.xlu0 %v5298
      %v5300 = vpop.xlane.xlu0 %5299
      %v5301 = vsel %vm470, %v5182, 0.0
      %5302 = vadd.xlane.f32.xlu0 %v5301
      %v5303 = vpop.xlane.xlu0 %5302
      %v5304 = vsel %vm470, %v5185, 0.0
      %5305 = vadd.xlane.f32.xlu0 %v5304
      %v5306 = vpop.xlane.xlu0 %5305
      %v5307 = vsel %vm470, %v5188, 0.0
      %5308 = vadd.xlane.f32.xlu0 %v5307
      %v5309 = vpop.xlane.xlu0 %5308
      %v5310 = vsel %vm470, %v5191, 0.0
      %5311 = vadd.xlane.f32.xlu0 %v5310
      %v5312 = vpop.xlane.xlu0 %5311
      %v5313 = vsel %vm470, %v5194, 0.0
      %5314 = vadd.xlane.f32.xlu0 %v5313
      %v5315 = vpop.xlane.xlu0 %5314
      %v5316 = vsel %vm470, %v5197, 0.0
      %5317 = vadd.xlane.f32.xlu0 %v5316
      %v5318 = vpop.xlane.xlu0 %5317
      %v5319 = vsel %vm470, %v5200, 0.0
      %5320 = vadd.xlane.f32.xlu0 %v5319
      %v5321 = vpop.xlane.xlu0 %5320
      %v5322 = vsel %vm470, %v5203, 0.0
      %5323 = vadd.xlane.f32.xlu0 %v5322
      %v5324 = vpop.xlane.xlu0 %5323
      %v5325 = vsel %vm470, %v5206, 0.0
      %5326 = vadd.xlane.f32.xlu0 %v5325
      %v5327 = vpop.xlane.xlu0 %5326
      %v5328 = vsel %vm470, %v5209, 0.0
      %5329 = vadd.xlane.f32.xlu0 %v5328
      %v5330 = vpop.xlane.xlu0 %5329
      %v5331 = vsel %vm470, %v5212, 0.0
      %5332 = vadd.xlane.f32.xlu0 %v5331
      %v5333 = vpop.xlane.xlu0 %5332
      %v5334 = vsel %vm470, %v5215, 0.0
      %5335 = vadd.xlane.f32.xlu0 %v5334
      %v5336 = vpop.xlane.xlu0 %5335
      %v5337 = vsel %vm470, %v5218, 0.0
      %5338 = vadd.xlane.f32.xlu0 %v5337
      %v5339 = vpop.xlane.xlu0 %5338
      %v5340 = vsel %vm470, %v5221, 0.0
      %5341 = vadd.xlane.f32.xlu0 %v5340
      %v5342 = vpop.xlane.xlu0 %5341
      %v5343 = vsel %vm470, %v5224, 0.0
      %5344 = vadd.xlane.f32.xlu0 %v5343
      %v5345 = vpop.xlane.xlu0 %5344
      %v5346 = vsel %vm470, %v5227, 0.0
      %5347 = vadd.xlane.f32.xlu0 %v5346
      %v5348 = vpop.xlane.xlu0 %5347
      %v5349 = vsel %vm470, %v5230, 0.0
      %5350 = vadd.xlane.f32.xlu0 %v5349
      %v5351 = vpop.xlane.xlu0 %5350
      %v5352 = vsel %vm470, %v5233, 0.0
      %5353 = vadd.xlane.f32.xlu0 %v5352
      %v5354 = vpop.xlane.xlu0 %5353
      %v5355 = vsel %vm470, %v5236, 0.0
      %5356 = vadd.xlane.f32.xlu0 %v5355
      %v5357 = vpop.xlane.xlu0 %5356
      %v5358 = vsel %vm470, %v5239, 0.0
      %5359 = vadd.xlane.f32.xlu0 %v5358
      %v5360 = vpop.xlane.xlu0 %5359
      %v5361 = vsel %vm470, %v5242, 0.0
      %5362 = vadd.xlane.f32.xlu0 %v5361
      %v5363 = vpop.xlane.xlu0 %5362
      %v5364 = vsel %vm470, %v5245, 0.0
      %5365 = vadd.xlane.f32.xlu0 %v5364
      %v5366 = vpop.xlane.xlu0 %5365
      %v5367 = vsel %vm470, %v5248, 0.0
      %5368 = vadd.xlane.f32.xlu0 %v5367
      %v5369 = vpop.xlane.xlu0 %5368
      %v5370 = vsel %vm470, %v5251, 0.0
      %5371 = vadd.xlane.f32.xlu0 %v5370
      %v5372 = vpop.xlane.xlu0 %5371
      %v5373 = vsel %vm470, %v5254, 0.0
      %5374 = vadd.xlane.f32.xlu0 %v5373
      %v5375 = vpop.xlane.xlu0 %5374
      %v5376 = vsel %vm470, %v5257, 0.0
      %5377 = vadd.xlane.f32.xlu0 %v5376
      %v5378 = vpop.xlane.xlu0 %5377
      %v5379 = vsel %vm470, %v5260, 0.0
      %5380 = vadd.xlane.f32.xlu0 %v5379
      %v5381 = vpop.xlane.xlu0 %5380
      %v5382 = vsel %vm470, %v5263, 0.0
      %5383 = vadd.xlane.f32.xlu0 %v5382
      %v5384 = vpop.xlane.xlu0 %5383
      %v5385 = vsel %vm470, %v5266, 0.0
      %5386 = vadd.xlane.f32.xlu0 %v5385
      %v5387 = vpop.xlane.xlu0 %5386
      %v5388 = vsel %vm470, %v5269, 0.0
      %5389 = vadd.xlane.f32.xlu0 %v5388
      %v5390 = vpop.xlane.xlu0 %5389
      %v5391 = vsel %vm470, %v5272, 0.0
      %5392 = vadd.xlane.f32.xlu0 %v5391
      %v5393 = vpop.xlane.xlu0 %5392
      %v5394 = vsel %vm470, %v5275, 0.0
      %5395 = vadd.xlane.f32.xlu0 %v5394
      %v5396 = vpop.xlane.xlu0 %5395
      %v5397 = vsel %vm470, %v5278, 0.0
      %5398 = vadd.xlane.f32.xlu0 %v5397
      %v5399 = vpop.xlane.xlu0 %5398
      %v5400 = vmul.f32 %v5282, %v3047
      %v5401 = vmul.f32 %v5285, %v3047
      %v5402 = vmul.f32 %v5288, %v3047
      %v5403 = vmul.f32 %v5291, %v3047
      %v5404 = vmul.f32 %v5294, %v3047
      %v5405 = vmul.f32 %v5297, %v3047
      %v5406 = vmul.f32 %v5300, %v3047
      %v5407 = vmul.f32 %v5303, %v3047
      %v5408 = vmul.f32 %v5306, %v3047
      %v5409 = vmul.f32 %v5309, %v3047
      %v5410 = vmul.f32 %v5312, %v3047
      %v5411 = vmul.f32 %v5315, %v3047
      %v5412 = vmul.f32 %v5318, %v3047
      %v5413 = vmul.f32 %v5321, %v3047
      %v5414 = vmul.f32 %v5324, %v3047
      %v5415 = vmul.f32 %v5327, %v3047
      %v5416 = vmul.f32 %v5330, %v3047
      %v5417 = vmul.f32 %v5333, %v3047
      %v5418 = vmul.f32 %v5336, %v3047
      %v5419 = vmul.f32 %v5339, %v3047
      %v5420 = vmul.f32 %v5342, %v3047
      %v5421 = vmul.f32 %v5345, %v3047
      %v5422 = vmul.f32 %v5348, %v3047
      %v5423 = vmul.f32 %v5351, %v3047
      %v5424 = vmul.f32 %v5354, %v3047
      %v5425 = vmul.f32 %v5357, %v3047
      %v5426 = vmul.f32 %v5360, %v3047
      %v5427 = vmul.f32 %v5363, %v3047
      %v5428 = vmul.f32 %v5366, %v3047
      %v5429 = vmul.f32 %v5369, %v3047
      %v5430 = vmul.f32 %v5372, %v3047
      %v5431 = vmul.f32 %v5375, %v3047
      %v5432 = vmul.f32 %v5378, %v3047
      %v5433 = vmul.f32 %v5381, %v3047
      %v5434 = vmul.f32 %v5384, %v3047
      %v5435 = vmul.f32 %v5387, %v3047
      %v5436 = vmul.f32 %v5390, %v3047
      %v5437 = vmul.f32 %v5393, %v3047
      %v5438 = vmul.f32 %v5396, %v3047
      %v5439 = vmul.f32 %v5399, %v3047
      %v5440 = vsub.f32 %v5161, %v5400
      %v5441 = vsub.f32 %v5164, %v5401
      %v5442 = vsub.f32 %v5167, %v5402
      %v5443 = vsub.f32 %v5170, %v5403
      %v5444 = vsub.f32 %v5173, %v5404
      %v5445 = vsub.f32 %v5176, %v5405
      %v5446 = vsub.f32 %v5179, %v5406
      %v5447 = vsub.f32 %v5182, %v5407
      %v5448 = vsub.f32 %v5185, %v5408
      %v5449 = vsub.f32 %v5188, %v5409
      %v5450 = vsub.f32 %v5191, %v5410
      %v5451 = vsub.f32 %v5194, %v5411
      %v5452 = vsub.f32 %v5197, %v5412
      %v5453 = vsub.f32 %v5200, %v5413
      %v5454 = vsub.f32 %v5203, %v5414
      %v5455 = vsub.f32 %v5206, %v5415
      %v5456 = vsub.f32 %v5209, %v5416
      %v5457 = vsub.f32 %v5212, %v5417
      %v5458 = vsub.f32 %v5215, %v5418
      %v5459 = vsub.f32 %v5218, %v5419
      %v5460 = vsub.f32 %v5221, %v5420
      %v5461 = vsub.f32 %v5224, %v5421
      %v5462 = vsub.f32 %v5227, %v5422
      %v5463 = vsub.f32 %v5230, %v5423
      %v5464 = vsub.f32 %v5233, %v5424
      %v5465 = vsub.f32 %v5236, %v5425
      %v5466 = vsub.f32 %v5239, %v5426
      %v5467 = vsub.f32 %v5242, %v5427
      %v5468 = vsub.f32 %v5245, %v5428
      %v5469 = vsub.f32 %v5248, %v5429
      %v5470 = vsub.f32 %v5251, %v5430
      %v5471 = vsub.f32 %v5254, %v5431
      %v5472 = vsub.f32 %v5257, %v5432
      %v5473 = vsub.f32 %v5260, %v5433
      %v5474 = vsub.f32 %v5263, %v5434
      %v5475 = vsub.f32 %v5266, %v5435
      %v5476 = vsub.f32 %v5269, %v5436
      %v5477 = vsub.f32 %v5272, %v5437
      %v5478 = vsub.f32 %v5275, %v5438
      %v5479 = vsub.f32 %v5278, %v5439
      %v5480 = vmul.f32 %v5440, %v5440
      %v5481 = vmul.f32 %v5441, %v5441
      %v5482 = vmul.f32 %v5442, %v5442
      %v5483 = vmul.f32 %v5443, %v5443
      %v5484 = vmul.f32 %v5444, %v5444
      %v5485 = vmul.f32 %v5445, %v5445
      %v5486 = vmul.f32 %v5446, %v5446
      %v5487 = vmul.f32 %v5447, %v5447
      %v5488 = vmul.f32 %v5448, %v5448
      %v5489 = vmul.f32 %v5449, %v5449
      %v5490 = vmul.f32 %v5450, %v5450
      %v5491 = vmul.f32 %v5451, %v5451
      %v5492 = vmul.f32 %v5452, %v5452
      %v5493 = vmul.f32 %v5453, %v5453
      %v5494 = vmul.f32 %v5454, %v5454
      %v5495 = vmul.f32 %v5455, %v5455
      %v5496 = vmul.f32 %v5456, %v5456
      %v5497 = vmul.f32 %v5457, %v5457
      %v5498 = vmul.f32 %v5458, %v5458
      %v5499 = vmul.f32 %v5459, %v5459
      %v5500 = vmul.f32 %v5460, %v5460
      %v5501 = vmul.f32 %v5461, %v5461
      %v5502 = vmul.f32 %v5462, %v5462
      %v5503 = vmul.f32 %v5463, %v5463
      %v5504 = vmul.f32 %v5464, %v5464
      %v5505 = vmul.f32 %v5465, %v5465
      %v5506 = vmul.f32 %v5466, %v5466
      %v5507 = vmul.f32 %v5467, %v5467
      %v5508 = vmul.f32 %v5468, %v5468
      %v5509 = vmul.f32 %v5469, %v5469
      %v5510 = vmul.f32 %v5470, %v5470
      %v5511 = vmul.f32 %v5471, %v5471
      %v5512 = vmul.f32 %v5472, %v5472
      %v5513 = vmul.f32 %v5473, %v5473
      %v5514 = vmul.f32 %v5474, %v5474
      %v5515 = vmul.f32 %v5475, %v5475
      %v5516 = vmul.f32 %v5476, %v5476
      %v5517 = vmul.f32 %v5477, %v5477
      %v5518 = vmul.f32 %v5478, %v5478
      %v5519 = vmul.f32 %v5479, %v5479
      %v5520 = vsel %vm470, %v5480, 0.0
      %5521 = vadd.xlane.f32.xlu0 %v5520
      %v5522 = vpop.xlane.xlu0 %5521
      %v5523 = vsel %vm470, %v5481, 0.0
      %5524 = vadd.xlane.f32.xlu0 %v5523
      %v5525 = vpop.xlane.xlu0 %5524
      %v5526 = vsel %vm470, %v5482, 0.0
      %5527 = vadd.xlane.f32.xlu0 %v5526
      %v5528 = vpop.xlane.xlu0 %5527
      %v5529 = vsel %vm470, %v5483, 0.0
      %5530 = vadd.xlane.f32.xlu0 %v5529
      %v5531 = vpop.xlane.xlu0 %5530
      %v5532 = vsel %vm470, %v5484, 0.0
      %5533 = vadd.xlane.f32.xlu0 %v5532
      %v5534 = vpop.xlane.xlu0 %5533
      %v5535 = vsel %vm470, %v5485, 0.0
      %5536 = vadd.xlane.f32.xlu0 %v5535
      %v5537 = vpop.xlane.xlu0 %5536
      %v5538 = vsel %vm470, %v5486, 0.0
      %5539 = vadd.xlane.f32.xlu0 %v5538
      %v5540 = vpop.xlane.xlu0 %5539
      %v5541 = vsel %vm470, %v5487, 0.0
      %5542 = vadd.xlane.f32.xlu0 %v5541
      %v5543 = vpop.xlane.xlu0 %5542
      %v5544 = vsel %vm470, %v5488, 0.0
      %5545 = vadd.xlane.f32.xlu0 %v5544
      %v5546 = vpop.xlane.xlu0 %5545
      %v5547 = vsel %vm470, %v5489, 0.0
      %5548 = vadd.xlane.f32.xlu0 %v5547
      %v5549 = vpop.xlane.xlu0 %5548
      %v5550 = vsel %vm470, %v5490, 0.0
      %5551 = vadd.xlane.f32.xlu0 %v5550
      %v5552 = vpop.xlane.xlu0 %5551
      %v5553 = vsel %vm470, %v5491, 0.0
      %5554 = vadd.xlane.f32.xlu0 %v5553
      %v5555 = vpop.xlane.xlu0 %5554
      %v5556 = vsel %vm470, %v5492, 0.0
      %5557 = vadd.xlane.f32.xlu0 %v5556
      %v5558 = vpop.xlane.xlu0 %5557
      %v5559 = vsel %vm470, %v5493, 0.0
      %5560 = vadd.xlane.f32.xlu0 %v5559
      %v5561 = vpop.xlane.xlu0 %5560
      %v5562 = vsel %vm470, %v5494, 0.0
      %5563 = vadd.xlane.f32.xlu0 %v5562
      %v5564 = vpop.xlane.xlu0 %5563
      %v5565 = vsel %vm470, %v5495, 0.0
      %5566 = vadd.xlane.f32.xlu0 %v5565
      %v5567 = vpop.xlane.xlu0 %5566
      %v5568 = vsel %vm470, %v5496, 0.0
      %5569 = vadd.xlane.f32.xlu0 %v5568
      %v5570 = vpop.xlane.xlu0 %5569
      %v5571 = vsel %vm470, %v5497, 0.0
      %5572 = vadd.xlane.f32.xlu0 %v5571
      %v5573 = vpop.xlane.xlu0 %5572
      %v5574 = vsel %vm470, %v5498, 0.0
      %5575 = vadd.xlane.f32.xlu0 %v5574
      %v5576 = vpop.xlane.xlu0 %5575
      %v5577 = vsel %vm470, %v5499, 0.0
      %5578 = vadd.xlane.f32.xlu0 %v5577
      %v5579 = vpop.xlane.xlu0 %5578
      %v5580 = vsel %vm470, %v5500, 0.0
      %5581 = vadd.xlane.f32.xlu0 %v5580
      %v5582 = vpop.xlane.xlu0 %5581
      %v5583 = vsel %vm470, %v5501, 0.0
      %5584 = vadd.xlane.f32.xlu0 %v5583
      %v5585 = vpop.xlane.xlu0 %5584
      %v5586 = vsel %vm470, %v5502, 0.0
      %5587 = vadd.xlane.f32.xlu0 %v5586
      %v5588 = vpop.xlane.xlu0 %5587
      %v5589 = vsel %vm470, %v5503, 0.0
      %5590 = vadd.xlane.f32.xlu0 %v5589
      %v5591 = vpop.xlane.xlu0 %5590
      %v5592 = vsel %vm470, %v5504, 0.0
      %5593 = vadd.xlane.f32.xlu0 %v5592
      %v5594 = vpop.xlane.xlu0 %5593
      %v5595 = vsel %vm470, %v5505, 0.0
      %5596 = vadd.xlane.f32.xlu0 %v5595
      %v5597 = vpop.xlane.xlu0 %5596
      %v5598 = vsel %vm470, %v5506, 0.0
      %5599 = vadd.xlane.f32.xlu0 %v5598
      %v5600 = vpop.xlane.xlu0 %5599
      %v5601 = vsel %vm470, %v5507, 0.0
      %5602 = vadd.xlane.f32.xlu0 %v5601
      %v5603 = vpop.xlane.xlu0 %5602
      %v5604 = vsel %vm470, %v5508, 0.0
      %5605 = vadd.xlane.f32.xlu0 %v5604
      %v5606 = vpop.xlane.xlu0 %5605
      %v5607 = vsel %vm470, %v5509, 0.0
      %5608 = vadd.xlane.f32.xlu0 %v5607
      %v5609 = vpop.xlane.xlu0 %5608
      %v5610 = vsel %vm470, %v5510, 0.0
      %5611 = vadd.xlane.f32.xlu0 %v5610
      %v5612 = vpop.xlane.xlu0 %5611
      %v5613 = vsel %vm470, %v5511, 0.0
      %5614 = vadd.xlane.f32.xlu0 %v5613
      %v5615 = vpop.xlane.xlu0 %5614
      %v5616 = vsel %vm470, %v5512, 0.0
      %5617 = vadd.xlane.f32.xlu0 %v5616
      %v5618 = vpop.xlane.xlu0 %5617
      %v5619 = vsel %vm470, %v5513, 0.0
      %5620 = vadd.xlane.f32.xlu0 %v5619
      %v5621 = vpop.xlane.xlu0 %5620
      %v5622 = vsel %vm470, %v5514, 0.0
      %5623 = vadd.xlane.f32.xlu0 %v5622
      %v5624 = vpop.xlane.xlu0 %5623
      %v5625 = vsel %vm470, %v5515, 0.0
      %5626 = vadd.xlane.f32.xlu0 %v5625
      %v5627 = vpop.xlane.xlu0 %5626
      %v5628 = vsel %vm470, %v5516, 0.0
      %5629 = vadd.xlane.f32.xlu0 %v5628
      %v5630 = vpop.xlane.xlu0 %5629
      %v5631 = vsel %vm470, %v5517, 0.0
      %5632 = vadd.xlane.f32.xlu0 %v5631
      %v5633 = vpop.xlane.xlu0 %5632
      %v5634 = vsel %vm470, %v5518, 0.0
      %5635 = vadd.xlane.f32.xlu0 %v5634
      %v5636 = vpop.xlane.xlu0 %5635
      %v5637 = vsel %vm470, %v5519, 0.0
      %5638 = vadd.xlane.f32.xlu0 %v5637
      %v5639 = vpop.xlane.xlu0 %5638
      %v5640 = vmul.f32 %v5522, %v3047
      %v5641 = vmul.f32 %v5525, %v3047
      %v5642 = vmul.f32 %v5528, %v3047
      %v5643 = vmul.f32 %v5531, %v3047
      %v5644 = vmul.f32 %v5534, %v3047
      %v5645 = vmul.f32 %v5537, %v3047
      %v5646 = vmul.f32 %v5540, %v3047
      %v5647 = vmul.f32 %v5543, %v3047
      %v5648 = vmul.f32 %v5546, %v3047
      %v5649 = vmul.f32 %v5549, %v3047
      %v5650 = vmul.f32 %v5552, %v3047
      %v5651 = vmul.f32 %v5555, %v3047
      %v5652 = vmul.f32 %v5558, %v3047
      %v5653 = vmul.f32 %v5561, %v3047
      %v5654 = vmul.f32 %v5564, %v3047
      %v5655 = vmul.f32 %v5567, %v3047
      %v5656 = vmul.f32 %v5570, %v3047
      %v5657 = vmul.f32 %v5573, %v3047
      %v5658 = vmul.f32 %v5576, %v3047
      %v5659 = vmul.f32 %v5579, %v3047
      %v5660 = vmul.f32 %v5582, %v3047
      %v5661 = vmul.f32 %v5585, %v3047
      %v5662 = vmul.f32 %v5588, %v3047
      %v5663 = vmul.f32 %v5591, %v3047
      %v5664 = vmul.f32 %v5594, %v3047
      %v5665 = vmul.f32 %v5597, %v3047
      %v5666 = vmul.f32 %v5600, %v3047
      %v5667 = vmul.f32 %v5603, %v3047
      %v5668 = vmul.f32 %v5606, %v3047
      %v5669 = vmul.f32 %v5609, %v3047
      %v5670 = vmul.f32 %v5612, %v3047
      %v5671 = vmul.f32 %v5615, %v3047
      %v5672 = vmul.f32 %v5618, %v3047
      %v5673 = vmul.f32 %v5621, %v3047
      %v5674 = vmul.f32 %v5624, %v3047
      %v5675 = vmul.f32 %v5627, %v3047
      %v5676 = vmul.f32 %v5630, %v3047
      %v5677 = vmul.f32 %v5633, %v3047
      %v5678 = vmul.f32 %v5636, %v3047
      %v5679 = vmul.f32 %v5639, %v3047
      %v5680 = vadd.f32 %v5640, 1e-05
      %v5681 = vadd.f32 %v5641, 1e-05
      %v5682 = vadd.f32 %v5642, 1e-05
      %v5683 = vadd.f32 %v5643, 1e-05
      %v5684 = vadd.f32 %v5644, 1e-05
      %v5685 = vadd.f32 %v5645, 1e-05
      %v5686 = vadd.f32 %v5646, 1e-05
      %v5687 = vadd.f32 %v5647, 1e-05
      %v5688 = vadd.f32 %v5648, 1e-05
      %v5689 = vadd.f32 %v5649, 1e-05
      %v5690 = vadd.f32 %v5650, 1e-05
      %v5691 = vadd.f32 %v5651, 1e-05
      %v5692 = vadd.f32 %v5652, 1e-05
      %v5693 = vadd.f32 %v5653, 1e-05
      %v5694 = vadd.f32 %v5654, 1e-05
      %v5695 = vadd.f32 %v5655, 1e-05
      %v5696 = vadd.f32 %v5656, 1e-05
      %v5697 = vadd.f32 %v5657, 1e-05
      %v5698 = vadd.f32 %v5658, 1e-05
      %v5699 = vadd.f32 %v5659, 1e-05
      %v5700 = vadd.f32 %v5660, 1e-05
      %v5701 = vadd.f32 %v5661, 1e-05
      %v5702 = vadd.f32 %v5662, 1e-05
      %v5703 = vadd.f32 %v5663, 1e-05
      %v5704 = vadd.f32 %v5664, 1e-05
      %v5705 = vadd.f32 %v5665, 1e-05
      %v5706 = vadd.f32 %v5666, 1e-05
      %v5707 = vadd.f32 %v5667, 1e-05
      %v5708 = vadd.f32 %v5668, 1e-05
      %v5709 = vadd.f32 %v5669, 1e-05
      %v5710 = vadd.f32 %v5670, 1e-05
      %v5711 = vadd.f32 %v5671, 1e-05
      %v5712 = vadd.f32 %v5672, 1e-05
      %v5713 = vadd.f32 %v5673, 1e-05
      %v5714 = vadd.f32 %v5674, 1e-05
      %v5715 = vadd.f32 %v5675, 1e-05
      %v5716 = vadd.f32 %v5676, 1e-05
      %v5717 = vadd.f32 %v5677, 1e-05
      %v5718 = vadd.f32 %v5678, 1e-05
      %v5719 = vadd.f32 %v5679, 1e-05
      %v5720 = vrsqrt.pop %v5680
      %v5721 = vmul.f32 %v5720, %v5680
      %v5722 = vmul.f32 %v5721, %v5720
      %v5723 = vmul.f32 0.5, %v5722
      %v5724 = vsub.f32 1.5, %v5723
      %v5725 = vmul.f32 %v5720, %v5724
      %vm5726 = vweird.f32 %v5680
      %vm5727 = vweird.f32 %v5720
      %vm5728 = vmor %vm5726, %vm5727
      %v5729 = vsel %vm5728, %v5720, %v5725
      %v5730 = vrsqrt.pop %v5681
      %v5731 = vmul.f32 %v5730, %v5681
      %v5732 = vmul.f32 %v5731, %v5730
      %v5733 = vmul.f32 0.5, %v5732
      %v5734 = vsub.f32 1.5, %v5733
      %v5735 = vmul.f32 %v5730, %v5734
      %vm5736 = vweird.f32 %v5681
      %vm5737 = vweird.f32 %v5730
      %vm5738 = vmor %vm5736, %vm5737
      %v5739 = vsel %vm5738, %v5730, %v5735
      %v5740 = vrsqrt.pop %v5682
      %v5741 = vmul.f32 %v5740, %v5682
      %v5742 = vmul.f32 %v5741, %v5740
      %v5743 = vmul.f32 0.5, %v5742
      %v5744 = vsub.f32 1.5, %v5743
      %v5745 = vmul.f32 %v5740, %v5744
      %vm5746 = vweird.f32 %v5682
      %vm5747 = vweird.f32 %v5740
      %vm5748 = vmor %vm5746, %vm5747
      %v5749 = vsel %vm5748, %v5740, %v5745
      %v5750 = vrsqrt.pop %v5683
      %v5751 = vmul.f32 %v5750, %v5683
      %v5752 = vmul.f32 %v5751, %v5750
      %v5753 = vmul.f32 0.5, %v5752
      %v5754 = vsub.f32 1.5, %v5753
      %v5755 = vmul.f32 %v5750, %v5754
      %vm5756 = vweird.f32 %v5683
      %vm5757 = vweird.f32 %v5750
      %vm5758 = vmor %vm5756, %vm5757
      %v5759 = vsel %vm5758, %v5750, %v5755
      %v5760 = vrsqrt.pop %v5684
      %v5761 = vmul.f32 %v5760, %v5684
      %v5762 = vmul.f32 %v5761, %v5760
      %v5763 = vmul.f32 0.5, %v5762
      %v5764 = vsub.f32 1.5, %v5763
      %v5765 = vmul.f32 %v5760, %v5764
      %vm5766 = vweird.f32 %v5684
      %vm5767 = vweird.f32 %v5760
      %vm5768 = vmor %vm5766, %vm5767
      %v5769 = vsel %vm5768, %v5760, %v5765
      %v5770 = vrsqrt.pop %v5685
      %v5771 = vmul.f32 %v5770, %v5685
      %v5772 = vmul.f32 %v5771, %v5770
      %v5773 = vmul.f32 0.5, %v5772
      %v5774 = vsub.f32 1.5, %v5773
      %v5775 = vmul.f32 %v5770, %v5774
      %vm5776 = vweird.f32 %v5685
      %vm5777 = vweird.f32 %v5770
      %vm5778 = vmor %vm5776, %vm5777
      %v5779 = vsel %vm5778, %v5770, %v5775
      %v5780 = vrsqrt.pop %v5686
      %v5781 = vmul.f32 %v5780, %v5686
      %v5782 = vmul.f32 %v5781, %v5780
      %v5783 = vmul.f32 0.5, %v5782
      %v5784 = vsub.f32 1.5, %v5783
      %v5785 = vmul.f32 %v5780, %v5784
      %vm5786 = vweird.f32 %v5686
      %vm5787 = vweird.f32 %v5780
      %vm5788 = vmor %vm5786, %vm5787
      %v5789 = vsel %vm5788, %v5780, %v5785
      %v5790 = vrsqrt.pop %v5687
      %v5791 = vmul.f32 %v5790, %v5687
      %v5792 = vmul.f32 %v5791, %v5790
      %v5793 = vmul.f32 0.5, %v5792
      %v5794 = vsub.f32 1.5, %v5793
      %v5795 = vmul.f32 %v5790, %v5794
      %vm5796 = vweird.f32 %v5687
      %vm5797 = vweird.f32 %v5790
      %vm5798 = vmor %vm5796, %vm5797
      %v5799 = vsel %vm5798, %v5790, %v5795
      %v5800 = vrsqrt.pop %v5688
      %v5801 = vmul.f32 %v5800, %v5688
      %v5802 = vmul.f32 %v5801, %v5800
      %v5803 = vmul.f32 0.5, %v5802
      %v5804 = vsub.f32 1.5, %v5803
      %v5805 = vmul.f32 %v5800, %v5804
      %vm5806 = vweird.f32 %v5688
      %vm5807 = vweird.f32 %v5800
      %vm5808 = vmor %vm5806, %vm5807
      %v5809 = vsel %vm5808, %v5800, %v5805
      %v5810 = vrsqrt.pop %v5689
      %v5811 = vmul.f32 %v5810, %v5689
      %v5812 = vmul.f32 %v5811, %v5810
      %v5813 = vmul.f32 0.5, %v5812
      %v5814 = vsub.f32 1.5, %v5813
      %v5815 = vmul.f32 %v5810, %v5814
      %vm5816 = vweird.f32 %v5689
      %vm5817 = vweird.f32 %v5810
      %vm5818 = vmor %vm5816, %vm5817
      %v5819 = vsel %vm5818, %v5810, %v5815
      %v5820 = vrsqrt.pop %v5690
      %v5821 = vmul.f32 %v5820, %v5690
      %v5822 = vmul.f32 %v5821, %v5820
      %v5823 = vmul.f32 0.5, %v5822
      %v5824 = vsub.f32 1.5, %v5823
      %v5825 = vmul.f32 %v5820, %v5824
      %vm5826 = vweird.f32 %v5690
      %vm5827 = vweird.f32 %v5820
      %vm5828 = vmor %vm5826, %vm5827
      %v5829 = vsel %vm5828, %v5820, %v5825
      %v5830 = vrsqrt.pop %v5691
      %v5831 = vmul.f32 %v5830, %v5691
      %v5832 = vmul.f32 %v5831, %v5830
      %v5833 = vmul.f32 0.5, %v5832
      %v5834 = vsub.f32 1.5, %v5833
      %v5835 = vmul.f32 %v5830, %v5834
      %vm5836 = vweird.f32 %v5691
      %vm5837 = vweird.f32 %v5830
      %vm5838 = vmor %vm5836, %vm5837
      %v5839 = vsel %vm5838, %v5830, %v5835
      %v5840 = vrsqrt.pop %v5692
      %v5841 = vmul.f32 %v5840, %v5692
      %v5842 = vmul.f32 %v5841, %v5840
      %v5843 = vmul.f32 0.5, %v5842
      %v5844 = vsub.f32 1.5, %v5843
      %v5845 = vmul.f32 %v5840, %v5844
      %vm5846 = vweird.f32 %v5692
      %vm5847 = vweird.f32 %v5840
      %vm5848 = vmor %vm5846, %vm5847
      %v5849 = vsel %vm5848, %v5840, %v5845
      %v5850 = vrsqrt.pop %v5693
      %v5851 = vmul.f32 %v5850, %v5693
      %v5852 = vmul.f32 %v5851, %v5850
      %v5853 = vmul.f32 0.5, %v5852
      %v5854 = vsub.f32 1.5, %v5853
      %v5855 = vmul.f32 %v5850, %v5854
      %vm5856 = vweird.f32 %v5693
      %vm5857 = vweird.f32 %v5850
      %vm5858 = vmor %vm5856, %vm5857
      %v5859 = vsel %vm5858, %v5850, %v5855
      %v5860 = vrsqrt.pop %v5694
      %v5861 = vmul.f32 %v5860, %v5694
      %v5862 = vmul.f32 %v5861, %v5860
      %v5863 = vmul.f32 0.5, %v5862
      %v5864 = vsub.f32 1.5, %v5863
      %v5865 = vmul.f32 %v5860, %v5864
      %vm5866 = vweird.f32 %v5694
      %vm5867 = vweird.f32 %v5860
      %vm5868 = vmor %vm5866, %vm5867
      %v5869 = vsel %vm5868, %v5860, %v5865
      %v5870 = vrsqrt.pop %v5695
      %v5871 = vmul.f32 %v5870, %v5695
      %v5872 = vmul.f32 %v5871, %v5870
      %v5873 = vmul.f32 0.5, %v5872
      %v5874 = vsub.f32 1.5, %v5873
      %v5875 = vmul.f32 %v5870, %v5874
      %vm5876 = vweird.f32 %v5695
      %vm5877 = vweird.f32 %v5870
      %vm5878 = vmor %vm5876, %vm5877
      %v5879 = vsel %vm5878, %v5870, %v5875
      %v5880 = vrsqrt.pop %v5696
      %v5881 = vmul.f32 %v5880, %v5696
      %v5882 = vmul.f32 %v5881, %v5880
      %v5883 = vmul.f32 0.5, %v5882
      %v5884 = vsub.f32 1.5, %v5883
      %v5885 = vmul.f32 %v5880, %v5884
      %vm5886 = vweird.f32 %v5696
      %vm5887 = vweird.f32 %v5880
      %vm5888 = vmor %vm5886, %vm5887
      %v5889 = vsel %vm5888, %v5880, %v5885
      %v5890 = vrsqrt.pop %v5697
      %v5891 = vmul.f32 %v5890, %v5697
      %v5892 = vmul.f32 %v5891, %v5890
      %v5893 = vmul.f32 0.5, %v5892
      %v5894 = vsub.f32 1.5, %v5893
      %v5895 = vmul.f32 %v5890, %v5894
      %vm5896 = vweird.f32 %v5697
      %vm5897 = vweird.f32 %v5890
      %vm5898 = vmor %vm5896, %vm5897
      %v5899 = vsel %vm5898, %v5890, %v5895
      %v5900 = vrsqrt.pop %v5698
      %v5901 = vmul.f32 %v5900, %v5698
      %v5902 = vmul.f32 %v5901, %v5900
      %v5903 = vmul.f32 0.5, %v5902
      %v5904 = vsub.f32 1.5, %v5903
      %v5905 = vmul.f32 %v5900, %v5904
      %vm5906 = vweird.f32 %v5698
      %vm5907 = vweird.f32 %v5900
      %vm5908 = vmor %vm5906, %vm5907
      %v5909 = vsel %vm5908, %v5900, %v5905
      %v5910 = vrsqrt.pop %v5699
      %v5911 = vmul.f32 %v5910, %v5699
      %v5912 = vmul.f32 %v5911, %v5910
      %v5913 = vmul.f32 0.5, %v5912
      %v5914 = vsub.f32 1.5, %v5913
      %v5915 = vmul.f32 %v5910, %v5914
      %vm5916 = vweird.f32 %v5699
      %vm5917 = vweird.f32 %v5910
      %vm5918 = vmor %vm5916, %vm5917
      %v5919 = vsel %vm5918, %v5910, %v5915
      %v5920 = vrsqrt.pop %v5700
      %v5921 = vmul.f32 %v5920, %v5700
      %v5922 = vmul.f32 %v5921, %v5920
      %v5923 = vmul.f32 0.5, %v5922
      %v5924 = vsub.f32 1.5, %v5923
      %v5925 = vmul.f32 %v5920, %v5924
      %vm5926 = vweird.f32 %v5700
      %vm5927 = vweird.f32 %v5920
      %vm5928 = vmor %vm5926, %vm5927
      %v5929 = vsel %vm5928, %v5920, %v5925
      %v5930 = vrsqrt.pop %v5701
      %v5931 = vmul.f32 %v5930, %v5701
      %v5932 = vmul.f32 %v5931, %v5930
      %v5933 = vmul.f32 0.5, %v5932
      %v5934 = vsub.f32 1.5, %v5933
      %v5935 = vmul.f32 %v5930, %v5934
      %vm5936 = vweird.f32 %v5701
      %vm5937 = vweird.f32 %v5930
      %vm5938 = vmor %vm5936, %vm5937
      %v5939 = vsel %vm5938, %v5930, %v5935
      %v5940 = vrsqrt.pop %v5702
      %v5941 = vmul.f32 %v5940, %v5702
      %v5942 = vmul.f32 %v5941, %v5940
      %v5943 = vmul.f32 0.5, %v5942
      %v5944 = vsub.f32 1.5, %v5943
      %v5945 = vmul.f32 %v5940, %v5944
      %vm5946 = vweird.f32 %v5702
      %vm5947 = vweird.f32 %v5940
      %vm5948 = vmor %vm5946, %vm5947
      %v5949 = vsel %vm5948, %v5940, %v5945
      %v5950 = vrsqrt.pop %v5703
      %v5951 = vmul.f32 %v5950, %v5703
      %v5952 = vmul.f32 %v5951, %v5950
      %v5953 = vmul.f32 0.5, %v5952
      %v5954 = vsub.f32 1.5, %v5953
      %v5955 = vmul.f32 %v5950, %v5954
      %vm5956 = vweird.f32 %v5703
      %vm5957 = vweird.f32 %v5950
      %vm5958 = vmor %vm5956, %vm5957
      %v5959 = vsel %vm5958, %v5950, %v5955
      %v5960 = vrsqrt.pop %v5704
      %v5961 = vmul.f32 %v5960, %v5704
      %v5962 = vmul.f32 %v5961, %v5960
      %v5963 = vmul.f32 0.5, %v5962
      %v5964 = vsub.f32 1.5, %v5963
      %v5965 = vmul.f32 %v5960, %v5964
      %vm5966 = vweird.f32 %v5704
      %vm5967 = vweird.f32 %v5960
      %vm5968 = vmor %vm5966, %vm5967
      %v5969 = vsel %vm5968, %v5960, %v5965
      %v5970 = vrsqrt.pop %v5705
      %v5971 = vmul.f32 %v5970, %v5705
      %v5972 = vmul.f32 %v5971, %v5970
      %v5973 = vmul.f32 0.5, %v5972
      %v5974 = vsub.f32 1.5, %v5973
      %v5975 = vmul.f32 %v5970, %v5974
      %vm5976 = vweird.f32 %v5705
      %vm5977 = vweird.f32 %v5970
      %vm5978 = vmor %vm5976, %vm5977
      %v5979 = vsel %vm5978, %v5970, %v5975
      %v5980 = vrsqrt.pop %v5706
      %v5981 = vmul.f32 %v5980, %v5706
      %v5982 = vmul.f32 %v5981, %v5980
      %v5983 = vmul.f32 0.5, %v5982
      %v5984 = vsub.f32 1.5, %v5983
      %v5985 = vmul.f32 %v5980, %v5984
      %vm5986 = vweird.f32 %v5706
      %vm5987 = vweird.f32 %v5980
      %vm5988 = vmor %vm5986, %vm5987
      %v5989 = vsel %vm5988, %v5980, %v5985
      %v5990 = vrsqrt.pop %v5707
      %v5991 = vmul.f32 %v5990, %v5707
      %v5992 = vmul.f32 %v5991, %v5990
      %v5993 = vmul.f32 0.5, %v5992
      %v5994 = vsub.f32 1.5, %v5993
      %v5995 = vmul.f32 %v5990, %v5994
      %vm5996 = vweird.f32 %v5707
      %vm5997 = vweird.f32 %v5990
      %vm5998 = vmor %vm5996, %vm5997
      %v5999 = vsel %vm5998, %v5990, %v5995
      %v6000 = vrsqrt.pop %v5708
      %v6001 = vmul.f32 %v6000, %v5708
      %v6002 = vmul.f32 %v6001, %v6000
      %v6003 = vmul.f32 0.5, %v6002
      %v6004 = vsub.f32 1.5, %v6003
      %v6005 = vmul.f32 %v6000, %v6004
      %vm6006 = vweird.f32 %v5708
      %vm6007 = vweird.f32 %v6000
      %vm6008 = vmor %vm6006, %vm6007
      %v6009 = vsel %vm6008, %v6000, %v6005
      %v6010 = vrsqrt.pop %v5709
      %v6011 = vmul.f32 %v6010, %v5709
      %v6012 = vmul.f32 %v6011, %v6010
      %v6013 = vmul.f32 0.5, %v6012
      %v6014 = vsub.f32 1.5, %v6013
      %v6015 = vmul.f32 %v6010, %v6014
      %vm6016 = vweird.f32 %v5709
      %vm6017 = vweird.f32 %v6010
      %vm6018 = vmor %vm6016, %vm6017
      %v6019 = vsel %vm6018, %v6010, %v6015
      %v6020 = vrsqrt.pop %v5710
      %v6021 = vmul.f32 %v6020, %v5710
      %v6022 = vmul.f32 %v6021, %v6020
      %v6023 = vmul.f32 0.5, %v6022
      %v6024 = vsub.f32 1.5, %v6023
      %v6025 = vmul.f32 %v6020, %v6024
      %vm6026 = vweird.f32 %v5710
      %vm6027 = vweird.f32 %v6020
      %vm6028 = vmor %vm6026, %vm6027
      %v6029 = vsel %vm6028, %v6020, %v6025
      %v6030 = vrsqrt.pop %v5711
      %v6031 = vmul.f32 %v6030, %v5711
      %v6032 = vmul.f32 %v6031, %v6030
      %v6033 = vmul.f32 0.5, %v6032
      %v6034 = vsub.f32 1.5, %v6033
      %v6035 = vmul.f32 %v6030, %v6034
      %vm6036 = vweird.f32 %v5711
      %vm6037 = vweird.f32 %v6030
      %vm6038 = vmor %vm6036, %vm6037
      %v6039 = vsel %vm6038, %v6030, %v6035
      %v6040 = vrsqrt.pop %v5712
      %v6041 = vmul.f32 %v6040, %v5712
      %v6042 = vmul.f32 %v6041, %v6040
      %v6043 = vmul.f32 0.5, %v6042
      %v6044 = vsub.f32 1.5, %v6043
      %v6045 = vmul.f32 %v6040, %v6044
      %vm6046 = vweird.f32 %v5712
      %vm6047 = vweird.f32 %v6040
      %vm6048 = vmor %vm6046, %vm6047
      %v6049 = vsel %vm6048, %v6040, %v6045
      %v6050 = vrsqrt.pop %v5713
      %v6051 = vmul.f32 %v6050, %v5713
      %v6052 = vmul.f32 %v6051, %v6050
      %v6053 = vmul.f32 0.5, %v6052
      %v6054 = vsub.f32 1.5, %v6053
      %v6055 = vmul.f32 %v6050, %v6054
      %vm6056 = vweird.f32 %v5713
      %vm6057 = vweird.f32 %v6050
      %vm6058 = vmor %vm6056, %vm6057
      %v6059 = vsel %vm6058, %v6050, %v6055
      %v6060 = vrsqrt.pop %v5714
      %v6061 = vmul.f32 %v6060, %v5714
      %v6062 = vmul.f32 %v6061, %v6060
      %v6063 = vmul.f32 0.5, %v6062
      %v6064 = vsub.f32 1.5, %v6063
      %v6065 = vmul.f32 %v6060, %v6064
      %vm6066 = vweird.f32 %v5714
      %vm6067 = vweird.f32 %v6060
      %vm6068 = vmor %vm6066, %vm6067
      %v6069 = vsel %vm6068, %v6060, %v6065
      %v6070 = vrsqrt.pop %v5715
      %v6071 = vmul.f32 %v6070, %v5715
      %v6072 = vmul.f32 %v6071, %v6070
      %v6073 = vmul.f32 0.5, %v6072
      %v6074 = vsub.f32 1.5, %v6073
      %v6075 = vmul.f32 %v6070, %v6074
      %vm6076 = vweird.f32 %v5715
      %vm6077 = vweird.f32 %v6070
      %vm6078 = vmor %vm6076, %vm6077
      %v6079 = vsel %vm6078, %v6070, %v6075
      %v6080 = vrsqrt.pop %v5716
      %v6081 = vmul.f32 %v6080, %v5716
      %v6082 = vmul.f32 %v6081, %v6080
      %v6083 = vmul.f32 0.5, %v6082
      %v6084 = vsub.f32 1.5, %v6083
      %v6085 = vmul.f32 %v6080, %v6084
      %vm6086 = vweird.f32 %v5716
      %vm6087 = vweird.f32 %v6080
      %vm6088 = vmor %vm6086, %vm6087
      %v6089 = vsel %vm6088, %v6080, %v6085
      %v6090 = vrsqrt.pop %v5717
      %v6091 = vmul.f32 %v6090, %v5717
      %v6092 = vmul.f32 %v6091, %v6090
      %v6093 = vmul.f32 0.5, %v6092
      %v6094 = vsub.f32 1.5, %v6093
      %v6095 = vmul.f32 %v6090, %v6094
      %vm6096 = vweird.f32 %v5717
      %vm6097 = vweird.f32 %v6090
      %vm6098 = vmor %vm6096, %vm6097
      %v6099 = vsel %vm6098, %v6090, %v6095
      %v6100 = vrsqrt.pop %v5718
      %v6101 = vmul.f32 %v6100, %v5718
      %v6102 = vmul.f32 %v6101, %v6100
      %v6103 = vmul.f32 0.5, %v6102
      %v6104 = vsub.f32 1.5, %v6103
      %v6105 = vmul.f32 %v6100, %v6104
      %vm6106 = vweird.f32 %v5718
      %vm6107 = vweird.f32 %v6100
      %vm6108 = vmor %vm6106, %vm6107
      %v6109 = vsel %vm6108, %v6100, %v6105
      %v6110 = vrsqrt.pop %v5719
      %v6111 = vmul.f32 %v6110, %v5719
      %v6112 = vmul.f32 %v6111, %v6110
      %v6113 = vmul.f32 0.5, %v6112
      %v6114 = vsub.f32 1.5, %v6113
      %v6115 = vmul.f32 %v6110, %v6114
      %vm6116 = vweird.f32 %v5719
      %vm6117 = vweird.f32 %v6110
      %vm6118 = vmor %vm6116, %vm6117
      %v6119 = vsel %vm6118, %v6110, %v6115
      %v6120 = vmul.f32 %v5440, %v5729
      %v6121 = vmul.f32 %v5441, %v5739
      %v6122 = vmul.f32 %v5442, %v5749
      %v6123 = vmul.f32 %v5443, %v5759
      %v6124 = vmul.f32 %v5444, %v5769
      %v6125 = vmul.f32 %v5445, %v5779
      %v6126 = vmul.f32 %v5446, %v5789
      %v6127 = vmul.f32 %v5447, %v5799
      %v6128 = vmul.f32 %v5448, %v5809
      %v6129 = vmul.f32 %v5449, %v5819
      %v6130 = vmul.f32 %v5450, %v5829
      %v6131 = vmul.f32 %v5451, %v5839
      %v6132 = vmul.f32 %v5452, %v5849
      %v6133 = vmul.f32 %v5453, %v5859
      %v6134 = vmul.f32 %v5454, %v5869
      %v6135 = vmul.f32 %v5455, %v5879
      %v6136 = vmul.f32 %v5456, %v5889
      %v6137 = vmul.f32 %v5457, %v5899
      %v6138 = vmul.f32 %v5458, %v5909
      %v6139 = vmul.f32 %v5459, %v5919
      %v6140 = vmul.f32 %v5460, %v5929
      %v6141 = vmul.f32 %v5461, %v5939
      %v6142 = vmul.f32 %v5462, %v5949
      %v6143 = vmul.f32 %v5463, %v5959
      %v6144 = vmul.f32 %v5464, %v5969
      %v6145 = vmul.f32 %v5465, %v5979
      %v6146 = vmul.f32 %v5466, %v5989
      %v6147 = vmul.f32 %v5467, %v5999
      %v6148 = vmul.f32 %v5468, %v6009
      %v6149 = vmul.f32 %v5469, %v6019
      %v6150 = vmul.f32 %v5470, %v6029
      %v6151 = vmul.f32 %v5471, %v6039
      %v6152 = vmul.f32 %v5472, %v6049
      %v6153 = vmul.f32 %v5473, %v6059
      %v6154 = vmul.f32 %v5474, %v6069
      %v6155 = vmul.f32 %v5475, %v6079
      %v6156 = vmul.f32 %v5476, %v6089
      %v6157 = vmul.f32 %v5477, %v6099
      %v6158 = vmul.f32 %v5478, %v6109
      %v6159 = vmul.f32 %v5479, %v6119
      %6160 = vst.msk [vmem:[%s373] sm:$0xff] %vm470, %v6120
      %6161 = vst.msk [vmem:[%s373 + $0x8] sm:$0xff] %vm470, %v6121
      %6162 = vst.msk [vmem:[%s373 + $0x10] sm:$0xff] %vm470, %v6122
      %6163 = vst.msk [vmem:[%s373 + $0x18] sm:$0xff] %vm470, %v6123
      %6164 = vst.msk [vmem:[%s373 + $0x20] sm:$0xff] %vm470, %v6124
      %6165 = vst.msk [vmem:[%s373 + $0x28] sm:$0xff] %vm470, %v6125
      %6166 = vst.msk [vmem:[%s373 + $0x30] sm:$0xff] %vm470, %v6126
      %6167 = vst.msk [vmem:[%s373 + $0x38] sm:$0xff] %vm470, %v6127
      %6168 = vst.msk [vmem:[%s373 + $0x40] sm:$0xff] %vm470, %v6128
      %6169 = vst.msk [vmem:[%s373 + $0x48] sm:$0xff] %vm470, %v6129
      %6170 = vst.msk [vmem:[%s373 + $0x50] sm:$0xff] %vm470, %v6130
      %6171 = vst.msk [vmem:[%s373 + $0x58] sm:$0xff] %vm470, %v6131
      %6172 = vst.msk [vmem:[%s373 + $0x60] sm:$0xff] %vm470, %v6132
      %6173 = vst.msk [vmem:[%s373 + $0x68] sm:$0xff] %vm470, %v6133
      %6174 = vst.msk [vmem:[%s373 + $0x70] sm:$0xff] %vm470, %v6134
      %6175 = vst.msk [vmem:[%s373 + $0x78] sm:$0xff] %vm470, %v6135
      %6176 = vst.msk [vmem:[%s373 + $0x80] sm:$0xff] %vm470, %v6136
      %6177 = vst.msk [vmem:[%s373 + $0x88] sm:$0xff] %vm470, %v6137
      %6178 = vst.msk [vmem:[%s373 + $0x90] sm:$0xff] %vm470, %v6138
      %6179 = vst.msk [vmem:[%s373 + $0x98] sm:$0xff] %vm470, %v6139
      %6180 = vst.msk [vmem:[%s373 + $0xa0] sm:$0xff] %vm470, %v6140
      %6181 = vst.msk [vmem:[%s373 + $0xa8] sm:$0xff] %vm470, %v6141
      %6182 = vst.msk [vmem:[%s373 + $0xb0] sm:$0xff] %vm470, %v6142
      %6183 = vst.msk [vmem:[%s373 + $0xb8] sm:$0xff] %vm470, %v6143
      %6184 = vst.msk [vmem:[%s373 + $0xc0] sm:$0xff] %vm470, %v6144
      %6185 = vst.msk [vmem:[%s373 + $0xc8] sm:$0xff] %vm470, %v6145
      %6186 = vst.msk [vmem:[%s373 + $0xd0] sm:$0xff] %vm470, %v6146
      %6187 = vst.msk [vmem:[%s373 + $0xd8] sm:$0xff] %vm470, %v6147
      %6188 = vst.msk [vmem:[%s373 + $0xe0] sm:$0xff] %vm470, %v6148
      %6189 = vst.msk [vmem:[%s373 + $0xe8] sm:$0xff] %vm470, %v6149
      %6190 = vst.msk [vmem:[%s373 + $0xf0] sm:$0xff] %vm470, %v6150
      %6191 = vst.msk [vmem:[%s373 + $0xf8] sm:$0xff] %vm470, %v6151
      %6192 = vst.msk [vmem:[%s373 + $0x100] sm:$0xff] %vm470, %v6152
      %6193 = vst.msk [vmem:[%s373 + $0x108] sm:$0xff] %vm470, %v6153
      %6194 = vst.msk [vmem:[%s373 + $0x110] sm:$0xff] %vm470, %v6154
      %6195 = vst.msk [vmem:[%s373 + $0x118] sm:$0xff] %vm470, %v6155
      %6196 = vst.msk [vmem:[%s373 + $0x120] sm:$0xff] %vm470, %v6156
      %6197 = vst.msk [vmem:[%s373 + $0x128] sm:$0xff] %vm470, %v6157
      %6198 = vst.msk [vmem:[%s373 + $0x130] sm:$0xff] %vm470, %v6158
      %6199 = vst.msk [vmem:[%s373 + $0x138] sm:$0xff] %vm470, %v6159
      %v6200 = vsel %vm1719, %v2240, 0.0
      %v6201 = vsel %vm1719, %v2241, 0.0
      %v6202 = vsel %vm1719, %v2242, 0.0
      %v6203 = vsel %vm1719, %v2243, 0.0
      %v6204 = vsel %vm1719, %v2244, 0.0
      %v6205 = vsel %vm1719, %v2245, 0.0
      %v6206 = vsel %vm1719, %v2246, 0.0
      %v6207 = vsel %vm1719, %v2247, 0.0
      %v6208 = vsel %vm1719, %v2248, 0.0
      %v6209 = vsel %vm1719, %v2249, 0.0
      %v6210 = vsel %vm1719, %v2250, 0.0
      %v6211 = vsel %vm1719, %v2251, 0.0
      %v6212 = vsel %vm1719, %v2252, 0.0
      %v6213 = vsel %vm1719, %v2253, 0.0
      %v6214 = vsel %vm1719, %v2254, 0.0
      %v6215 = vsel %vm1719, %v2255, 0.0
      %v6216 = vsel %vm1719, %v2256, 0.0
      %v6217 = vsel %vm1719, %v2257, 0.0
      %v6218 = vsel %vm1719, %v2258, 0.0
      %v6219 = vsel %vm1719, %v2259, 0.0
      %v6220 = vsel %vm1719, %v2260, 0.0
      %v6221 = vsel %vm1719, %v2261, 0.0
      %v6222 = vsel %vm1719, %v2262, 0.0
      %v6223 = vsel %vm1719, %v2263, 0.0
      %v6224 = vsel %vm1719, %v2264, 0.0
      %v6225 = vsel %vm1719, %v2265, 0.0
      %v6226 = vsel %vm1719, %v2266, 0.0
      %v6227 = vsel %vm1719, %v2267, 0.0
      %v6228 = vsel %vm1719, %v2268, 0.0
      %v6229 = vsel %vm1719, %v2269, 0.0
      %v6230 = vsel %vm1719, %v2270, 0.0
      %v6231 = vsel %vm1719, %v2271, 0.0
      %v6232 = vsel %vm1719, %v2272, 0.0
      %v6233 = vsel %vm1719, %v2273, 0.0
      %v6234 = vsel %vm1719, %v2274, 0.0
      %v6235 = vsel %vm1719, %v2275, 0.0
      %v6236 = vsel %vm1719, %v2276, 0.0
      %v6237 = vsel %vm1719, %v2277, 0.0
      %v6238 = vsel %vm1719, %v2278, 0.0
      %v6239 = vsel %vm1719, %v2279, 0.0
      %6240 = vst [vmem:[%s380] sm:$0xff] %v6200
      %6241 = vst [vmem:[%s380 + $0x8] sm:$0xff] %v6201
      %6242 = vst [vmem:[%s380 + $0x10] sm:$0xff] %v6202
      %6243 = vst [vmem:[%s380 + $0x18] sm:$0xff] %v6203
      %6244 = vst [vmem:[%s380 + $0x20] sm:$0xff] %v6204
      %6245 = vst [vmem:[%s380 + $0x28] sm:$0xff] %v6205
      %6246 = vst [vmem:[%s380 + $0x30] sm:$0xff] %v6206
      %6247 = vst [vmem:[%s380 + $0x38] sm:$0xff] %v6207
      %6248 = vst [vmem:[%s380 + $0x40] sm:$0xff] %v6208
      %6249 = vst [vmem:[%s380 + $0x48] sm:$0xff] %v6209
      %6250 = vst [vmem:[%s380 + $0x50] sm:$0xff] %v6210
      %6251 = vst [vmem:[%s380 + $0x58] sm:$0xff] %v6211
      %6252 = vst [vmem:[%s380 + $0x60] sm:$0xff] %v6212
      %6253 = vst [vmem:[%s380 + $0x68] sm:$0xff] %v6213
      %6254 = vst [vmem:[%s380 + $0x70] sm:$0xff] %v6214
      %6255 = vst [vmem:[%s380 + $0x78] sm:$0xff] %v6215
      %6256 = vst [vmem:[%s380 + $0x80] sm:$0xff] %v6216
      %6257 = vst [vmem:[%s380 + $0x88] sm:$0xff] %v6217
      %6258 = vst [vmem:[%s380 + $0x90] sm:$0xff] %v6218
      %6259 = vst [vmem:[%s380 + $0x98] sm:$0xff] %v6219
      %6260 = vst [vmem:[%s380 + $0xa0] sm:$0xff] %v6220
      %6261 = vst [vmem:[%s380 + $0xa8] sm:$0xff] %v6221
      %6262 = vst [vmem:[%s380 + $0xb0] sm:$0xff] %v6222
      %6263 = vst [vmem:[%s380 + $0xb8] sm:$0xff] %v6223
      %6264 = vst [vmem:[%s380 + $0xc0] sm:$0xff] %v6224
      %6265 = vst [vmem:[%s380 + $0xc8] sm:$0xff] %v6225
      %6266 = vst [vmem:[%s380 + $0xd0] sm:$0xff] %v6226
      %6267 = vst [vmem:[%s380 + $0xd8] sm:$0xff] %v6227
      %6268 = vst [vmem:[%s380 + $0xe0] sm:$0xff] %v6228
      %6269 = vst [vmem:[%s380 + $0xe8] sm:$0xff] %v6229
      %6270 = vst [vmem:[%s380 + $0xf0] sm:$0xff] %v6230
      %6271 = vst [vmem:[%s380 + $0xf8] sm:$0xff] %v6231
      %6272 = vst [vmem:[%s380 + $0x100] sm:$0xff] %v6232
      %6273 = vst [vmem:[%s380 + $0x108] sm:$0xff] %v6233
      %6274 = vst [vmem:[%s380 + $0x110] sm:$0xff] %v6234
      %6275 = vst [vmem:[%s380 + $0x118] sm:$0xff] %v6235
      %6276 = vst [vmem:[%s380 + $0x120] sm:$0xff] %v6236
      %6277 = vst [vmem:[%s380 + $0x128] sm:$0xff] %v6237
      %6278 = vst [vmem:[%s380 + $0x130] sm:$0xff] %v6238
      %6279 = vst [vmem:[%s380 + $0x138] sm:$0xff] %v6239
      %s6280 = smul.u32 8, %s21
      %p6281 = scmp.lt.s32.totalorder %s6280, 15
      %s6282 = scalar_select %p6281, %s6280, 15
      %s6283 = smul.addr %s6282, 5
      %s6284 = smul.addr %s6283, 8
      %s6285 = scalar_lea.vmem %s8, %s6284
      %s6286 = smul.u32 8, %s21
      %p6287 = scmp.lt.s32.totalorder %s6286, 15
      %s6288 = scalar_select %p6287, %s6286, 15
      %s6289 = smul.addr %s6288, 5
      %s6290 = smul.addr %s6289, 8
      %s6291 = scalar_lea.vmem %s9, %s6290
      // Predicated region
      $region53: #{cross_attention.1} parent=51 // pred_check
        %p6292 = pneg %p217
      $region54: #{cross_attention.1} parent=51 // pred_check_branch
        %6294 = sbr.rel (%p6292) target = $region56
      $region55: #{cross_attention.1} parent=51 // pred_region
        %s6295 = smul.u32 8, %s21
      $region56: #{cross_attention.1} parent=51 // pred_fallthru
        _
      // Predicated region
      $region57: #{cross_attention.1} parent=51 // pred_check
        %p6296 = pneg %p243
      $region58: #{cross_attention.1} parent=51 // pred_check_branch
        %6298 = sbr.rel (%p6296) target = $region60
      $region59: #{cross_attention.1} parent=51 // pred_region
        %s6299 = smul.u32 8, %s21
      $region60: #{cross_attention.1} parent=51 // pred_fallthru
        _
    $region52: #{cross_attention.1} parent=5 // pred_fallthru
      _
    %p6300 = scmp.le.s32.totalorder 2, %s16
    // Predicated region
    $region61: #{cross_attention.1} parent=5 // pred_check
      %p6301 = pneg %p6300
    $region62: #{cross_attention.1} parent=5 // pred_check_branch
      %6303 = sbr.rel (%p6301) target = $region64
    $region63: #{cross_attention.1} parent=5 // pred_region
      %s6304 = ssub.s32 %s16, 2
      // Predicated region
      $region65: #{cross_attention.1} parent=63 // pred_check
        %p6305 = pneg %p223
      $region66: #{cross_attention.1} parent=63 // pred_check_branch
        %6307 = sbr.rel (%p6305) target = $region68
      $region67: #{cross_attention.1} parent=63 // pred_region
        %s6308 = smul.u32 8, %s22
        %p6309 = scmp.lt.s32.totalorder %s6308, 15
        %s6310 = scalar_select %p6309, %s6308, 15
        %s6311 = smul.addr %s6310, 5
        %s6312 = smul.addr %s6311, 8
        %s6313 = scalar_lea.vmem %s8, %s6312
      $region68: #{cross_attention.1} parent=63 // pred_fallthru
        _
      // Predicated region
      $region69: #{cross_attention.1} parent=63 // pred_check
        %p6314 = pneg %p249
      $region70: #{cross_attention.1} parent=63 // pred_check_branch
        %6316 = sbr.rel (%p6314) target = $region72
      $region71: #{cross_attention.1} parent=63 // pred_region
        %s6317 = smul.u32 8, %s22
        %p6318 = scmp.lt.s32.totalorder %s6317, 15
        %s6319 = scalar_select %p6318, %s6317, 15
        %s6320 = smul.addr %s6319, 5
        %s6321 = smul.addr %s6320, 8
        %s6322 = scalar_lea.vmem %s9, %s6321
      $region72: #{cross_attention.1} parent=63 // pred_fallthru
        _
    $region64: #{cross_attention.1} parent=5 // pred_fallthru
      _
  $region6: #{cross_attention.1} parent=0 // loop_footer
    %s20 = sadd.s32 1, %s16
  $region7: #{cross_attention.1} parent=0 // loop_footer_branch
    %15 = sbr.rel target = $region3
  $region8: #{cross_attention.1} parent=0 // loop_exit
    _

</llo_original>
